<compile_context>
chip_gen: v7x
topology: tpu7x:2x2x1
jax: 0.10.0
libtpu: 0.0.40
codegen_flags: <defaults>
</compile_context>

<pallas_src>
import jax
import jax.numpy as jnp
from jax import lax
from jax.experimental import pallas as pl
from jax.experimental.pallas import tpu as pltpu

# ----------------------------- configuration -------------------------------
BATCH = 2
CHANNEL = 64
HEIGHT = 16
WIDTH = 16
NUM_GROUPS = 4
REDUCTION = 4
GC = CHANNEL // NUM_GROUPS            # group channels            = 16
GC_RED = GC // REDUCTION              # bottleneck channels       = 4
BN_EPS = 1e-5                         # torch.nn.BatchNorm2d default eps


# -------------------------------- kernel -----------------------------------
def ggca_kernel(x_ref, w1_ref, b1_ref, bns_ref, bnt_ref, w2_ref, b2_ref, o_ref):
    # x_ref: (blk, H, W, gc)  -- channel-last per (batch*group) slice.
    x = x_ref[...]
    blk, H, W, gc = x.shape

    # Adaptive pools (output size == input size along the kept axis):
    #   *_h pools reduce over W, *_w pools reduce over H.
    h_avg = jnp.mean(x, axis=2)                     # (blk, H, gc)
    h_max = jnp.max(x, axis=2)                      # (blk, H, gc)
    w_avg = jnp.mean(x, axis=1)                     # (blk, W, gc)
    w_max = jnp.max(x, axis=1)                      # (blk, W, gc)

    def rows(t):                                    # (blk, L, gc) -> (blk*L, gc)
        return t.reshape(t.shape[0] * t.shape[1], t.shape[2])

    # One row-slab for all four pooled tensors -> shared conv stack runs as
    # exactly two MXU matmuls.
    pooled = jnp.concatenate(
        [rows(h_avg), rows(h_max), rows(w_avg), rows(w_max)], axis=0)   # (2*blk*(H+W), gc)

    y = jnp.dot(pooled, w1_ref[...], preferred_element_type=jnp.float32) + b1_ref[...]
    y = y * bns_ref[...] + bnt_ref[...]             # folded BatchNorm (eval mode)
    y = jnp.maximum(y, 0.0)                         # ReLU
    y = jnp.dot(y, w2_ref[...], preferred_element_type=jnp.float32) + b2_ref[...]

    Rh = blk * H
    Rw = blk * W
    att_h = jax.nn.sigmoid(y[0:Rh] + y[Rh:2 * Rh]).reshape(blk, H, gc)
    att_w = jax.nn.sigmoid(
        y[2 * Rh:2 * Rh + Rw] + y[2 * Rh + Rw:2 * Rh + 2 * Rw]).reshape(blk, W, gc)

    out = x * att_h[:, :, None, :] * att_w[:, None, :, :]
    o_ref[...] = out.astype(o_ref.dtype)


# ------------------------------- wrapper ------------------------------------
def ggca_forward(x, kp):
    Bsz, C, H, W = x.shape
    G = NUM_GROUPS
    gc = C // G
    BG = Bsz * G

    # Layout plumbing (outside the kernel, in XLA): channel-last per group so
    # gc sits on the lane axis inside the kernel.
    xg = (x.reshape(Bsz, G, gc, H, W)
            .transpose(0, 1, 3, 4, 2)
            .reshape(BG, H, W, gc))

    grid_n = 2 if BG % 2 == 0 else 1     # 2-way "parallel" split for v7x megacore
    blk = BG // grid_n

    def full_spec(shape):
        nd = len(shape)
        return pl.BlockSpec(shape, lambda i, _nd=nd: (0,) * _nd)

    out = pl.pallas_call(
        ggca_kernel,
        out_shape=jax.ShapeDtypeStruct(xg.shape, xg.dtype),
        grid=(grid_n,),
        in_specs=[
            pl.BlockSpec((blk, H, W, gc), lambda i: (i, 0, 0, 0)),
            full_spec(kp["w1"].shape),
            full_spec(kp["b1"].shape),
            full_spec(kp["bn_s"].shape),
            full_spec(kp["bn_t"].shape),
            full_spec(kp["w2"].shape),
            full_spec(kp["b2"].shape),
        ],
        out_specs=pl.BlockSpec((blk, H, W, gc), lambda i: (i, 0, 0, 0)),
        input_output_aliases={0: 0},
        compiler_params=pltpu.CompilerParams(dimension_semantics=("parallel",)),
    )(xg, kp["w1"], kp["b1"], kp["bn_s"], kp["bn_t"], kp["w2"], kp["b2"])

    return (out.reshape(Bsz, G, H, W, gc)
               .transpose(0, 1, 4, 2, 3)
               .reshape(Bsz, C, H, W))


# --------------------------- parameter handling ------------------------------
def init_torch_params(key):
    """PyTorch-style parameters for shared_conv = Conv1x1 -> BN -> ReLU -> Conv1x1."""
    ks = jax.random.split(key, 8)
    return dict(
        conv1_w=0.2 * jax.random.normal(ks[0], (GC_RED, GC), jnp.float32),   # (out,in)
        conv1_b=0.1 * jax.random.normal(ks[1], (GC_RED,), jnp.float32),
        bn_gamma=1.0 + 0.1 * jax.random.normal(ks[2], (GC_RED,), jnp.float32),
        bn_beta=0.1 * jax.random.normal(ks[3], (GC_RED,), jnp.float32),
        bn_mean=0.1 * jax.random.normal(ks[4], (GC_RED,), jnp.float32),
        bn_var=jax.random.uniform(ks[5], (GC_RED,), jnp.float32, 0.5, 1.5),
        conv2_w=0.2 * jax.random.normal(ks[6], (GC, GC_RED), jnp.float32),   # (out,in)
        conv2_b=0.1 * jax.random.normal(ks[7], (GC,), jnp.float32),
    )


def to_kernel_params(tp):
    """Pre-transpose weights to (in,out) and fold BatchNorm into scale/shift."""
    inv = tp["bn_gamma"] / jnp.sqrt(tp["bn_var"] + BN_EPS)
    return dict(
        w1=tp["conv1_w"].T,                               # (gc, gc_red)
        b1=tp["conv1_b"][None, :],                        # (1, gc_red)
        bn_s=inv[None, :],                                # (1, gc_red)
        bn_t=(tp["bn_beta"] - tp["bn_mean"] * inv)[None, :],
        w2=tp["conv2_w"].T,                               # (gc_red, gc)
        b2=tp["conv2_b"][None, :],                        # (1, gc)
    )


# --------------------------- pure-JAX reference ------------------------------
def ref_forward(x, tp):
    Bsz, C, H, W = x.shape
    G = NUM_GROUPS
    gc = C // G
    xg = x.reshape(Bsz * G, gc, H, W)

    h_avg = jnp.mean(xg, axis=3)       # (BG, gc, H)
    h_max = jnp.max(xg, axis=3)
    w_avg = jnp.mean(xg, axis=2)       # (BG, gc, W)
    w_max = jnp.max(xg, axis=2)

    def shared(t):                     # (BG, gc, L)
        y = jnp.einsum('oc,bcl->bol', tp["conv1_w"], t) + tp["conv1_b"][None, :, None]
        inv = 1.0 / jnp.sqrt(tp["bn_var"] + BN_EPS)
        y = ((y - tp["bn_mean"][None, :, None]) * (tp["bn_gamma"] * inv)[None, :, None]
             + tp["bn_beta"][None, :, None])
        y = jnp.maximum(y, 0.0)
        y = jnp.einsum('oc,bcl->bol', tp["conv2_w"], y) + tp["conv2_b"][None, :, None]
        return y

    att_h = jax.nn.sigmoid(shared(h_avg) + shared(h_max))   # (BG, gc, H)
    att_w = jax.nn.sigmoid(shared(w_avg) + shared(w_max))   # (BG, gc, W)
    out = xg * att_h[:, :, :, None] * att_w[:, :, None, :]
    return out.reshape(Bsz, C, H, W)


# ---------------------------------- main -------------------------------------
if __name__ == "__main__":
    key = jax.random.PRNGKey(0)
    kx, kp = jax.random.split(key)

    x = jax.random.normal(kx, (BATCH, CHANNEL, HEIGHT, WIDTH), jnp.float32)
    tparams = init_torch_params(kp)
    kparams = to_kernel_params(tparams)

    fwd = jax.jit(ggca_forward)
    out = jax.block_until_ready(fwd(x, kparams))

    ref = jax.block_until_ready(ref_forward(x, tparams))
    assert out.shape == x.shape
    max_err = jnp.max(jnp.abs(out - ref))
    assert jnp.allclose(out, ref, atol=2e-4, rtol=2e-4), f"max abs err {max_err}"

    print("KERNEL_OK")
</pallas_src>

<mosaic_0001>
module attributes {stable_mosaic.version = 11 : i64} {
  func.func @ggca_kernel(%arg0: i32, %arg1: memref<4x16x16x16xf32, #tpu.memory_space<vmem>>, %arg2: memref<16x4xf32, #tpu.memory_space<vmem>>, %arg3: memref<1x4xf32, #tpu.memory_space<vmem>>, %arg4: memref<1x4xf32, #tpu.memory_space<vmem>>, %arg5: memref<1x4xf32, #tpu.memory_space<vmem>>, %arg6: memref<4x16xf32, #tpu.memory_space<vmem>>, %arg7: memref<1x16xf32, #tpu.memory_space<vmem>>, %arg8: memref<4x16x16x16xf32, #tpu.memory_space<vmem>>) attributes {dimension_semantics = [#tpu.dimension_semantics<parallel>], iteration_bounds = array<i64: 2>, scalar_prefetch = 0 : i64, scratch_operands = 0 : i64, tpu.core_type = #tpu.core_type<tc>, window_params = [{transform_indices = @transform_0, window_bounds = array<i64: 4, 16, 16, 16>}, {pipeline_mode = #tpu.pipeline_mode<synchronous>, transform_indices = @transform_1, window_bounds = array<i64: 16, 4>}, {pipeline_mode = #tpu.pipeline_mode<synchronous>, transform_indices = @transform_2, window_bounds = array<i64: 1, 4>}, {pipeline_mode = #tpu.pipeline_mode<synchronous>, transform_indices = @transform_3, window_bounds = array<i64: 1, 4>}, {pipeline_mode = #tpu.pipeline_mode<synchronous>, transform_indices = @transform_4, window_bounds = array<i64: 1, 4>}, {pipeline_mode = #tpu.pipeline_mode<synchronous>, transform_indices = @transform_5, window_bounds = array<i64: 4, 16>}, {pipeline_mode = #tpu.pipeline_mode<synchronous>, transform_indices = @transform_6, window_bounds = array<i64: 1, 16>}, {transform_indices = @transform_7, window_bounds = array<i64: 4, 16, 16, 16>}]} {
    %c0 = arith.constant 0 : index
    %c0_0 = arith.constant 0 : index
    %c0_1 = arith.constant 0 : index
    %c0_2 = arith.constant 0 : index
    %0 = vector.load %arg1[%c0, %c0_0, %c0_1, %c0_2] : memref<4x16x16x16xf32, #tpu.memory_space<vmem>>, vector<4x16x16x16xf32>
    %cst = arith.constant dense<0.000000e+00> : vector<4x16x16xf32>
    %1 = vector.multi_reduction <add>, %0, %cst [2] : vector<4x16x16x16xf32> to vector<4x16x16xf32>
    %cst_3 = arith.constant 1.600000e+01 : f32
    %2 = vector.broadcast %cst_3 : f32 to vector<4x16x16xf32>
    %3 = arith.divf %1, %2 : vector<4x16x16xf32>
    %cst_4 = arith.constant dense<0xFF800000> : vector<4x16x16xf32>
    %4 = vector.multi_reduction <maximumf>, %0, %cst_4 [2] : vector<4x16x16x16xf32> to vector<4x16x16xf32>
    %cst_5 = arith.constant dense<0.000000e+00> : vector<4x16x16xf32>
    %5 = vector.multi_reduction <add>, %0, %cst_5 [1] : vector<4x16x16x16xf32> to vector<4x16x16xf32>
    %cst_6 = arith.constant 1.600000e+01 : f32
    %6 = vector.broadcast %cst_6 : f32 to vector<4x16x16xf32>
    %7 = arith.divf %5, %6 : vector<4x16x16xf32>
    %cst_7 = arith.constant dense<0xFF800000> : vector<4x16x16xf32>
    %8 = vector.multi_reduction <maximumf>, %0, %cst_7 [1] : vector<4x16x16x16xf32> to vector<4x16x16xf32>
    %9 = vector.shape_cast %3 : vector<4x16x16xf32> to vector<64x16xf32>
    %10 = vector.shape_cast %4 : vector<4x16x16xf32> to vector<64x16xf32>
    %11 = vector.shape_cast %7 : vector<4x16x16xf32> to vector<64x16xf32>
    %12 = vector.shape_cast %8 : vector<4x16x16xf32> to vector<64x16xf32>
    %13 = tpu.concatenate %9, %10, %11, %12 in 0 : vector<64x16xf32>, vector<64x16xf32>, vector<64x16xf32>, vector<64x16xf32> -> vector<256x16xf32>
    %c0_8 = arith.constant 0 : index
    %c0_9 = arith.constant 0 : index
    %14 = vector.load %arg2[%c0_8, %c0_9] : memref<16x4xf32, #tpu.memory_space<vmem>>, vector<16x4xf32>
    %cst_10 = arith.constant dense<0.000000e+00> : vector<256x4xf32>
    %15 = tpu.matmul %13, %14, %cst_10 {dimension_numbers = #tpu.dot_dimension_numbers<[1], [0], [0], [1], [0, 0, 1, 1], [], []>} : vector<256x16xf32>, vector<16x4xf32>, vector<256x4xf32> -> vector<256x4xf32>
    %c0_11 = arith.constant 0 : index
    %c0_12 = arith.constant 0 : index
    %16 = vector.load %arg3[%c0_11, %c0_12] : memref<1x4xf32, #tpu.memory_space<vmem>>, vector<1x4xf32>
    %17 = vector.broadcast %16 : vector<1x4xf32> to vector<256x4xf32>
    %18 = arith.addf %15, %17 : vector<256x4xf32>
    %c0_13 = arith.constant 0 : index
    %c0_14 = arith.constant 0 : index
    %19 = vector.load %arg4[%c0_13, %c0_14] : memref<1x4xf32, #tpu.memory_space<vmem>>, vector<1x4xf32>
    %20 = vector.broadcast %19 : vector<1x4xf32> to vector<256x4xf32>
    %21 = arith.mulf %18, %20 : vector<256x4xf32>
    %c0_15 = arith.constant 0 : index
    %c0_16 = arith.constant 0 : index
    %22 = vector.load %arg5[%c0_15, %c0_16] : memref<1x4xf32, #tpu.memory_space<vmem>>, vector<1x4xf32>
    %23 = vector.broadcast %22 : vector<1x4xf32> to vector<256x4xf32>
    %24 = arith.addf %21, %23 : vector<256x4xf32>
    %cst_17 = arith.constant 0.000000e+00 : f32
    %25 = vector.broadcast %cst_17 : f32 to vector<256x4xf32>
    %26 = arith.maximumf %24, %25 : vector<256x4xf32>
    %c0_18 = arith.constant 0 : index
    %c0_19 = arith.constant 0 : index
    %27 = vector.load %arg6[%c0_18, %c0_19] : memref<4x16xf32, #tpu.memory_space<vmem>>, vector<4x16xf32>
    %cst_20 = arith.constant dense<0.000000e+00> : vector<256x16xf32>
    %28 = tpu.matmul %26, %27, %cst_20 {dimension_numbers = #tpu.dot_dimension_numbers<[1], [0], [0], [1], [0, 0, 1, 1], [], []>} : vector<256x4xf32>, vector<4x16xf32>, vector<256x16xf32> -> vector<256x16xf32>
    %c0_21 = arith.constant 0 : index
    %c0_22 = arith.constant 0 : index
    %29 = vector.load %arg7[%c0_21, %c0_22] : memref<1x16xf32, #tpu.memory_space<vmem>>, vector<1x16xf32>
    %30 = vector.broadcast %29 : vector<1x16xf32> to vector<256x16xf32>
    %31 = arith.addf %28, %30 : vector<256x16xf32>
    %32 = vector.extract_strided_slice %31 {offsets = [0, 0], sizes = [64, 16], strides = [1, 1]} : vector<256x16xf32> to vector<64x16xf32>
    %33 = vector.extract_strided_slice %31 {offsets = [64, 0], sizes = [64, 16], strides = [1, 1]} : vector<256x16xf32> to vector<64x16xf32>
    %34 = arith.addf %32, %33 : vector<64x16xf32>
    %35 = arith.negf %34 : vector<64x16xf32>
    %36 = math.exp %35 : vector<64x16xf32>
    %cst_23 = arith.constant 1.000000e+00 : f32
    %37 = vector.broadcast %cst_23 : f32 to vector<64x16xf32>
    %38 = arith.addf %37, %36 : vector<64x16xf32>
    %39 = arith.divf %37, %38 : vector<64x16xf32>
    %40 = vector.shape_cast %39 : vector<64x16xf32> to vector<4x16x16xf32>
    %41 = vector.extract_strided_slice %31 {offsets = [128, 0], sizes = [64, 16], strides = [1, 1]} : vector<256x16xf32> to vector<64x16xf32>
    %42 = vector.extract_strided_slice %31 {offsets = [192, 0], sizes = [64, 16], strides = [1, 1]} : vector<256x16xf32> to vector<64x16xf32>
    %43 = arith.addf %41, %42 : vector<64x16xf32>
    %44 = arith.negf %43 : vector<64x16xf32>
    %45 = math.exp %44 : vector<64x16xf32>
    %cst_24 = arith.constant 1.000000e+00 : f32
    %46 = vector.broadcast %cst_24 : f32 to vector<64x16xf32>
    %47 = arith.addf %46, %45 : vector<64x16xf32>
    %48 = arith.divf %46, %47 : vector<64x16xf32>
    %49 = vector.shape_cast %48 : vector<64x16xf32> to vector<4x16x16xf32>
    %50 = vector.shape_cast %40 : vector<4x16x16xf32> to vector<4x16x1x16xf32>
    %51 = vector.broadcast %50 : vector<4x16x1x16xf32> to vector<4x16x16x16xf32>
    %52 = arith.mulf %0, %51 : vector<4x16x16x16xf32>
    %53 = vector.shape_cast %49 : vector<4x16x16xf32> to vector<4x1x16x16xf32>
    %54 = vector.broadcast %53 : vector<4x1x16x16xf32> to vector<4x16x16x16xf32>
    %55 = arith.mulf %52, %54 : vector<4x16x16x16xf32>
    %c0_25 = arith.constant 0 : index
    %c0_26 = arith.constant 0 : index
    %c0_27 = arith.constant 0 : index
    %c0_28 = arith.constant 0 : index
    %56 = vector.load %arg8[%c0_25, %c0_26, %c0_27, %c0_28] : memref<4x16x16x16xf32, #tpu.memory_space<vmem>>, vector<4x16x16x16xf32>
    tpu.vector_store %arg8[%c0_25, %c0_26, %c0_27, %c0_28], %55 {strides = array<i32>} : memref<4x16x16x16xf32, #tpu.memory_space<vmem>>, vector<4x16x16x16xf32>,
    return
  }
  func.func @transform_0(%arg0: i32) -> (i32, i32, i32, i32) {
    %c0_i32 = arith.constant 0 : i32
    %c0_i32_0 = arith.constant 0 : i32
    %c0_i32_1 = arith.constant 0 : i32
    %c0_i32_2 = arith.constant 0 : i32
    return %arg0, %c0_i32, %c0_i32_0, %c0_i32_1 : i32, i32, i32, i32
  }
  func.func @transform_1(%arg0: i32) -> (i32, i32) {
    %c0_i32 = arith.constant 0 : i32
    %c0_i32_0 = arith.constant 0 : i32
    %c0_i32_1 = arith.constant 0 : i32
    return %c0_i32, %c0_i32_0 : i32, i32
  }
  func.func @transform_2(%arg0: i32) -> (i32, i32) {
    %c0_i32 = arith.constant 0 : i32
    %c0_i32_0 = arith.constant 0 : i32
    %c0_i32_1 = arith.constant 0 : i32
    return %c0_i32, %c0_i32_0 : i32, i32
  }
  func.func @transform_3(%arg0: i32) -> (i32, i32) {
    %c0_i32 = arith.constant 0 : i32
    %c0_i32_0 = arith.constant 0 : i32
    %c0_i32_1 = arith.constant 0 : i32
    return %c0_i32, %c0_i32_0 : i32, i32
  }
  func.func @transform_4(%arg0: i32) -> (i32, i32) {
    %c0_i32 = arith.constant 0 : i32
    %c0_i32_0 = arith.constant 0 : i32
    %c0_i32_1 = arith.constant 0 : i32
    return %c0_i32, %c0_i32_0 : i32, i32
  }
  func.func @transform_5(%arg0: i32) -> (i32, i32) {
    %c0_i32 = arith.constant 0 : i32
    %c0_i32_0 = arith.constant 0 : i32
    %c0_i32_1 = arith.constant 0 : i32
    return %c0_i32, %c0_i32_0 : i32, i32
  }
  func.func @transform_6(%arg0: i32) -> (i32, i32) {
    %c0_i32 = arith.constant 0 : i32
    %c0_i32_0 = arith.constant 0 : i32
    %c0_i32_1 = arith.constant 0 : i32
    return %c0_i32, %c0_i32_0 : i32, i32
  }
  func.func @transform_7(%arg0: i32) -> (i32, i32, i32, i32) {
    %c0_i32 = arith.constant 0 : i32
    %c0_i32_0 = arith.constant 0 : i32
    %c0_i32_1 = arith.constant 0 : i32
    %c0_i32_2 = arith.constant 0 : i32
    return %arg0, %c0_i32, %c0_i32_0, %c0_i32_1 : i32, i32, i32, i32
  }
}

</mosaic_0001>

<llo_original>
// kernel: ggca_forward.1
$region0: #{ggca_forward.1}
  #allocation0 [shape = 'u32[]', space=smem, size = 0x4, offset = 0x4, fixed_abs, tag = 'smem constant byte address 0x4 - core index']
  #allocation1 [shape = 'u32[144,128]{1,0:T(1,128)}', space=vmem, size = 0x12000, scoped, tag = 'internal scratch']
  %s0 = inlined_call_operand.vmem [shape: f32[8,16,16,16], index: 0, kind: input, shape index: {}, may-alias: {0,7}]
  %s1 = inlined_call_operand.vmem [shape: f32[16,4], index: 1, kind: input, shape index: {}]
  %s2 = inlined_call_operand.vmem [shape: f32[1,4], index: 2, kind: input, shape index: {}]
  %s3 = inlined_call_operand.vmem [shape: f32[1,4], index: 3, kind: input, shape index: {}]
  %s4 = inlined_call_operand.vmem [shape: f32[1,4], index: 4, kind: input, shape index: {}]
  %s5 = inlined_call_operand.vmem [shape: f32[4,16], index: 5, kind: input, shape index: {}]
  %s6 = inlined_call_operand.vmem [shape: f32[1,16], index: 6, kind: input, shape index: {}]
  %s7 = inlined_call_operand.vmem [shape: f32[8,16,16,16], index: 7, kind: output, shape index: {}, may-alias: {0,7}]
  %s8 = sld [smem:[#allocation0]]
  $region61: #{ggca_forward.1} parent=0
    _
  %s10 = ssub.s32 1, %s8
  %s11 = scalar_select 0, %s10, %s8
  loop: start=0, step=1, limit=4
  $region2: #{ggca_forward.1} parent=0 // loop_pre_header
    _
  $region3: #{ggca_forward.1} parent=0 // loop_header
    %s13 = sphi 0, %s17
    %p14 = scmp.ge.s32.totalorder %s13, 4
    %s23 = sphi 0, %s25
    %s26 = sphi 0, %s23
    %s27 = sphi 0, %s26
    %s43 = sphi 0, %s27
    %s47 = sphi 0, %s47
    %s49 = sphi 0, %s47
    %s50 = sphi 0, %s49
    %s64 = sphi 0, %s50
    %s68 = sphi 0, %s68
    %s70 = sphi 0, %s68
    %s71 = sphi 0, %s70
    %s85 = sphi 0, %s71
    %s89 = sphi 0, %s89
    %s91 = sphi 0, %s89
    %s92 = sphi 0, %s91
    %s106 = sphi 0, %s92
    %s110 = sphi 0, %s110
    %s112 = sphi 0, %s110
    %s113 = sphi 0, %s112
    %s127 = sphi 0, %s113
    %s131 = sphi 0, %s131
    %s133 = sphi 0, %s131
    %s134 = sphi 0, %s133
    %s148 = sphi 0, %s134
    %s152 = sphi 0, %s152
    %s154 = sphi 0, %s152
    %s155 = sphi 0, %s154
    %s169 = sphi 0, %s155
    %s175 = sphi 0, %s177
    %s178 = sphi 0, %s175
    %s179 = sphi 0, %s178
    %s195 = sphi 0, %s179
  $region4: #{ggca_forward.1} parent=0 // loop_header_branch
    %16 = sbr.rel (%p14) target = $region8
  $region5: #{ggca_forward.1} parent=0 // loop_body
    %s18 = ssub.s32 %s13, 1
    %s19 = ssub.s32 %s13, 2
    %s20 = sadd.s32 %s13, 1
    %s21 = ssub.s32 %s13, %s20
    %p22 = scmp.eq.s32.totalorder %s21, 0
    %s24 = sadd.s32 %s23, 1
    %s25 = scalar_select %p22, %s23, %s24
    %p28 = pneg %p22
    %p29 = scmp.eq.s32.totalorder %s13, 1
    %p30 = por %p28, %p29
    %p31 = scmp.ne.s32.totalorder %s23, %s26
    %p32 = scmp.eq.s32.totalorder %s13, 0
    %p33 = por %p31, %p32
    %p34 = scmp.ne.s32.totalorder %s23, %s26
    %p35 = scmp.eq.s32.totalorder %s18, 1
    %p36 = por %p34, %p35
    %p37 = scmp.ne.s32.totalorder %s26, %s27
    %p38 = scmp.eq.s32.totalorder %s18, 0
    %p39 = por %p37, %p38
    %p40 = scmp.ne.s32.totalorder %s26, %s27
    %p41 = scmp.eq.s32.totalorder %s19, 1
    %p42 = por %p40, %p41
    %p44 = scmp.ne.s32.totalorder %s27, %s43
    %p45 = scmp.eq.s32.totalorder %s19, 0
    %p46 = por %p44, %p45
    %s48 = sadd.s32 %s47, 1
    %p51 = scmp.eq.s32.totalorder %s13, 1
    %p52 = scmp.ne.s32.totalorder %s47, %s49
    %p53 = scmp.eq.s32.totalorder %s13, 0
    %p54 = por %p52, %p53
    %p55 = scmp.ne.s32.totalorder %s47, %s49
    %p56 = scmp.eq.s32.totalorder %s18, 1
    %p57 = por %p55, %p56
    %p58 = scmp.ne.s32.totalorder %s49, %s50
    %p59 = scmp.eq.s32.totalorder %s18, 0
    %p60 = por %p58, %p59
    %p61 = scmp.ne.s32.totalorder %s49, %s50
    %p62 = scmp.eq.s32.totalorder %s19, 1
    %p63 = por %p61, %p62
    %p65 = scmp.ne.s32.totalorder %s50, %s64
    %p66 = scmp.eq.s32.totalorder %s19, 0
    %p67 = por %p65, %p66
    %s69 = sadd.s32 %s68, 1
    %p72 = scmp.eq.s32.totalorder %s13, 1
    %p73 = scmp.ne.s32.totalorder %s68, %s70
    %p74 = scmp.eq.s32.totalorder %s13, 0
    %p75 = por %p73, %p74
    %p76 = scmp.ne.s32.totalorder %s68, %s70
    %p77 = scmp.eq.s32.totalorder %s18, 1
    %p78 = por %p76, %p77
    %p79 = scmp.ne.s32.totalorder %s70, %s71
    %p80 = scmp.eq.s32.totalorder %s18, 0
    %p81 = por %p79, %p80
    %p82 = scmp.ne.s32.totalorder %s70, %s71
    %p83 = scmp.eq.s32.totalorder %s19, 1
    %p84 = por %p82, %p83
    %p86 = scmp.ne.s32.totalorder %s71, %s85
    %p87 = scmp.eq.s32.totalorder %s19, 0
    %p88 = por %p86, %p87
    %s90 = sadd.s32 %s89, 1
    %p93 = scmp.eq.s32.totalorder %s13, 1
    %p94 = scmp.ne.s32.totalorder %s89, %s91
    %p95 = scmp.eq.s32.totalorder %s13, 0
    %p96 = por %p94, %p95
    %p97 = scmp.ne.s32.totalorder %s89, %s91
    %p98 = scmp.eq.s32.totalorder %s18, 1
    %p99 = por %p97, %p98
    %p100 = scmp.ne.s32.totalorder %s91, %s92
    %p101 = scmp.eq.s32.totalorder %s18, 0
    %p102 = por %p100, %p101
    %p103 = scmp.ne.s32.totalorder %s91, %s92
    %p104 = scmp.eq.s32.totalorder %s19, 1
    %p105 = por %p103, %p104
    %p107 = scmp.ne.s32.totalorder %s92, %s106
    %p108 = scmp.eq.s32.totalorder %s19, 0
    %p109 = por %p107, %p108
    %s111 = sadd.s32 %s110, 1
    %p114 = scmp.eq.s32.totalorder %s13, 1
    %p115 = scmp.ne.s32.totalorder %s110, %s112
    %p116 = scmp.eq.s32.totalorder %s13, 0
    %p117 = por %p115, %p116
    %p118 = scmp.ne.s32.totalorder %s110, %s112
    %p119 = scmp.eq.s32.totalorder %s18, 1
    %p120 = por %p118, %p119
    %p121 = scmp.ne.s32.totalorder %s112, %s113
    %p122 = scmp.eq.s32.totalorder %s18, 0
    %p123 = por %p121, %p122
    %p124 = scmp.ne.s32.totalorder %s112, %s113
    %p125 = scmp.eq.s32.totalorder %s19, 1
    %p126 = por %p124, %p125
    %p128 = scmp.ne.s32.totalorder %s113, %s127
    %p129 = scmp.eq.s32.totalorder %s19, 0
    %p130 = por %p128, %p129
    %s132 = sadd.s32 %s131, 1
    %p135 = scmp.eq.s32.totalorder %s13, 1
    %p136 = scmp.ne.s32.totalorder %s131, %s133
    %p137 = scmp.eq.s32.totalorder %s13, 0
    %p138 = por %p136, %p137
    %p139 = scmp.ne.s32.totalorder %s131, %s133
    %p140 = scmp.eq.s32.totalorder %s18, 1
    %p141 = por %p139, %p140
    %p142 = scmp.ne.s32.totalorder %s133, %s134
    %p143 = scmp.eq.s32.totalorder %s18, 0
    %p144 = por %p142, %p143
    %p145 = scmp.ne.s32.totalorder %s133, %s134
    %p146 = scmp.eq.s32.totalorder %s19, 1
    %p147 = por %p145, %p146
    %p149 = scmp.ne.s32.totalorder %s134, %s148
    %p150 = scmp.eq.s32.totalorder %s19, 0
    %p151 = por %p149, %p150
    %s153 = sadd.s32 %s152, 1
    %p156 = scmp.eq.s32.totalorder %s13, 1
    %p157 = scmp.ne.s32.totalorder %s152, %s154
    %p158 = scmp.eq.s32.totalorder %s13, 0
    %p159 = por %p157, %p158
    %p160 = scmp.ne.s32.totalorder %s152, %s154
    %p161 = scmp.eq.s32.totalorder %s18, 1
    %p162 = por %p160, %p161
    %p163 = scmp.ne.s32.totalorder %s154, %s155
    %p164 = scmp.eq.s32.totalorder %s18, 0
    %p165 = por %p163, %p164
    %p166 = scmp.ne.s32.totalorder %s154, %s155
    %p167 = scmp.eq.s32.totalorder %s19, 1
    %p168 = por %p166, %p167
    %p170 = scmp.ne.s32.totalorder %s155, %s169
    %p171 = scmp.eq.s32.totalorder %s19, 0
    %p172 = por %p170, %p171
    %s173 = ssub.s32 %s13, %s20
    %p174 = scmp.eq.s32.totalorder %s173, 0
    %s176 = sadd.s32 %s175, 1
    %s177 = scalar_select %p174, %s175, %s176
    %p180 = pneg %p174
    %p181 = scmp.eq.s32.totalorder %s13, 1
    %p182 = por %p180, %p181
    %p183 = scmp.ne.s32.totalorder %s175, %s178
    %p184 = scmp.eq.s32.totalorder %s13, 0
    %p185 = por %p183, %p184
    %p186 = scmp.ne.s32.totalorder %s175, %s178
    %p187 = scmp.eq.s32.totalorder %s18, 1
    %p188 = por %p186, %p187
    %p189 = scmp.ne.s32.totalorder %s178, %s179
    %p190 = scmp.eq.s32.totalorder %s18, 0
    %p191 = por %p189, %p190
    %p192 = scmp.ne.s32.totalorder %s178, %s179
    %p193 = scmp.eq.s32.totalorder %s19, 1
    %p194 = por %p192, %p193
    %p196 = scmp.ne.s32.totalorder %s179, %s195
    %p197 = scmp.eq.s32.totalorder %s19, 0
    %p198 = por %p196, %p197
    %p199 = scmp.le.s32.totalorder 1, %s13
    %p200 = scmp.lt.s32.totalorder %s13, 3
    %p201 = pnand %p199, %p200
    %p202 = pneg %p201
    // Predicated region
    $region9: #{ggca_forward.1} parent=5 // pred_check
      _
    $region10: #{ggca_forward.1} parent=5 // pred_check_branch
      %204 = sbr.rel (%p201) target = $region12
    $region11: #{ggca_forward.1} parent=5 // pred_region
      %s205 = ssub.s32 %s13, 1
      // Predicated region
      $region13: #{ggca_forward.1} parent=11 // pred_check
        %p206 = pneg %p60
      $region14: #{ggca_forward.1} parent=11 // pred_check_branch
        %208 = sbr.rel (%p206) target = $region16
      $region15: #{ggca_forward.1} parent=11 // pred_region
        _
      $region16: #{ggca_forward.1} parent=11 // pred_fallthru
        _
      // Predicated region
      $region17: #{ggca_forward.1} parent=11 // pred_check
        %p209 = pneg %p81
      $region18: #{ggca_forward.1} parent=11 // pred_check_branch
        %211 = sbr.rel (%p209) target = $region20
      $region19: #{ggca_forward.1} parent=11 // pred_region
        _
      $region20: #{ggca_forward.1} parent=11 // pred_fallthru
        _
      // Predicated region
      $region21: #{ggca_forward.1} parent=11 // pred_check
        %p212 = pneg %p102
      $region22: #{ggca_forward.1} parent=11 // pred_check_branch
        %214 = sbr.rel (%p212) target = $region24
      $region23: #{ggca_forward.1} parent=11 // pred_region
        _
      $region24: #{ggca_forward.1} parent=11 // pred_fallthru
        _
      // Predicated region
      $region25: #{ggca_forward.1} parent=11 // pred_check
        %p215 = pneg %p123
      $region26: #{ggca_forward.1} parent=11 // pred_check_branch
        %217 = sbr.rel (%p215) target = $region28
      $region27: #{ggca_forward.1} parent=11 // pred_region
        _
      $region28: #{ggca_forward.1} parent=11 // pred_fallthru
        _
      // Predicated region
      $region29: #{ggca_forward.1} parent=11 // pred_check
        %p218 = pneg %p144
      $region30: #{ggca_forward.1} parent=11 // pred_check_branch
        %220 = sbr.rel (%p218) target = $region32
      $region31: #{ggca_forward.1} parent=11 // pred_region
        _
      $region32: #{ggca_forward.1} parent=11 // pred_fallthru
        _
      // Predicated region
      $region33: #{ggca_forward.1} parent=11 // pred_check
        %p221 = pneg %p165
      $region34: #{ggca_forward.1} parent=11 // pred_check_branch
        %223 = sbr.rel (%p221) target = $region36
      $region35: #{ggca_forward.1} parent=11 // pred_region
        _
      $region36: #{ggca_forward.1} parent=11 // pred_fallthru
        _
    $region12: #{ggca_forward.1} parent=5 // pred_fallthru
      _
    %p224 = scmp.lt.s32.totalorder %s13, 2
    // Predicated region
    $region37: #{ggca_forward.1} parent=5 // pred_check
      %p225 = pneg %p224
    $region38: #{ggca_forward.1} parent=5 // pred_check_branch
      %227 = sbr.rel (%p225) target = $region40
    $region39: #{ggca_forward.1} parent=5 // pred_region
      // Predicated region
      $region41: #{ggca_forward.1} parent=39 // pred_check
        %p228 = pneg %p33
      $region42: #{ggca_forward.1} parent=39 // pred_check_branch
        %230 = sbr.rel (%p228) target = $region44
      $region43: #{ggca_forward.1} parent=39 // pred_region
        %s231 = smul.u32 4, %s13
        %p232 = scmp.lt.s32.totalorder %s231, 7
        %s233 = scalar_select %p232, %s231, 7
        %s234 = smul.addr %s233, 32
        %s235 = smul.addr %s234, 8
        %s236 = scalar_lea.vmem %s0, %s235
        %s237 = smul.u32 4, %s13
      $region44: #{ggca_forward.1} parent=39 // pred_fallthru
        _
    $region40: #{ggca_forward.1} parent=5 // pred_fallthru
      _
    %p238 = scmp.le.s32.totalorder 1, %s13
    %p239 = scmp.lt.s32.totalorder %s13, 3
    %p240 = pnand %p238, %p239
    %p241 = pneg %p240
    // Predicated region
    $region45: #{ggca_forward.1} parent=5 // pred_check
      _
    $region46: #{ggca_forward.1} parent=5 // pred_check_branch
      %243 = sbr.rel (%p240) target = $region48
    $region47: #{ggca_forward.1} parent=5 // pred_region
      %s244 = ssub.s32 %s13, 1
      %s245 = smul.u32 4, %s18
      %p246 = scmp.lt.s32.totalorder %s245, 7
      %s247 = scalar_select %p246, %s245, 7
      %s248 = smul.addr %s247, 32
      %s249 = smul.addr %s248, 8
      %s250 = scalar_lea.vmem %s0, %s249
      %p251 = pneg %p39
      %p252 = pneg %p36
      %p253 = pneg %p60
      %p254 = pneg %p57
      %p255 = pneg %p81
      %p256 = pneg %p78
      %p257 = pneg %p102
      %p258 = pneg %p99
      %p259 = pneg %p123
      %p260 = pneg %p120
      %p261 = pneg %p144
      %p262 = pneg %p141
      %p263 = pneg %p165
      %p264 = pneg %p162
      %p265 = pneg %p191
      %p266 = pneg %p188
      %s267 = smul.u32 4, %s18
      %p268 = scmp.lt.s32.totalorder %s267, 7
      %s269 = scalar_select %p268, %s267, 7
      %s270 = smul.addr %s269, 32
      %s271 = smul.addr %s270, 8
      %s272 = scalar_lea.vmem %s7, %s271
      %s273 = smul.u32 4, %s18
      %p274 = scmp.lt.s32.totalorder %s273, 7
      %s275 = scalar_select %p274, %s273, 7
      %s276 = smul.addr %s275, 32
      %s277 = smul.addr %s276, 8
      %s278 = scalar_lea.vmem %s0, %s277
      %s279 = smul.u32 4, %s18
      %s280 = smul.u32 4, %s18
      %p281 = scmp.lt.s32.totalorder %s280, 7
      %s282 = scalar_select %p281, %s280, 7
      %s283 = smul.addr %s282, 32
      %s284 = smul.addr %s283, 8
      %s285 = scalar_lea.vmem %s7, %s284
      %s286 = smul.u32 4, %s18
      %v287 = vld [vmem:[%s278] sm:$0xff]
      %v288 = vld [vmem:[%s278 + $0x8] sm:$0xff]
      %v289 = vld [vmem:[%s278 + $0x10] sm:$0xff]
      %v290 = vld [vmem:[%s278 + $0x18] sm:$0xff]
      %v291 = vld [vmem:[%s278 + $0x20] sm:$0xff]
      %v292 = vld [vmem:[%s278 + $0x28] sm:$0xff]
      %v293 = vld [vmem:[%s278 + $0x30] sm:$0xff]
      %v294 = vld [vmem:[%s278 + $0x38] sm:$0xff]
      %v295 = vld [vmem:[%s278 + $0x40] sm:$0xff]
      %v296 = vld [vmem:[%s278 + $0x48] sm:$0xff]
      %v297 = vld [vmem:[%s278 + $0x50] sm:$0xff]
      %v298 = vld [vmem:[%s278 + $0x58] sm:$0xff]
      %v299 = vld [vmem:[%s278 + $0x60] sm:$0xff]
      %v300 = vld [vmem:[%s278 + $0x68] sm:$0xff]
      %v301 = vld [vmem:[%s278 + $0x70] sm:$0xff]
      %v302 = vld [vmem:[%s278 + $0x78] sm:$0xff]
      %v303 = vld [vmem:[%s278 + $0x80] sm:$0xff]
      %v304 = vld [vmem:[%s278 + $0x88] sm:$0xff]
      %v305 = vld [vmem:[%s278 + $0x90] sm:$0xff]
      %v306 = vld [vmem:[%s278 + $0x98] sm:$0xff]
      %v307 = vld [vmem:[%s278 + $0xa0] sm:$0xff]
      %v308 = vld [vmem:[%s278 + $0xa8] sm:$0xff]
      %v309 = vld [vmem:[%s278 + $0xb0] sm:$0xff]
      %v310 = vld [vmem:[%s278 + $0xb8] sm:$0xff]
      %v311 = vld [vmem:[%s278 + $0xc0] sm:$0xff]
      %v312 = vld [vmem:[%s278 + $0xc8] sm:$0xff]
      %v313 = vld [vmem:[%s278 + $0xd0] sm:$0xff]
      %v314 = vld [vmem:[%s278 + $0xd8] sm:$0xff]
      %v315 = vld [vmem:[%s278 + $0xe0] sm:$0xff]
      %v316 = vld [vmem:[%s278 + $0xe8] sm:$0xff]
      %v317 = vld [vmem:[%s278 + $0xf0] sm:$0xff]
      %v318 = vld [vmem:[%s278 + $0xf8] sm:$0xff]
      %v319 = vld [vmem:[%s278 + $0x100] sm:$0xff]
      %v320 = vld [vmem:[%s278 + $0x108] sm:$0xff]
      %v321 = vld [vmem:[%s278 + $0x110] sm:$0xff]
      %v322 = vld [vmem:[%s278 + $0x118] sm:$0xff]
      %v323 = vld [vmem:[%s278 + $0x120] sm:$0xff]
      %v324 = vld [vmem:[%s278 + $0x128] sm:$0xff]
      %v325 = vld [vmem:[%s278 + $0x130] sm:$0xff]
      %v326 = vld [vmem:[%s278 + $0x138] sm:$0xff]
      %v327 = vld [vmem:[%s278 + $0x140] sm:$0xff]
      %v328 = vld [vmem:[%s278 + $0x148] sm:$0xff]
      %v329 = vld [vmem:[%s278 + $0x150] sm:$0xff]
      %v330 = vld [vmem:[%s278 + $0x158] sm:$0xff]
      %v331 = vld [vmem:[%s278 + $0x160] sm:$0xff]
      %v332 = vld [vmem:[%s278 + $0x168] sm:$0xff]
      %v333 = vld [vmem:[%s278 + $0x170] sm:$0xff]
      %v334 = vld [vmem:[%s278 + $0x178] sm:$0xff]
      %v335 = vld [vmem:[%s278 + $0x180] sm:$0xff]
      %v336 = vld [vmem:[%s278 + $0x188] sm:$0xff]
      %v337 = vld [vmem:[%s278 + $0x190] sm:$0xff]
      %v338 = vld [vmem:[%s278 + $0x198] sm:$0xff]
      %v339 = vld [vmem:[%s278 + $0x1a0] sm:$0xff]
      %v340 = vld [vmem:[%s278 + $0x1a8] sm:$0xff]
      %v341 = vld [vmem:[%s278 + $0x1b0] sm:$0xff]
      %v342 = vld [vmem:[%s278 + $0x1b8] sm:$0xff]
      %v343 = vld [vmem:[%s278 + $0x1c0] sm:$0xff]
      %v344 = vld [vmem:[%s278 + $0x1c8] sm:$0xff]
      %v345 = vld [vmem:[%s278 + $0x1d0] sm:$0xff]
      %v346 = vld [vmem:[%s278 + $0x1d8] sm:$0xff]
      %v347 = vld [vmem:[%s278 + $0x1e0] sm:$0xff]
      %v348 = vld [vmem:[%s278 + $0x1e8] sm:$0xff]
      %v349 = vld [vmem:[%s278 + $0x1f0] sm:$0xff]
      %v350 = vld [vmem:[%s278 + $0x1f8] sm:$0xff]
      %v351 = vld [vmem:[%s278 + $0x200] sm:$0xff]
      %v352 = vld [vmem:[%s278 + $0x208] sm:$0xff]
      %v353 = vld [vmem:[%s278 + $0x210] sm:$0xff]
      %v354 = vld [vmem:[%s278 + $0x218] sm:$0xff]
      %v355 = vld [vmem:[%s278 + $0x220] sm:$0xff]
      %v356 = vld [vmem:[%s278 + $0x228] sm:$0xff]
      %v357 = vld [vmem:[%s278 + $0x230] sm:$0xff]
      %v358 = vld [vmem:[%s278 + $0x238] sm:$0xff]
      %v359 = vld [vmem:[%s278 + $0x240] sm:$0xff]
      %v360 = vld [vmem:[%s278 + $0x248] sm:$0xff]
      %v361 = vld [vmem:[%s278 + $0x250] sm:$0xff]
      %v362 = vld [vmem:[%s278 + $0x258] sm:$0xff]
      %v363 = vld [vmem:[%s278 + $0x260] sm:$0xff]
      %v364 = vld [vmem:[%s278 + $0x268] sm:$0xff]
      %v365 = vld [vmem:[%s278 + $0x270] sm:$0xff]
      %v366 = vld [vmem:[%s278 + $0x278] sm:$0xff]
      %v367 = vld [vmem:[%s278 + $0x280] sm:$0xff]
      %v368 = vld [vmem:[%s278 + $0x288] sm:$0xff]
      %v369 = vld [vmem:[%s278 + $0x290] sm:$0xff]
      %v370 = vld [vmem:[%s278 + $0x298] sm:$0xff]
      %v371 = vld [vmem:[%s278 + $0x2a0] sm:$0xff]
      %v372 = vld [vmem:[%s278 + $0x2a8] sm:$0xff]
      %v373 = vld [vmem:[%s278 + $0x2b0] sm:$0xff]
      %v374 = vld [vmem:[%s278 + $0x2b8] sm:$0xff]
      %v375 = vld [vmem:[%s278 + $0x2c0] sm:$0xff]
      %v376 = vld [vmem:[%s278 + $0x2c8] sm:$0xff]
      %v377 = vld [vmem:[%s278 + $0x2d0] sm:$0xff]
      %v378 = vld [vmem:[%s278 + $0x2d8] sm:$0xff]
      %v379 = vld [vmem:[%s278 + $0x2e0] sm:$0xff]
      %v380 = vld [vmem:[%s278 + $0x2e8] sm:$0xff]
      %v381 = vld [vmem:[%s278 + $0x2f0] sm:$0xff]
      %v382 = vld [vmem:[%s278 + $0x2f8] sm:$0xff]
      %v383 = vld [vmem:[%s278 + $0x300] sm:$0xff]
      %v384 = vld [vmem:[%s278 + $0x308] sm:$0xff]
      %v385 = vld [vmem:[%s278 + $0x310] sm:$0xff]
      %v386 = vld [vmem:[%s278 + $0x318] sm:$0xff]
      %v387 = vld [vmem:[%s278 + $0x320] sm:$0xff]
      %v388 = vld [vmem:[%s278 + $0x328] sm:$0xff]
      %v389 = vld [vmem:[%s278 + $0x330] sm:$0xff]
      %v390 = vld [vmem:[%s278 + $0x338] sm:$0xff]
      %v391 = vld [vmem:[%s278 + $0x340] sm:$0xff]
      %v392 = vld [vmem:[%s278 + $0x348] sm:$0xff]
      %v393 = vld [vmem:[%s278 + $0x350] sm:$0xff]
      %v394 = vld [vmem:[%s278 + $0x358] sm:$0xff]
      %v395 = vld [vmem:[%s278 + $0x360] sm:$0xff]
      %v396 = vld [vmem:[%s278 + $0x368] sm:$0xff]
      %v397 = vld [vmem:[%s278 + $0x370] sm:$0xff]
      %v398 = vld [vmem:[%s278 + $0x378] sm:$0xff]
      %v399 = vld [vmem:[%s278 + $0x380] sm:$0xff]
      %v400 = vld [vmem:[%s278 + $0x388] sm:$0xff]
      %v401 = vld [vmem:[%s278 + $0x390] sm:$0xff]
      %v402 = vld [vmem:[%s278 + $0x398] sm:$0xff]
      %v403 = vld [vmem:[%s278 + $0x3a0] sm:$0xff]
      %v404 = vld [vmem:[%s278 + $0x3a8] sm:$0xff]
      %v405 = vld [vmem:[%s278 + $0x3b0] sm:$0xff]
      %v406 = vld [vmem:[%s278 + $0x3b8] sm:$0xff]
      %v407 = vld [vmem:[%s278 + $0x3c0] sm:$0xff]
      %v408 = vld [vmem:[%s278 + $0x3c8] sm:$0xff]
      %v409 = vld [vmem:[%s278 + $0x3d0] sm:$0xff]
      %v410 = vld [vmem:[%s278 + $0x3d8] sm:$0xff]
      %v411 = vld [vmem:[%s278 + $0x3e0] sm:$0xff]
      %v412 = vld [vmem:[%s278 + $0x3e8] sm:$0xff]
      %v413 = vld [vmem:[%s278 + $0x3f0] sm:$0xff]
      %v414 = vld [vmem:[%s278 + $0x3f8] sm:$0xff]
      %vm415 = vcmask 130048
      %v416 = vsel %vm415, %v287, 0.0
      %v417 = vsel %vm415, %v288, 0.0
      %v418 = vadd.f32 %v416, %v417
      %v419 = vrot.slane %v418, 4
      %v420 = vadd.f32 %v418, %v419
      %v421 = vrot.slane %v420, 2
      %v422 = vadd.f32 %v420, %v421
      %v423 = vrot.slane %v422, 1
      %v424 = vadd.f32 %v422, %v423
      %v425 = vsel %vm415, %v289, 0.0
      %v426 = vsel %vm415, %v290, 0.0
      %v427 = vadd.f32 %v425, %v426
      %v428 = vrot.slane %v427, 4
      %v429 = vadd.f32 %v427, %v428
      %v430 = vrot.slane %v429, 2
      %v431 = vadd.f32 %v429, %v430
      %v432 = vrot.slane %v431, 1
      %v433 = vadd.f32 %v431, %v432
      %v434 = vsel %vm415, %v291, 0.0
      %v435 = vsel %vm415, %v292, 0.0
      %v436 = vadd.f32 %v434, %v435
      %v437 = vrot.slane %v436, 4
      %v438 = vadd.f32 %v436, %v437
      %v439 = vrot.slane %v438, 2
      %v440 = vadd.f32 %v438, %v439
      %v441 = vrot.slane %v440, 1
      %v442 = vadd.f32 %v440, %v441
      %v443 = vsel %vm415, %v293, 0.0
      %v444 = vsel %vm415, %v294, 0.0
      %v445 = vadd.f32 %v443, %v444
      %v446 = vrot.slane %v445, 4
      %v447 = vadd.f32 %v445, %v446
      %v448 = vrot.slane %v447, 2
      %v449 = vadd.f32 %v447, %v448
      %v450 = vrot.slane %v449, 1
      %v451 = vadd.f32 %v449, %v450
      %v452 = vsel %vm415, %v295, 0.0
      %v453 = vsel %vm415, %v296, 0.0
      %v454 = vadd.f32 %v452, %v453
      %v455 = vrot.slane %v454, 4
      %v456 = vadd.f32 %v454, %v455
      %v457 = vrot.slane %v456, 2
      %v458 = vadd.f32 %v456, %v457
      %v459 = vrot.slane %v458, 1
      %v460 = vadd.f32 %v458, %v459
      %v461 = vsel %vm415, %v297, 0.0
      %v462 = vsel %vm415, %v298, 0.0
      %v463 = vadd.f32 %v461, %v462
      %v464 = vrot.slane %v463, 4
      %v465 = vadd.f32 %v463, %v464
      %v466 = vrot.slane %v465, 2
      %v467 = vadd.f32 %v465, %v466
      %v468 = vrot.slane %v467, 1
      %v469 = vadd.f32 %v467, %v468
      %v470 = vsel %vm415, %v299, 0.0
      %v471 = vsel %vm415, %v300, 0.0
      %v472 = vadd.f32 %v470, %v471
      %v473 = vrot.slane %v472, 4
      %v474 = vadd.f32 %v472, %v473
      %v475 = vrot.slane %v474, 2
      %v476 = vadd.f32 %v474, %v475
      %v477 = vrot.slane %v476, 1
      %v478 = vadd.f32 %v476, %v477
      %v479 = vsel %vm415, %v301, 0.0
      %v480 = vsel %vm415, %v302, 0.0
      %v481 = vadd.f32 %v479, %v480
      %v482 = vrot.slane %v481, 4
      %v483 = vadd.f32 %v481, %v482
      %v484 = vrot.slane %v483, 2
      %v485 = vadd.f32 %v483, %v484
      %v486 = vrot.slane %v485, 1
      %v487 = vadd.f32 %v485, %v486
      %v488 = vsel %vm415, %v303, 0.0
      %v489 = vsel %vm415, %v304, 0.0
      %v490 = vadd.f32 %v488, %v489
      %v491 = vrot.slane %v490, 4
      %v492 = vadd.f32 %v490, %v491
      %v493 = vrot.slane %v492, 2
      %v494 = vadd.f32 %v492, %v493
      %v495 = vrot.slane %v494, 1
      %v496 = vadd.f32 %v494, %v495
      %v497 = vsel %vm415, %v305, 0.0
      %v498 = vsel %vm415, %v306, 0.0
      %v499 = vadd.f32 %v497, %v498
      %v500 = vrot.slane %v499, 4
      %v501 = vadd.f32 %v499, %v500
      %v502 = vrot.slane %v501, 2
      %v503 = vadd.f32 %v501, %v502
      %v504 = vrot.slane %v503, 1
      %v505 = vadd.f32 %v503, %v504
      %v506 = vsel %vm415, %v307, 0.0
      %v507 = vsel %vm415, %v308, 0.0
      %v508 = vadd.f32 %v506, %v507
      %v509 = vrot.slane %v508, 4
      %v510 = vadd.f32 %v508, %v509
      %v511 = vrot.slane %v510, 2
      %v512 = vadd.f32 %v510, %v511
      %v513 = vrot.slane %v512, 1
      %v514 = vadd.f32 %v512, %v513
      %v515 = vsel %vm415, %v309, 0.0
      %v516 = vsel %vm415, %v310, 0.0
      %v517 = vadd.f32 %v515, %v516
      %v518 = vrot.slane %v517, 4
      %v519 = vadd.f32 %v517, %v518
      %v520 = vrot.slane %v519, 2
      %v521 = vadd.f32 %v519, %v520
      %v522 = vrot.slane %v521, 1
      %v523 = vadd.f32 %v521, %v522
      %v524 = vsel %vm415, %v311, 0.0
      %v525 = vsel %vm415, %v312, 0.0
      %v526 = vadd.f32 %v524, %v525
      %v527 = vrot.slane %v526, 4
      %v528 = vadd.f32 %v526, %v527
      %v529 = vrot.slane %v528, 2
      %v530 = vadd.f32 %v528, %v529
      %v531 = vrot.slane %v530, 1
      %v532 = vadd.f32 %v530, %v531
      %v533 = vsel %vm415, %v313, 0.0
      %v534 = vsel %vm415, %v314, 0.0
      %v535 = vadd.f32 %v533, %v534
      %v536 = vrot.slane %v535, 4
      %v537 = vadd.f32 %v535, %v536
      %v538 = vrot.slane %v537, 2
      %v539 = vadd.f32 %v537, %v538
      %v540 = vrot.slane %v539, 1
      %v541 = vadd.f32 %v539, %v540
      %v542 = vsel %vm415, %v315, 0.0
      %v543 = vsel %vm415, %v316, 0.0
      %v544 = vadd.f32 %v542, %v543
      %v545 = vrot.slane %v544, 4
      %v546 = vadd.f32 %v544, %v545
      %v547 = vrot.slane %v546, 2
      %v548 = vadd.f32 %v546, %v547
      %v549 = vrot.slane %v548, 1
      %v550 = vadd.f32 %v548, %v549
      %v551 = vsel %vm415, %v317, 0.0
      %v552 = vsel %vm415, %v318, 0.0
      %v553 = vadd.f32 %v551, %v552
      %v554 = vrot.slane %v553, 4
      %v555 = vadd.f32 %v553, %v554
      %v556 = vrot.slane %v555, 2
      %v557 = vadd.f32 %v555, %v556
      %v558 = vrot.slane %v557, 1
      %v559 = vadd.f32 %v557, %v558
      %v560 = vsel %vm415, %v319, 0.0
      %v561 = vsel %vm415, %v320, 0.0
      %v562 = vadd.f32 %v560, %v561
      %v563 = vrot.slane %v562, 4
      %v564 = vadd.f32 %v562, %v563
      %v565 = vrot.slane %v564, 2
      %v566 = vadd.f32 %v564, %v565
      %v567 = vrot.slane %v566, 1
      %v568 = vadd.f32 %v566, %v567
      %v569 = vsel %vm415, %v321, 0.0
      %v570 = vsel %vm415, %v322, 0.0
      %v571 = vadd.f32 %v569, %v570
      %v572 = vrot.slane %v571, 4
      %v573 = vadd.f32 %v571, %v572
      %v574 = vrot.slane %v573, 2
      %v575 = vadd.f32 %v573, %v574
      %v576 = vrot.slane %v575, 1
      %v577 = vadd.f32 %v575, %v576
      %v578 = vsel %vm415, %v323, 0.0
      %v579 = vsel %vm415, %v324, 0.0
      %v580 = vadd.f32 %v578, %v579
      %v581 = vrot.slane %v580, 4
      %v582 = vadd.f32 %v580, %v581
      %v583 = vrot.slane %v582, 2
      %v584 = vadd.f32 %v582, %v583
      %v585 = vrot.slane %v584, 1
      %v586 = vadd.f32 %v584, %v585
      %v587 = vsel %vm415, %v325, 0.0
      %v588 = vsel %vm415, %v326, 0.0
      %v589 = vadd.f32 %v587, %v588
      %v590 = vrot.slane %v589, 4
      %v591 = vadd.f32 %v589, %v590
      %v592 = vrot.slane %v591, 2
      %v593 = vadd.f32 %v591, %v592
      %v594 = vrot.slane %v593, 1
      %v595 = vadd.f32 %v593, %v594
      %v596 = vsel %vm415, %v327, 0.0
      %v597 = vsel %vm415, %v328, 0.0
      %v598 = vadd.f32 %v596, %v597
      %v599 = vrot.slane %v598, 4
      %v600 = vadd.f32 %v598, %v599
      %v601 = vrot.slane %v600, 2
      %v602 = vadd.f32 %v600, %v601
      %v603 = vrot.slane %v602, 1
      %v604 = vadd.f32 %v602, %v603
      %v605 = vsel %vm415, %v329, 0.0
      %v606 = vsel %vm415, %v330, 0.0
      %v607 = vadd.f32 %v605, %v606
      %v608 = vrot.slane %v607, 4
      %v609 = vadd.f32 %v607, %v608
      %v610 = vrot.slane %v609, 2
      %v611 = vadd.f32 %v609, %v610
      %v612 = vrot.slane %v611, 1
      %v613 = vadd.f32 %v611, %v612
      %v614 = vsel %vm415, %v331, 0.0
      %v615 = vsel %vm415, %v332, 0.0
      %v616 = vadd.f32 %v614, %v615
      %v617 = vrot.slane %v616, 4
      %v618 = vadd.f32 %v616, %v617
      %v619 = vrot.slane %v618, 2
      %v620 = vadd.f32 %v618, %v619
      %v621 = vrot.slane %v620, 1
      %v622 = vadd.f32 %v620, %v621
      %v623 = vsel %vm415, %v333, 0.0
      %v624 = vsel %vm415, %v334, 0.0
      %v625 = vadd.f32 %v623, %v624
      %v626 = vrot.slane %v625, 4
      %v627 = vadd.f32 %v625, %v626
      %v628 = vrot.slane %v627, 2
      %v629 = vadd.f32 %v627, %v628
      %v630 = vrot.slane %v629, 1
      %v631 = vadd.f32 %v629, %v630
      %v632 = vsel %vm415, %v335, 0.0
      %v633 = vsel %vm415, %v336, 0.0
      %v634 = vadd.f32 %v632, %v633
      %v635 = vrot.slane %v634, 4
      %v636 = vadd.f32 %v634, %v635
      %v637 = vrot.slane %v636, 2
      %v638 = vadd.f32 %v636, %v637
      %v639 = vrot.slane %v638, 1
      %v640 = vadd.f32 %v638, %v639
      %v641 = vsel %vm415, %v337, 0.0
      %v642 = vsel %vm415, %v338, 0.0
      %v643 = vadd.f32 %v641, %v642
      %v644 = vrot.slane %v643, 4
      %v645 = vadd.f32 %v643, %v644
      %v646 = vrot.slane %v645, 2
      %v647 = vadd.f32 %v645, %v646
      %v648 = vrot.slane %v647, 1
      %v649 = vadd.f32 %v647, %v648
      %v650 = vsel %vm415, %v339, 0.0
      %v651 = vsel %vm415, %v340, 0.0
      %v652 = vadd.f32 %v650, %v651
      %v653 = vrot.slane %v652, 4
      %v654 = vadd.f32 %v652, %v653
      %v655 = vrot.slane %v654, 2
      %v656 = vadd.f32 %v654, %v655
      %v657 = vrot.slane %v656, 1
      %v658 = vadd.f32 %v656, %v657
      %v659 = vsel %vm415, %v341, 0.0
      %v660 = vsel %vm415, %v342, 0.0
      %v661 = vadd.f32 %v659, %v660
      %v662 = vrot.slane %v661, 4
      %v663 = vadd.f32 %v661, %v662
      %v664 = vrot.slane %v663, 2
      %v665 = vadd.f32 %v663, %v664
      %v666 = vrot.slane %v665, 1
      %v667 = vadd.f32 %v665, %v666
      %v668 = vsel %vm415, %v343, 0.0
      %v669 = vsel %vm415, %v344, 0.0
      %v670 = vadd.f32 %v668, %v669
      %v671 = vrot.slane %v670, 4
      %v672 = vadd.f32 %v670, %v671
      %v673 = vrot.slane %v672, 2
      %v674 = vadd.f32 %v672, %v673
      %v675 = vrot.slane %v674, 1
      %v676 = vadd.f32 %v674, %v675
      %v677 = vsel %vm415, %v345, 0.0
      %v678 = vsel %vm415, %v346, 0.0
      %v679 = vadd.f32 %v677, %v678
      %v680 = vrot.slane %v679, 4
      %v681 = vadd.f32 %v679, %v680
      %v682 = vrot.slane %v681, 2
      %v683 = vadd.f32 %v681, %v682
      %v684 = vrot.slane %v683, 1
      %v685 = vadd.f32 %v683, %v684
      %v686 = vsel %vm415, %v347, 0.0
      %v687 = vsel %vm415, %v348, 0.0
      %v688 = vadd.f32 %v686, %v687
      %v689 = vrot.slane %v688, 4
      %v690 = vadd.f32 %v688, %v689
      %v691 = vrot.slane %v690, 2
      %v692 = vadd.f32 %v690, %v691
      %v693 = vrot.slane %v692, 1
      %v694 = vadd.f32 %v692, %v693
      %v695 = vsel %vm415, %v349, 0.0
      %v696 = vsel %vm415, %v350, 0.0
      %v697 = vadd.f32 %v695, %v696
      %v698 = vrot.slane %v697, 4
      %v699 = vadd.f32 %v697, %v698
      %v700 = vrot.slane %v699, 2
      %v701 = vadd.f32 %v699, %v700
      %v702 = vrot.slane %v701, 1
      %v703 = vadd.f32 %v701, %v702
      %v704 = vsel %vm415, %v351, 0.0
      %v705 = vsel %vm415, %v352, 0.0
      %v706 = vadd.f32 %v704, %v705
      %v707 = vrot.slane %v706, 4
      %v708 = vadd.f32 %v706, %v707
      %v709 = vrot.slane %v708, 2
      %v710 = vadd.f32 %v708, %v709
      %v711 = vrot.slane %v710, 1
      %v712 = vadd.f32 %v710, %v711
      %v713 = vsel %vm415, %v353, 0.0
      %v714 = vsel %vm415, %v354, 0.0
      %v715 = vadd.f32 %v713, %v714
      %v716 = vrot.slane %v715, 4
      %v717 = vadd.f32 %v715, %v716
      %v718 = vrot.slane %v717, 2
      %v719 = vadd.f32 %v717, %v718
      %v720 = vrot.slane %v719, 1
      %v721 = vadd.f32 %v719, %v720
      %v722 = vsel %vm415, %v355, 0.0
      %v723 = vsel %vm415, %v356, 0.0
      %v724 = vadd.f32 %v722, %v723
      %v725 = vrot.slane %v724, 4
      %v726 = vadd.f32 %v724, %v725
      %v727 = vrot.slane %v726, 2
      %v728 = vadd.f32 %v726, %v727
      %v729 = vrot.slane %v728, 1
      %v730 = vadd.f32 %v728, %v729
      %v731 = vsel %vm415, %v357, 0.0
      %v732 = vsel %vm415, %v358, 0.0
      %v733 = vadd.f32 %v731, %v732
      %v734 = vrot.slane %v733, 4
      %v735 = vadd.f32 %v733, %v734
      %v736 = vrot.slane %v735, 2
      %v737 = vadd.f32 %v735, %v736
      %v738 = vrot.slane %v737, 1
      %v739 = vadd.f32 %v737, %v738
      %v740 = vsel %vm415, %v359, 0.0
      %v741 = vsel %vm415, %v360, 0.0
      %v742 = vadd.f32 %v740, %v741
      %v743 = vrot.slane %v742, 4
      %v744 = vadd.f32 %v742, %v743
      %v745 = vrot.slane %v744, 2
      %v746 = vadd.f32 %v744, %v745
      %v747 = vrot.slane %v746, 1
      %v748 = vadd.f32 %v746, %v747
      %v749 = vsel %vm415, %v361, 0.0
      %v750 = vsel %vm415, %v362, 0.0
      %v751 = vadd.f32 %v749, %v750
      %v752 = vrot.slane %v751, 4
      %v753 = vadd.f32 %v751, %v752
      %v754 = vrot.slane %v753, 2
      %v755 = vadd.f32 %v753, %v754
      %v756 = vrot.slane %v755, 1
      %v757 = vadd.f32 %v755, %v756
      %v758 = vsel %vm415, %v363, 0.0
      %v759 = vsel %vm415, %v364, 0.0
      %v760 = vadd.f32 %v758, %v759
      %v761 = vrot.slane %v760, 4
      %v762 = vadd.f32 %v760, %v761
      %v763 = vrot.slane %v762, 2
      %v764 = vadd.f32 %v762, %v763
      %v765 = vrot.slane %v764, 1
      %v766 = vadd.f32 %v764, %v765
      %v767 = vsel %vm415, %v365, 0.0
      %v768 = vsel %vm415, %v366, 0.0
      %v769 = vadd.f32 %v767, %v768
      %v770 = vrot.slane %v769, 4
      %v771 = vadd.f32 %v769, %v770
      %v772 = vrot.slane %v771, 2
      %v773 = vadd.f32 %v771, %v772
      %v774 = vrot.slane %v773, 1
      %v775 = vadd.f32 %v773, %v774
      %v776 = vsel %vm415, %v367, 0.0
      %v777 = vsel %vm415, %v368, 0.0
      %v778 = vadd.f32 %v776, %v777
      %v779 = vrot.slane %v778, 4
      %v780 = vadd.f32 %v778, %v779
      %v781 = vrot.slane %v780, 2
      %v782 = vadd.f32 %v780, %v781
      %v783 = vrot.slane %v782, 1
      %v784 = vadd.f32 %v782, %v783
      %v785 = vsel %vm415, %v369, 0.0
      %v786 = vsel %vm415, %v370, 0.0
      %v787 = vadd.f32 %v785, %v786
      %v788 = vrot.slane %v787, 4
      %v789 = vadd.f32 %v787, %v788
      %v790 = vrot.slane %v789, 2
      %v791 = vadd.f32 %v789, %v790
      %v792 = vrot.slane %v791, 1
      %v793 = vadd.f32 %v791, %v792
      %v794 = vsel %vm415, %v371, 0.0
      %v795 = vsel %vm415, %v372, 0.0
      %v796 = vadd.f32 %v794, %v795
      %v797 = vrot.slane %v796, 4
      %v798 = vadd.f32 %v796, %v797
      %v799 = vrot.slane %v798, 2
      %v800 = vadd.f32 %v798, %v799
      %v801 = vrot.slane %v800, 1
      %v802 = vadd.f32 %v800, %v801
      %v803 = vsel %vm415, %v373, 0.0
      %v804 = vsel %vm415, %v374, 0.0
      %v805 = vadd.f32 %v803, %v804
      %v806 = vrot.slane %v805, 4
      %v807 = vadd.f32 %v805, %v806
      %v808 = vrot.slane %v807, 2
      %v809 = vadd.f32 %v807, %v808
      %v810 = vrot.slane %v809, 1
      %v811 = vadd.f32 %v809, %v810
      %v812 = vsel %vm415, %v375, 0.0
      %v813 = vsel %vm415, %v376, 0.0
      %v814 = vadd.f32 %v812, %v813
      %v815 = vrot.slane %v814, 4
      %v816 = vadd.f32 %v814, %v815
      %v817 = vrot.slane %v816, 2
      %v818 = vadd.f32 %v816, %v817
      %v819 = vrot.slane %v818, 1
      %v820 = vadd.f32 %v818, %v819
      %v821 = vsel %vm415, %v377, 0.0
      %v822 = vsel %vm415, %v378, 0.0
      %v823 = vadd.f32 %v821, %v822
      %v824 = vrot.slane %v823, 4
      %v825 = vadd.f32 %v823, %v824
      %v826 = vrot.slane %v825, 2
      %v827 = vadd.f32 %v825, %v826
      %v828 = vrot.slane %v827, 1
      %v829 = vadd.f32 %v827, %v828
      %v830 = vsel %vm415, %v379, 0.0
      %v831 = vsel %vm415, %v380, 0.0
      %v832 = vadd.f32 %v830, %v831
      %v833 = vrot.slane %v832, 4
      %v834 = vadd.f32 %v832, %v833
      %v835 = vrot.slane %v834, 2
      %v836 = vadd.f32 %v834, %v835
      %v837 = vrot.slane %v836, 1
      %v838 = vadd.f32 %v836, %v837
      %v839 = vsel %vm415, %v381, 0.0
      %v840 = vsel %vm415, %v382, 0.0
      %v841 = vadd.f32 %v839, %v840
      %v842 = vrot.slane %v841, 4
      %v843 = vadd.f32 %v841, %v842
      %v844 = vrot.slane %v843, 2
      %v845 = vadd.f32 %v843, %v844
      %v846 = vrot.slane %v845, 1
      %v847 = vadd.f32 %v845, %v846
      %v848 = vsel %vm415, %v383, 0.0
      %v849 = vsel %vm415, %v384, 0.0
      %v850 = vadd.f32 %v848, %v849
      %v851 = vrot.slane %v850, 4
      %v852 = vadd.f32 %v850, %v851
      %v853 = vrot.slane %v852, 2
      %v854 = vadd.f32 %v852, %v853
      %v855 = vrot.slane %v854, 1
      %v856 = vadd.f32 %v854, %v855
      %v857 = vsel %vm415, %v385, 0.0
      %v858 = vsel %vm415, %v386, 0.0
      %v859 = vadd.f32 %v857, %v858
      %v860 = vrot.slane %v859, 4
      %v861 = vadd.f32 %v859, %v860
      %v862 = vrot.slane %v861, 2
      %v863 = vadd.f32 %v861, %v862
      %v864 = vrot.slane %v863, 1
      %v865 = vadd.f32 %v863, %v864
      %v866 = vsel %vm415, %v387, 0.0
      %v867 = vsel %vm415, %v388, 0.0
      %v868 = vadd.f32 %v866, %v867
      %v869 = vrot.slane %v868, 4
      %v870 = vadd.f32 %v868, %v869
      %v871 = vrot.slane %v870, 2
      %v872 = vadd.f32 %v870, %v871
      %v873 = vrot.slane %v872, 1
      %v874 = vadd.f32 %v872, %v873
      %v875 = vsel %vm415, %v389, 0.0
      %v876 = vsel %vm415, %v390, 0.0
      %v877 = vadd.f32 %v875, %v876
      %v878 = vrot.slane %v877, 4
      %v879 = vadd.f32 %v877, %v878
      %v880 = vrot.slane %v879, 2
      %v881 = vadd.f32 %v879, %v880
      %v882 = vrot.slane %v881, 1
      %v883 = vadd.f32 %v881, %v882
      %v884 = vsel %vm415, %v391, 0.0
      %v885 = vsel %vm415, %v392, 0.0
      %v886 = vadd.f32 %v884, %v885
      %v887 = vrot.slane %v886, 4
      %v888 = vadd.f32 %v886, %v887
      %v889 = vrot.slane %v888, 2
      %v890 = vadd.f32 %v888, %v889
      %v891 = vrot.slane %v890, 1
      %v892 = vadd.f32 %v890, %v891
      %v893 = vsel %vm415, %v393, 0.0
      %v894 = vsel %vm415, %v394, 0.0
      %v895 = vadd.f32 %v893, %v894
      %v896 = vrot.slane %v895, 4
      %v897 = vadd.f32 %v895, %v896
      %v898 = vrot.slane %v897, 2
      %v899 = vadd.f32 %v897, %v898
      %v900 = vrot.slane %v899, 1
      %v901 = vadd.f32 %v899, %v900
      %v902 = vsel %vm415, %v395, 0.0
      %v903 = vsel %vm415, %v396, 0.0
      %v904 = vadd.f32 %v902, %v903
      %v905 = vrot.slane %v904, 4
      %v906 = vadd.f32 %v904, %v905
      %v907 = vrot.slane %v906, 2
      %v908 = vadd.f32 %v906, %v907
      %v909 = vrot.slane %v908, 1
      %v910 = vadd.f32 %v908, %v909
      %v911 = vsel %vm415, %v397, 0.0
      %v912 = vsel %vm415, %v398, 0.0
      %v913 = vadd.f32 %v911, %v912
      %v914 = vrot.slane %v913, 4
      %v915 = vadd.f32 %v913, %v914
      %v916 = vrot.slane %v915, 2
      %v917 = vadd.f32 %v915, %v916
      %v918 = vrot.slane %v917, 1
      %v919 = vadd.f32 %v917, %v918
      %v920 = vsel %vm415, %v399, 0.0
      %v921 = vsel %vm415, %v400, 0.0
      %v922 = vadd.f32 %v920, %v921
      %v923 = vrot.slane %v922, 4
      %v924 = vadd.f32 %v922, %v923
      %v925 = vrot.slane %v924, 2
      %v926 = vadd.f32 %v924, %v925
      %v927 = vrot.slane %v926, 1
      %v928 = vadd.f32 %v926, %v927
      %v929 = vsel %vm415, %v401, 0.0
      %v930 = vsel %vm415, %v402, 0.0
      %v931 = vadd.f32 %v929, %v930
      %v932 = vrot.slane %v931, 4
      %v933 = vadd.f32 %v931, %v932
      %v934 = vrot.slane %v933, 2
      %v935 = vadd.f32 %v933, %v934
      %v936 = vrot.slane %v935, 1
      %v937 = vadd.f32 %v935, %v936
      %v938 = vsel %vm415, %v403, 0.0
      %v939 = vsel %vm415, %v404, 0.0
      %v940 = vadd.f32 %v938, %v939
      %v941 = vrot.slane %v940, 4
      %v942 = vadd.f32 %v940, %v941
      %v943 = vrot.slane %v942, 2
      %v944 = vadd.f32 %v942, %v943
      %v945 = vrot.slane %v944, 1
      %v946 = vadd.f32 %v944, %v945
      %v947 = vsel %vm415, %v405, 0.0
      %v948 = vsel %vm415, %v406, 0.0
      %v949 = vadd.f32 %v947, %v948
      %v950 = vrot.slane %v949, 4
      %v951 = vadd.f32 %v949, %v950
      %v952 = vrot.slane %v951, 2
      %v953 = vadd.f32 %v951, %v952
      %v954 = vrot.slane %v953, 1
      %v955 = vadd.f32 %v953, %v954
      %v956 = vsel %vm415, %v407, 0.0
      %v957 = vsel %vm415, %v408, 0.0
      %v958 = vadd.f32 %v956, %v957
      %v959 = vrot.slane %v958, 4
      %v960 = vadd.f32 %v958, %v959
      %v961 = vrot.slane %v960, 2
      %v962 = vadd.f32 %v960, %v961
      %v963 = vrot.slane %v962, 1
      %v964 = vadd.f32 %v962, %v963
      %v965 = vsel %vm415, %v409, 0.0
      %v966 = vsel %vm415, %v410, 0.0
      %v967 = vadd.f32 %v965, %v966
      %v968 = vrot.slane %v967, 4
      %v969 = vadd.f32 %v967, %v968
      %v970 = vrot.slane %v969, 2
      %v971 = vadd.f32 %v969, %v970
      %v972 = vrot.slane %v971, 1
      %v973 = vadd.f32 %v971, %v972
      %v974 = vsel %vm415, %v411, 0.0
      %v975 = vsel %vm415, %v412, 0.0
      %v976 = vadd.f32 %v974, %v975
      %v977 = vrot.slane %v976, 4
      %v978 = vadd.f32 %v976, %v977
      %v979 = vrot.slane %v978, 2
      %v980 = vadd.f32 %v978, %v979
      %v981 = vrot.slane %v980, 1
      %v982 = vadd.f32 %v980, %v981
      %v983 = vsel %vm415, %v413, 0.0
      %v984 = vsel %vm415, %v414, 0.0
      %v985 = vadd.f32 %v983, %v984
      %v986 = vrot.slane %v985, 4
      %v987 = vadd.f32 %v985, %v986
      %v988 = vrot.slane %v987, 2
      %v989 = vadd.f32 %v987, %v988
      %v990 = vrot.slane %v989, 1
      %v991 = vadd.f32 %v989, %v990
      %v992 = vrcp.pop 16.0
      %v993 = vmul.f32 %v424, %v992
      %v994 = vmul.f32 %v433, %v992
      %v995 = vmul.f32 %v442, %v992
      %v996 = vmul.f32 %v451, %v992
      %v997 = vmul.f32 %v460, %v992
      %v998 = vmul.f32 %v469, %v992
      %v999 = vmul.f32 %v478, %v992
      %v1000 = vmul.f32 %v487, %v992
      %v1001 = vmul.f32 %v496, %v992
      %v1002 = vmul.f32 %v505, %v992
      %v1003 = vmul.f32 %v514, %v992
      %v1004 = vmul.f32 %v523, %v992
      %v1005 = vmul.f32 %v532, %v992
      %v1006 = vmul.f32 %v541, %v992
      %v1007 = vmul.f32 %v550, %v992
      %v1008 = vmul.f32 %v559, %v992
      %v1009 = vmul.f32 %v568, %v992
      %v1010 = vmul.f32 %v577, %v992
      %v1011 = vmul.f32 %v586, %v992
      %v1012 = vmul.f32 %v595, %v992
      %v1013 = vmul.f32 %v604, %v992
      %v1014 = vmul.f32 %v613, %v992
      %v1015 = vmul.f32 %v622, %v992
      %v1016 = vmul.f32 %v631, %v992
      %v1017 = vmul.f32 %v640, %v992
      %v1018 = vmul.f32 %v649, %v992
      %v1019 = vmul.f32 %v658, %v992
      %v1020 = vmul.f32 %v667, %v992
      %v1021 = vmul.f32 %v676, %v992
      %v1022 = vmul.f32 %v685, %v992
      %v1023 = vmul.f32 %v694, %v992
      %v1024 = vmul.f32 %v703, %v992
      %v1025 = vmul.f32 %v712, %v992
      %v1026 = vmul.f32 %v721, %v992
      %v1027 = vmul.f32 %v730, %v992
      %v1028 = vmul.f32 %v739, %v992
      %v1029 = vmul.f32 %v748, %v992
      %v1030 = vmul.f32 %v757, %v992
      %v1031 = vmul.f32 %v766, %v992
      %v1032 = vmul.f32 %v775, %v992
      %v1033 = vmul.f32 %v784, %v992
      %v1034 = vmul.f32 %v793, %v992
      %v1035 = vmul.f32 %v802, %v992
      %v1036 = vmul.f32 %v811, %v992
      %v1037 = vmul.f32 %v820, %v992
      %v1038 = vmul.f32 %v829, %v992
      %v1039 = vmul.f32 %v838, %v992
      %v1040 = vmul.f32 %v847, %v992
      %v1041 = vmul.f32 %v856, %v992
      %v1042 = vmul.f32 %v865, %v992
      %v1043 = vmul.f32 %v874, %v992
      %v1044 = vmul.f32 %v883, %v992
      %v1045 = vmul.f32 %v892, %v992
      %v1046 = vmul.f32 %v901, %v992
      %v1047 = vmul.f32 %v910, %v992
      %v1048 = vmul.f32 %v919, %v992
      %v1049 = vmul.f32 %v928, %v992
      %v1050 = vmul.f32 %v937, %v992
      %v1051 = vmul.f32 %v946, %v992
      %v1052 = vmul.f32 %v955, %v992
      %v1053 = vmul.f32 %v964, %v992
      %v1054 = vmul.f32 %v973, %v992
      %v1055 = vmul.f32 %v982, %v992
      %v1056 = vmul.f32 %v991, %v992
      %v1057 = vsel %vm415, %v287, -inf
      %v1058 = vsel %vm415, %v288, -inf
      %v1059 = vmax.f32 %v1057, %v1058
      %v1060 = vrot.slane %v1059, 4
      %v1061 = vmax.f32 %v1059, %v1060
      %v1062 = vrot.slane %v1061, 2
      %v1063 = vmax.f32 %v1061, %v1062
      %v1064 = vrot.slane %v1063, 1
      %v1065 = vmax.f32 %v1063, %v1064
      %v1066 = vsel %vm415, %v289, -inf
      %v1067 = vsel %vm415, %v290, -inf
      %v1068 = vmax.f32 %v1066, %v1067
      %v1069 = vrot.slane %v1068, 4
      %v1070 = vmax.f32 %v1068, %v1069
      %v1071 = vrot.slane %v1070, 2
      %v1072 = vmax.f32 %v1070, %v1071
      %v1073 = vrot.slane %v1072, 1
      %v1074 = vmax.f32 %v1072, %v1073
      %v1075 = vsel %vm415, %v291, -inf
      %v1076 = vsel %vm415, %v292, -inf
      %v1077 = vmax.f32 %v1075, %v1076
      %v1078 = vrot.slane %v1077, 4
      %v1079 = vmax.f32 %v1077, %v1078
      %v1080 = vrot.slane %v1079, 2
      %v1081 = vmax.f32 %v1079, %v1080
      %v1082 = vrot.slane %v1081, 1
      %v1083 = vmax.f32 %v1081, %v1082
      %v1084 = vsel %vm415, %v293, -inf
      %v1085 = vsel %vm415, %v294, -inf
      %v1086 = vmax.f32 %v1084, %v1085
      %v1087 = vrot.slane %v1086, 4
      %v1088 = vmax.f32 %v1086, %v1087
      %v1089 = vrot.slane %v1088, 2
      %v1090 = vmax.f32 %v1088, %v1089
      %v1091 = vrot.slane %v1090, 1
      %v1092 = vmax.f32 %v1090, %v1091
      %v1093 = vsel %vm415, %v295, -inf
      %v1094 = vsel %vm415, %v296, -inf
      %v1095 = vmax.f32 %v1093, %v1094
      %v1096 = vrot.slane %v1095, 4
      %v1097 = vmax.f32 %v1095, %v1096
      %v1098 = vrot.slane %v1097, 2
      %v1099 = vmax.f32 %v1097, %v1098
      %v1100 = vrot.slane %v1099, 1
      %v1101 = vmax.f32 %v1099, %v1100
      %v1102 = vsel %vm415, %v297, -inf
      %v1103 = vsel %vm415, %v298, -inf
      %v1104 = vmax.f32 %v1102, %v1103
      %v1105 = vrot.slane %v1104, 4
      %v1106 = vmax.f32 %v1104, %v1105
      %v1107 = vrot.slane %v1106, 2
      %v1108 = vmax.f32 %v1106, %v1107
      %v1109 = vrot.slane %v1108, 1
      %v1110 = vmax.f32 %v1108, %v1109
      %v1111 = vsel %vm415, %v299, -inf
      %v1112 = vsel %vm415, %v300, -inf
      %v1113 = vmax.f32 %v1111, %v1112
      %v1114 = vrot.slane %v1113, 4
      %v1115 = vmax.f32 %v1113, %v1114
      %v1116 = vrot.slane %v1115, 2
      %v1117 = vmax.f32 %v1115, %v1116
      %v1118 = vrot.slane %v1117, 1
      %v1119 = vmax.f32 %v1117, %v1118
      %v1120 = vsel %vm415, %v301, -inf
      %v1121 = vsel %vm415, %v302, -inf
      %v1122 = vmax.f32 %v1120, %v1121
      %v1123 = vrot.slane %v1122, 4
      %v1124 = vmax.f32 %v1122, %v1123
      %v1125 = vrot.slane %v1124, 2
      %v1126 = vmax.f32 %v1124, %v1125
      %v1127 = vrot.slane %v1126, 1
      %v1128 = vmax.f32 %v1126, %v1127
      %v1129 = vsel %vm415, %v303, -inf
      %v1130 = vsel %vm415, %v304, -inf
      %v1131 = vmax.f32 %v1129, %v1130
      %v1132 = vrot.slane %v1131, 4
      %v1133 = vmax.f32 %v1131, %v1132
      %v1134 = vrot.slane %v1133, 2
      %v1135 = vmax.f32 %v1133, %v1134
      %v1136 = vrot.slane %v1135, 1
      %v1137 = vmax.f32 %v1135, %v1136
      %v1138 = vsel %vm415, %v305, -inf
      %v1139 = vsel %vm415, %v306, -inf
      %v1140 = vmax.f32 %v1138, %v1139
      %v1141 = vrot.slane %v1140, 4
      %v1142 = vmax.f32 %v1140, %v1141
      %v1143 = vrot.slane %v1142, 2
      %v1144 = vmax.f32 %v1142, %v1143
      %v1145 = vrot.slane %v1144, 1
      %v1146 = vmax.f32 %v1144, %v1145
      %v1147 = vsel %vm415, %v307, -inf
      %v1148 = vsel %vm415, %v308, -inf
      %v1149 = vmax.f32 %v1147, %v1148
      %v1150 = vrot.slane %v1149, 4
      %v1151 = vmax.f32 %v1149, %v1150
      %v1152 = vrot.slane %v1151, 2
      %v1153 = vmax.f32 %v1151, %v1152
      %v1154 = vrot.slane %v1153, 1
      %v1155 = vmax.f32 %v1153, %v1154
      %v1156 = vsel %vm415, %v309, -inf
      %v1157 = vsel %vm415, %v310, -inf
      %v1158 = vmax.f32 %v1156, %v1157
      %v1159 = vrot.slane %v1158, 4
      %v1160 = vmax.f32 %v1158, %v1159
      %v1161 = vrot.slane %v1160, 2
      %v1162 = vmax.f32 %v1160, %v1161
      %v1163 = vrot.slane %v1162, 1
      %v1164 = vmax.f32 %v1162, %v1163
      %v1165 = vsel %vm415, %v311, -inf
      %v1166 = vsel %vm415, %v312, -inf
      %v1167 = vmax.f32 %v1165, %v1166
      %v1168 = vrot.slane %v1167, 4
      %v1169 = vmax.f32 %v1167, %v1168
      %v1170 = vrot.slane %v1169, 2
      %v1171 = vmax.f32 %v1169, %v1170
      %v1172 = vrot.slane %v1171, 1
      %v1173 = vmax.f32 %v1171, %v1172
      %v1174 = vsel %vm415, %v313, -inf
      %v1175 = vsel %vm415, %v314, -inf
      %v1176 = vmax.f32 %v1174, %v1175
      %v1177 = vrot.slane %v1176, 4
      %v1178 = vmax.f32 %v1176, %v1177
      %v1179 = vrot.slane %v1178, 2
      %v1180 = vmax.f32 %v1178, %v1179
      %v1181 = vrot.slane %v1180, 1
      %v1182 = vmax.f32 %v1180, %v1181
      %v1183 = vsel %vm415, %v315, -inf
      %v1184 = vsel %vm415, %v316, -inf
      %v1185 = vmax.f32 %v1183, %v1184
      %v1186 = vrot.slane %v1185, 4
      %v1187 = vmax.f32 %v1185, %v1186
      %v1188 = vrot.slane %v1187, 2
      %v1189 = vmax.f32 %v1187, %v1188
      %v1190 = vrot.slane %v1189, 1
      %v1191 = vmax.f32 %v1189, %v1190
      %v1192 = vsel %vm415, %v317, -inf
      %v1193 = vsel %vm415, %v318, -inf
      %v1194 = vmax.f32 %v1192, %v1193
      %v1195 = vrot.slane %v1194, 4
      %v1196 = vmax.f32 %v1194, %v1195
      %v1197 = vrot.slane %v1196, 2
      %v1198 = vmax.f32 %v1196, %v1197
      %v1199 = vrot.slane %v1198, 1
      %v1200 = vmax.f32 %v1198, %v1199
      %v1201 = vsel %vm415, %v319, -inf
      %v1202 = vsel %vm415, %v320, -inf
      %v1203 = vmax.f32 %v1201, %v1202
      %v1204 = vrot.slane %v1203, 4
      %v1205 = vmax.f32 %v1203, %v1204
      %v1206 = vrot.slane %v1205, 2
      %v1207 = vmax.f32 %v1205, %v1206
      %v1208 = vrot.slane %v1207, 1
      %v1209 = vmax.f32 %v1207, %v1208
      %v1210 = vsel %vm415, %v321, -inf
      %v1211 = vsel %vm415, %v322, -inf
      %v1212 = vmax.f32 %v1210, %v1211
      %v1213 = vrot.slane %v1212, 4
      %v1214 = vmax.f32 %v1212, %v1213
      %v1215 = vrot.slane %v1214, 2
      %v1216 = vmax.f32 %v1214, %v1215
      %v1217 = vrot.slane %v1216, 1
      %v1218 = vmax.f32 %v1216, %v1217
      %v1219 = vsel %vm415, %v323, -inf
      %v1220 = vsel %vm415, %v324, -inf
      %v1221 = vmax.f32 %v1219, %v1220
      %v1222 = vrot.slane %v1221, 4
      %v1223 = vmax.f32 %v1221, %v1222
      %v1224 = vrot.slane %v1223, 2
      %v1225 = vmax.f32 %v1223, %v1224
      %v1226 = vrot.slane %v1225, 1
      %v1227 = vmax.f32 %v1225, %v1226
      %v1228 = vsel %vm415, %v325, -inf
      %v1229 = vsel %vm415, %v326, -inf
      %v1230 = vmax.f32 %v1228, %v1229
      %v1231 = vrot.slane %v1230, 4
      %v1232 = vmax.f32 %v1230, %v1231
      %v1233 = vrot.slane %v1232, 2
      %v1234 = vmax.f32 %v1232, %v1233
      %v1235 = vrot.slane %v1234, 1
      %v1236 = vmax.f32 %v1234, %v1235
      %v1237 = vsel %vm415, %v327, -inf
      %v1238 = vsel %vm415, %v328, -inf
      %v1239 = vmax.f32 %v1237, %v1238
      %v1240 = vrot.slane %v1239, 4
      %v1241 = vmax.f32 %v1239, %v1240
      %v1242 = vrot.slane %v1241, 2
      %v1243 = vmax.f32 %v1241, %v1242
      %v1244 = vrot.slane %v1243, 1
      %v1245 = vmax.f32 %v1243, %v1244
      %v1246 = vsel %vm415, %v329, -inf
      %v1247 = vsel %vm415, %v330, -inf
      %v1248 = vmax.f32 %v1246, %v1247
      %v1249 = vrot.slane %v1248, 4
      %v1250 = vmax.f32 %v1248, %v1249
      %v1251 = vrot.slane %v1250, 2
      %v1252 = vmax.f32 %v1250, %v1251
      %v1253 = vrot.slane %v1252, 1
      %v1254 = vmax.f32 %v1252, %v1253
      %v1255 = vsel %vm415, %v331, -inf
      %v1256 = vsel %vm415, %v332, -inf
      %v1257 = vmax.f32 %v1255, %v1256
      %v1258 = vrot.slane %v1257, 4
      %v1259 = vmax.f32 %v1257, %v1258
      %v1260 = vrot.slane %v1259, 2
      %v1261 = vmax.f32 %v1259, %v1260
      %v1262 = vrot.slane %v1261, 1
      %v1263 = vmax.f32 %v1261, %v1262
      %v1264 = vsel %vm415, %v333, -inf
      %v1265 = vsel %vm415, %v334, -inf
      %v1266 = vmax.f32 %v1264, %v1265
      %v1267 = vrot.slane %v1266, 4
      %v1268 = vmax.f32 %v1266, %v1267
      %v1269 = vrot.slane %v1268, 2
      %v1270 = vmax.f32 %v1268, %v1269
      %v1271 = vrot.slane %v1270, 1
      %v1272 = vmax.f32 %v1270, %v1271
      %v1273 = vsel %vm415, %v335, -inf
      %v1274 = vsel %vm415, %v336, -inf
      %v1275 = vmax.f32 %v1273, %v1274
      %v1276 = vrot.slane %v1275, 4
      %v1277 = vmax.f32 %v1275, %v1276
      %v1278 = vrot.slane %v1277, 2
      %v1279 = vmax.f32 %v1277, %v1278
      %v1280 = vrot.slane %v1279, 1
      %v1281 = vmax.f32 %v1279, %v1280
      %v1282 = vsel %vm415, %v337, -inf
      %v1283 = vsel %vm415, %v338, -inf
      %v1284 = vmax.f32 %v1282, %v1283
      %v1285 = vrot.slane %v1284, 4
      %v1286 = vmax.f32 %v1284, %v1285
      %v1287 = vrot.slane %v1286, 2
      %v1288 = vmax.f32 %v1286, %v1287
      %v1289 = vrot.slane %v1288, 1
      %v1290 = vmax.f32 %v1288, %v1289
      %v1291 = vsel %vm415, %v339, -inf
      %v1292 = vsel %vm415, %v340, -inf
      %v1293 = vmax.f32 %v1291, %v1292
      %v1294 = vrot.slane %v1293, 4
      %v1295 = vmax.f32 %v1293, %v1294
      %v1296 = vrot.slane %v1295, 2
      %v1297 = vmax.f32 %v1295, %v1296
      %v1298 = vrot.slane %v1297, 1
      %v1299 = vmax.f32 %v1297, %v1298
      %v1300 = vsel %vm415, %v341, -inf
      %v1301 = vsel %vm415, %v342, -inf
      %v1302 = vmax.f32 %v1300, %v1301
      %v1303 = vrot.slane %v1302, 4
      %v1304 = vmax.f32 %v1302, %v1303
      %v1305 = vrot.slane %v1304, 2
      %v1306 = vmax.f32 %v1304, %v1305
      %v1307 = vrot.slane %v1306, 1
      %v1308 = vmax.f32 %v1306, %v1307
      %v1309 = vsel %vm415, %v343, -inf
      %v1310 = vsel %vm415, %v344, -inf
      %v1311 = vmax.f32 %v1309, %v1310
      %v1312 = vrot.slane %v1311, 4
      %v1313 = vmax.f32 %v1311, %v1312
      %v1314 = vrot.slane %v1313, 2
      %v1315 = vmax.f32 %v1313, %v1314
      %v1316 = vrot.slane %v1315, 1
      %v1317 = vmax.f32 %v1315, %v1316
      %v1318 = vsel %vm415, %v345, -inf
      %v1319 = vsel %vm415, %v346, -inf
      %v1320 = vmax.f32 %v1318, %v1319
      %v1321 = vrot.slane %v1320, 4
      %v1322 = vmax.f32 %v1320, %v1321
      %v1323 = vrot.slane %v1322, 2
      %v1324 = vmax.f32 %v1322, %v1323
      %v1325 = vrot.slane %v1324, 1
      %v1326 = vmax.f32 %v1324, %v1325
      %v1327 = vsel %vm415, %v347, -inf
      %v1328 = vsel %vm415, %v348, -inf
      %v1329 = vmax.f32 %v1327, %v1328
      %v1330 = vrot.slane %v1329, 4
      %v1331 = vmax.f32 %v1329, %v1330
      %v1332 = vrot.slane %v1331, 2
      %v1333 = vmax.f32 %v1331, %v1332
      %v1334 = vrot.slane %v1333, 1
      %v1335 = vmax.f32 %v1333, %v1334
      %v1336 = vsel %vm415, %v349, -inf
      %v1337 = vsel %vm415, %v350, -inf
      %v1338 = vmax.f32 %v1336, %v1337
      %v1339 = vrot.slane %v1338, 4
      %v1340 = vmax.f32 %v1338, %v1339
      %v1341 = vrot.slane %v1340, 2
      %v1342 = vmax.f32 %v1340, %v1341
      %v1343 = vrot.slane %v1342, 1
      %v1344 = vmax.f32 %v1342, %v1343
      %v1345 = vsel %vm415, %v351, -inf
      %v1346 = vsel %vm415, %v352, -inf
      %v1347 = vmax.f32 %v1345, %v1346
      %v1348 = vrot.slane %v1347, 4
      %v1349 = vmax.f32 %v1347, %v1348
      %v1350 = vrot.slane %v1349, 2
      %v1351 = vmax.f32 %v1349, %v1350
      %v1352 = vrot.slane %v1351, 1
      %v1353 = vmax.f32 %v1351, %v1352
      %v1354 = vsel %vm415, %v353, -inf
      %v1355 = vsel %vm415, %v354, -inf
      %v1356 = vmax.f32 %v1354, %v1355
      %v1357 = vrot.slane %v1356, 4
      %v1358 = vmax.f32 %v1356, %v1357
      %v1359 = vrot.slane %v1358, 2
      %v1360 = vmax.f32 %v1358, %v1359
      %v1361 = vrot.slane %v1360, 1
      %v1362 = vmax.f32 %v1360, %v1361
      %v1363 = vsel %vm415, %v355, -inf
      %v1364 = vsel %vm415, %v356, -inf
      %v1365 = vmax.f32 %v1363, %v1364
      %v1366 = vrot.slane %v1365, 4
      %v1367 = vmax.f32 %v1365, %v1366
      %v1368 = vrot.slane %v1367, 2
      %v1369 = vmax.f32 %v1367, %v1368
      %v1370 = vrot.slane %v1369, 1
      %v1371 = vmax.f32 %v1369, %v1370
      %v1372 = vsel %vm415, %v357, -inf
      %v1373 = vsel %vm415, %v358, -inf
      %v1374 = vmax.f32 %v1372, %v1373
      %v1375 = vrot.slane %v1374, 4
      %v1376 = vmax.f32 %v1374, %v1375
      %v1377 = vrot.slane %v1376, 2
      %v1378 = vmax.f32 %v1376, %v1377
      %v1379 = vrot.slane %v1378, 1
      %v1380 = vmax.f32 %v1378, %v1379
      %v1381 = vsel %vm415, %v359, -inf
      %v1382 = vsel %vm415, %v360, -inf
      %v1383 = vmax.f32 %v1381, %v1382
      %v1384 = vrot.slane %v1383, 4
      %v1385 = vmax.f32 %v1383, %v1384
      %v1386 = vrot.slane %v1385, 2
      %v1387 = vmax.f32 %v1385, %v1386
      %v1388 = vrot.slane %v1387, 1
      %v1389 = vmax.f32 %v1387, %v1388
      %v1390 = vsel %vm415, %v361, -inf
      %v1391 = vsel %vm415, %v362, -inf
      %v1392 = vmax.f32 %v1390, %v1391
      %v1393 = vrot.slane %v1392, 4
      %v1394 = vmax.f32 %v1392, %v1393
      %v1395 = vrot.slane %v1394, 2
      %v1396 = vmax.f32 %v1394, %v1395
      %v1397 = vrot.slane %v1396, 1
      %v1398 = vmax.f32 %v1396, %v1397
      %v1399 = vsel %vm415, %v363, -inf
      %v1400 = vsel %vm415, %v364, -inf
      %v1401 = vmax.f32 %v1399, %v1400
      %v1402 = vrot.slane %v1401, 4
      %v1403 = vmax.f32 %v1401, %v1402
      %v1404 = vrot.slane %v1403, 2
      %v1405 = vmax.f32 %v1403, %v1404
      %v1406 = vrot.slane %v1405, 1
      %v1407 = vmax.f32 %v1405, %v1406
      %v1408 = vsel %vm415, %v365, -inf
      %v1409 = vsel %vm415, %v366, -inf
      %v1410 = vmax.f32 %v1408, %v1409
      %v1411 = vrot.slane %v1410, 4
      %v1412 = vmax.f32 %v1410, %v1411
      %v1413 = vrot.slane %v1412, 2
      %v1414 = vmax.f32 %v1412, %v1413
      %v1415 = vrot.slane %v1414, 1
      %v1416 = vmax.f32 %v1414, %v1415
      %v1417 = vsel %vm415, %v367, -inf
      %v1418 = vsel %vm415, %v368, -inf
      %v1419 = vmax.f32 %v1417, %v1418
      %v1420 = vrot.slane %v1419, 4
      %v1421 = vmax.f32 %v1419, %v1420
      %v1422 = vrot.slane %v1421, 2
      %v1423 = vmax.f32 %v1421, %v1422
      %v1424 = vrot.slane %v1423, 1
      %v1425 = vmax.f32 %v1423, %v1424
      %v1426 = vsel %vm415, %v369, -inf
      %v1427 = vsel %vm415, %v370, -inf
      %v1428 = vmax.f32 %v1426, %v1427
      %v1429 = vrot.slane %v1428, 4
      %v1430 = vmax.f32 %v1428, %v1429
      %v1431 = vrot.slane %v1430, 2
      %v1432 = vmax.f32 %v1430, %v1431
      %v1433 = vrot.slane %v1432, 1
      %v1434 = vmax.f32 %v1432, %v1433
      %v1435 = vsel %vm415, %v371, -inf
      %v1436 = vsel %vm415, %v372, -inf
      %v1437 = vmax.f32 %v1435, %v1436
      %v1438 = vrot.slane %v1437, 4
      %v1439 = vmax.f32 %v1437, %v1438
      %v1440 = vrot.slane %v1439, 2
      %v1441 = vmax.f32 %v1439, %v1440
      %v1442 = vrot.slane %v1441, 1
      %v1443 = vmax.f32 %v1441, %v1442
      %v1444 = vsel %vm415, %v373, -inf
      %v1445 = vsel %vm415, %v374, -inf
      %v1446 = vmax.f32 %v1444, %v1445
      %v1447 = vrot.slane %v1446, 4
      %v1448 = vmax.f32 %v1446, %v1447
      %v1449 = vrot.slane %v1448, 2
      %v1450 = vmax.f32 %v1448, %v1449
      %v1451 = vrot.slane %v1450, 1
      %v1452 = vmax.f32 %v1450, %v1451
      %v1453 = vsel %vm415, %v375, -inf
      %v1454 = vsel %vm415, %v376, -inf
      %v1455 = vmax.f32 %v1453, %v1454
      %v1456 = vrot.slane %v1455, 4
      %v1457 = vmax.f32 %v1455, %v1456
      %v1458 = vrot.slane %v1457, 2
      %v1459 = vmax.f32 %v1457, %v1458
      %v1460 = vrot.slane %v1459, 1
      %v1461 = vmax.f32 %v1459, %v1460
      %v1462 = vsel %vm415, %v377, -inf
      %v1463 = vsel %vm415, %v378, -inf
      %v1464 = vmax.f32 %v1462, %v1463
      %v1465 = vrot.slane %v1464, 4
      %v1466 = vmax.f32 %v1464, %v1465
      %v1467 = vrot.slane %v1466, 2
      %v1468 = vmax.f32 %v1466, %v1467
      %v1469 = vrot.slane %v1468, 1
      %v1470 = vmax.f32 %v1468, %v1469
      %v1471 = vsel %vm415, %v379, -inf
      %v1472 = vsel %vm415, %v380, -inf
      %v1473 = vmax.f32 %v1471, %v1472
      %v1474 = vrot.slane %v1473, 4
      %v1475 = vmax.f32 %v1473, %v1474
      %v1476 = vrot.slane %v1475, 2
      %v1477 = vmax.f32 %v1475, %v1476
      %v1478 = vrot.slane %v1477, 1
      %v1479 = vmax.f32 %v1477, %v1478
      %v1480 = vsel %vm415, %v381, -inf
      %v1481 = vsel %vm415, %v382, -inf
      %v1482 = vmax.f32 %v1480, %v1481
      %v1483 = vrot.slane %v1482, 4
      %v1484 = vmax.f32 %v1482, %v1483
      %v1485 = vrot.slane %v1484, 2
      %v1486 = vmax.f32 %v1484, %v1485
      %v1487 = vrot.slane %v1486, 1
      %v1488 = vmax.f32 %v1486, %v1487
      %v1489 = vsel %vm415, %v383, -inf
      %v1490 = vsel %vm415, %v384, -inf
      %v1491 = vmax.f32 %v1489, %v1490
      %v1492 = vrot.slane %v1491, 4
      %v1493 = vmax.f32 %v1491, %v1492
      %v1494 = vrot.slane %v1493, 2
      %v1495 = vmax.f32 %v1493, %v1494
      %v1496 = vrot.slane %v1495, 1
      %v1497 = vmax.f32 %v1495, %v1496
      %v1498 = vsel %vm415, %v385, -inf
      %v1499 = vsel %vm415, %v386, -inf
      %v1500 = vmax.f32 %v1498, %v1499
      %v1501 = vrot.slane %v1500, 4
      %v1502 = vmax.f32 %v1500, %v1501
      %v1503 = vrot.slane %v1502, 2
      %v1504 = vmax.f32 %v1502, %v1503
      %v1505 = vrot.slane %v1504, 1
      %v1506 = vmax.f32 %v1504, %v1505
      %v1507 = vsel %vm415, %v387, -inf
      %v1508 = vsel %vm415, %v388, -inf
      %v1509 = vmax.f32 %v1507, %v1508
      %v1510 = vrot.slane %v1509, 4
      %v1511 = vmax.f32 %v1509, %v1510
      %v1512 = vrot.slane %v1511, 2
      %v1513 = vmax.f32 %v1511, %v1512
      %v1514 = vrot.slane %v1513, 1
      %v1515 = vmax.f32 %v1513, %v1514
      %v1516 = vsel %vm415, %v389, -inf
      %v1517 = vsel %vm415, %v390, -inf
      %v1518 = vmax.f32 %v1516, %v1517
      %v1519 = vrot.slane %v1518, 4
      %v1520 = vmax.f32 %v1518, %v1519
      %v1521 = vrot.slane %v1520, 2
      %v1522 = vmax.f32 %v1520, %v1521
      %v1523 = vrot.slane %v1522, 1
      %v1524 = vmax.f32 %v1522, %v1523
      %v1525 = vsel %vm415, %v391, -inf
      %v1526 = vsel %vm415, %v392, -inf
      %v1527 = vmax.f32 %v1525, %v1526
      %v1528 = vrot.slane %v1527, 4
      %v1529 = vmax.f32 %v1527, %v1528
      %v1530 = vrot.slane %v1529, 2
      %v1531 = vmax.f32 %v1529, %v1530
      %v1532 = vrot.slane %v1531, 1
      %v1533 = vmax.f32 %v1531, %v1532
      %v1534 = vsel %vm415, %v393, -inf
      %v1535 = vsel %vm415, %v394, -inf
      %v1536 = vmax.f32 %v1534, %v1535
      %v1537 = vrot.slane %v1536, 4
      %v1538 = vmax.f32 %v1536, %v1537
      %v1539 = vrot.slane %v1538, 2
      %v1540 = vmax.f32 %v1538, %v1539
      %v1541 = vrot.slane %v1540, 1
      %v1542 = vmax.f32 %v1540, %v1541
      %v1543 = vsel %vm415, %v395, -inf
      %v1544 = vsel %vm415, %v396, -inf
      %v1545 = vmax.f32 %v1543, %v1544
      %v1546 = vrot.slane %v1545, 4
      %v1547 = vmax.f32 %v1545, %v1546
      %v1548 = vrot.slane %v1547, 2
      %v1549 = vmax.f32 %v1547, %v1548
      %v1550 = vrot.slane %v1549, 1
      %v1551 = vmax.f32 %v1549, %v1550
      %v1552 = vsel %vm415, %v397, -inf
      %v1553 = vsel %vm415, %v398, -inf
      %v1554 = vmax.f32 %v1552, %v1553
      %v1555 = vrot.slane %v1554, 4
      %v1556 = vmax.f32 %v1554, %v1555
      %v1557 = vrot.slane %v1556, 2
      %v1558 = vmax.f32 %v1556, %v1557
      %v1559 = vrot.slane %v1558, 1
      %v1560 = vmax.f32 %v1558, %v1559
      %v1561 = vsel %vm415, %v399, -inf
      %v1562 = vsel %vm415, %v400, -inf
      %v1563 = vmax.f32 %v1561, %v1562
      %v1564 = vrot.slane %v1563, 4
      %v1565 = vmax.f32 %v1563, %v1564
      %v1566 = vrot.slane %v1565, 2
      %v1567 = vmax.f32 %v1565, %v1566
      %v1568 = vrot.slane %v1567, 1
      %v1569 = vmax.f32 %v1567, %v1568
      %v1570 = vsel %vm415, %v401, -inf
      %v1571 = vsel %vm415, %v402, -inf
      %v1572 = vmax.f32 %v1570, %v1571
      %v1573 = vrot.slane %v1572, 4
      %v1574 = vmax.f32 %v1572, %v1573
      %v1575 = vrot.slane %v1574, 2
      %v1576 = vmax.f32 %v1574, %v1575
      %v1577 = vrot.slane %v1576, 1
      %v1578 = vmax.f32 %v1576, %v1577
      %v1579 = vsel %vm415, %v403, -inf
      %v1580 = vsel %vm415, %v404, -inf
      %v1581 = vmax.f32 %v1579, %v1580
      %v1582 = vrot.slane %v1581, 4
      %v1583 = vmax.f32 %v1581, %v1582
      %v1584 = vrot.slane %v1583, 2
      %v1585 = vmax.f32 %v1583, %v1584
      %v1586 = vrot.slane %v1585, 1
      %v1587 = vmax.f32 %v1585, %v1586
      %v1588 = vsel %vm415, %v405, -inf
      %v1589 = vsel %vm415, %v406, -inf
      %v1590 = vmax.f32 %v1588, %v1589
      %v1591 = vrot.slane %v1590, 4
      %v1592 = vmax.f32 %v1590, %v1591
      %v1593 = vrot.slane %v1592, 2
      %v1594 = vmax.f32 %v1592, %v1593
      %v1595 = vrot.slane %v1594, 1
      %v1596 = vmax.f32 %v1594, %v1595
      %v1597 = vsel %vm415, %v407, -inf
      %v1598 = vsel %vm415, %v408, -inf
      %v1599 = vmax.f32 %v1597, %v1598
      %v1600 = vrot.slane %v1599, 4
      %v1601 = vmax.f32 %v1599, %v1600
      %v1602 = vrot.slane %v1601, 2
      %v1603 = vmax.f32 %v1601, %v1602
      %v1604 = vrot.slane %v1603, 1
      %v1605 = vmax.f32 %v1603, %v1604
      %v1606 = vsel %vm415, %v409, -inf
      %v1607 = vsel %vm415, %v410, -inf
      %v1608 = vmax.f32 %v1606, %v1607
      %v1609 = vrot.slane %v1608, 4
      %v1610 = vmax.f32 %v1608, %v1609
      %v1611 = vrot.slane %v1610, 2
      %v1612 = vmax.f32 %v1610, %v1611
      %v1613 = vrot.slane %v1612, 1
      %v1614 = vmax.f32 %v1612, %v1613
      %v1615 = vsel %vm415, %v411, -inf
      %v1616 = vsel %vm415, %v412, -inf
      %v1617 = vmax.f32 %v1615, %v1616
      %v1618 = vrot.slane %v1617, 4
      %v1619 = vmax.f32 %v1617, %v1618
      %v1620 = vrot.slane %v1619, 2
      %v1621 = vmax.f32 %v1619, %v1620
      %v1622 = vrot.slane %v1621, 1
      %v1623 = vmax.f32 %v1621, %v1622
      %v1624 = vsel %vm415, %v413, -inf
      %v1625 = vsel %vm415, %v414, -inf
      %v1626 = vmax.f32 %v1624, %v1625
      %v1627 = vrot.slane %v1626, 4
      %v1628 = vmax.f32 %v1626, %v1627
      %v1629 = vrot.slane %v1628, 2
      %v1630 = vmax.f32 %v1628, %v1629
      %v1631 = vrot.slane %v1630, 1
      %v1632 = vmax.f32 %v1630, %v1631
      %v1633 = vadd.f32 %v416, %v425
      %v1634 = vadd.f32 %v1633, %v434
      %v1635 = vadd.f32 %v1634, %v443
      %v1636 = vadd.f32 %v1635, %v452
      %v1637 = vadd.f32 %v1636, %v461
      %v1638 = vadd.f32 %v1637, %v470
      %v1639 = vadd.f32 %v1638, %v479
      %v1640 = vadd.f32 %v1639, %v488
      %v1641 = vadd.f32 %v1640, %v497
      %v1642 = vadd.f32 %v1641, %v506
      %v1643 = vadd.f32 %v1642, %v515
      %v1644 = vadd.f32 %v1643, %v524
      %v1645 = vadd.f32 %v1644, %v533
      %v1646 = vadd.f32 %v1645, %v542
      %v1647 = vadd.f32 %v1646, %v551
      %v1648 = vadd.f32 %v417, %v426
      %v1649 = vadd.f32 %v1648, %v435
      %v1650 = vadd.f32 %v1649, %v444
      %v1651 = vadd.f32 %v1650, %v453
      %v1652 = vadd.f32 %v1651, %v462
      %v1653 = vadd.f32 %v1652, %v471
      %v1654 = vadd.f32 %v1653, %v480
      %v1655 = vadd.f32 %v1654, %v489
      %v1656 = vadd.f32 %v1655, %v498
      %v1657 = vadd.f32 %v1656, %v507
      %v1658 = vadd.f32 %v1657, %v516
      %v1659 = vadd.f32 %v1658, %v525
      %v1660 = vadd.f32 %v1659, %v534
      %v1661 = vadd.f32 %v1660, %v543
      %v1662 = vadd.f32 %v1661, %v552
      %v1663 = vadd.f32 %v560, %v569
      %v1664 = vadd.f32 %v1663, %v578
      %v1665 = vadd.f32 %v1664, %v587
      %v1666 = vadd.f32 %v1665, %v596
      %v1667 = vadd.f32 %v1666, %v605
      %v1668 = vadd.f32 %v1667, %v614
      %v1669 = vadd.f32 %v1668, %v623
      %v1670 = vadd.f32 %v1669, %v632
      %v1671 = vadd.f32 %v1670, %v641
      %v1672 = vadd.f32 %v1671, %v650
      %v1673 = vadd.f32 %v1672, %v659
      %v1674 = vadd.f32 %v1673, %v668
      %v1675 = vadd.f32 %v1674, %v677
      %v1676 = vadd.f32 %v1675, %v686
      %v1677 = vadd.f32 %v1676, %v695
      %v1678 = vadd.f32 %v561, %v570
      %v1679 = vadd.f32 %v1678, %v579
      %v1680 = vadd.f32 %v1679, %v588
      %v1681 = vadd.f32 %v1680, %v597
      %v1682 = vadd.f32 %v1681, %v606
      %v1683 = vadd.f32 %v1682, %v615
      %v1684 = vadd.f32 %v1683, %v624
      %v1685 = vadd.f32 %v1684, %v633
      %v1686 = vadd.f32 %v1685, %v642
      %v1687 = vadd.f32 %v1686, %v651
      %v1688 = vadd.f32 %v1687, %v660
      %v1689 = vadd.f32 %v1688, %v669
      %v1690 = vadd.f32 %v1689, %v678
      %v1691 = vadd.f32 %v1690, %v687
      %v1692 = vadd.f32 %v1691, %v696
      %v1693 = vadd.f32 %v704, %v713
      %v1694 = vadd.f32 %v1693, %v722
      %v1695 = vadd.f32 %v1694, %v731
      %v1696 = vadd.f32 %v1695, %v740
      %v1697 = vadd.f32 %v1696, %v749
      %v1698 = vadd.f32 %v1697, %v758
      %v1699 = vadd.f32 %v1698, %v767
      %v1700 = vadd.f32 %v1699, %v776
      %v1701 = vadd.f32 %v1700, %v785
      %v1702 = vadd.f32 %v1701, %v794
      %v1703 = vadd.f32 %v1702, %v803
      %v1704 = vadd.f32 %v1703, %v812
      %v1705 = vadd.f32 %v1704, %v821
      %v1706 = vadd.f32 %v1705, %v830
      %v1707 = vadd.f32 %v1706, %v839
      %v1708 = vadd.f32 %v705, %v714
      %v1709 = vadd.f32 %v1708, %v723
      %v1710 = vadd.f32 %v1709, %v732
      %v1711 = vadd.f32 %v1710, %v741
      %v1712 = vadd.f32 %v1711, %v750
      %v1713 = vadd.f32 %v1712, %v759
      %v1714 = vadd.f32 %v1713, %v768
      %v1715 = vadd.f32 %v1714, %v777
      %v1716 = vadd.f32 %v1715, %v786
      %v1717 = vadd.f32 %v1716, %v795
      %v1718 = vadd.f32 %v1717, %v804
      %v1719 = vadd.f32 %v1718, %v813
      %v1720 = vadd.f32 %v1719, %v822
      %v1721 = vadd.f32 %v1720, %v831
      %v1722 = vadd.f32 %v1721, %v840
      %v1723 = vadd.f32 %v848, %v857
      %v1724 = vadd.f32 %v1723, %v866
      %v1725 = vadd.f32 %v1724, %v875
      %v1726 = vadd.f32 %v1725, %v884
      %v1727 = vadd.f32 %v1726, %v893
      %v1728 = vadd.f32 %v1727, %v902
      %v1729 = vadd.f32 %v1728, %v911
      %v1730 = vadd.f32 %v1729, %v920
      %v1731 = vadd.f32 %v1730, %v929
      %v1732 = vadd.f32 %v1731, %v938
      %v1733 = vadd.f32 %v1732, %v947
      %v1734 = vadd.f32 %v1733, %v956
      %v1735 = vadd.f32 %v1734, %v965
      %v1736 = vadd.f32 %v1735, %v974
      %v1737 = vadd.f32 %v1736, %v983
      %v1738 = vadd.f32 %v849, %v858
      %v1739 = vadd.f32 %v1738, %v867
      %v1740 = vadd.f32 %v1739, %v876
      %v1741 = vadd.f32 %v1740, %v885
      %v1742 = vadd.f32 %v1741, %v894
      %v1743 = vadd.f32 %v1742, %v903
      %v1744 = vadd.f32 %v1743, %v912
      %v1745 = vadd.f32 %v1744, %v921
      %v1746 = vadd.f32 %v1745, %v930
      %v1747 = vadd.f32 %v1746, %v939
      %v1748 = vadd.f32 %v1747, %v948
      %v1749 = vadd.f32 %v1748, %v957
      %v1750 = vadd.f32 %v1749, %v966
      %v1751 = vadd.f32 %v1750, %v975
      %v1752 = vadd.f32 %v1751, %v984
      %v1753 = vmul.f32 %v1647, %v992
      %v1754 = vmul.f32 %v1662, %v992
      %v1755 = vmul.f32 %v1677, %v992
      %v1756 = vmul.f32 %v1692, %v992
      %v1757 = vmul.f32 %v1707, %v992
      %v1758 = vmul.f32 %v1722, %v992
      %v1759 = vmul.f32 %v1737, %v992
      %v1760 = vmul.f32 %v1752, %v992
      %v1761 = vmax.f32 %v1057, %v1066
      %v1762 = vmax.f32 %v1761, %v1075
      %v1763 = vmax.f32 %v1762, %v1084
      %v1764 = vmax.f32 %v1763, %v1093
      %v1765 = vmax.f32 %v1764, %v1102
      %v1766 = vmax.f32 %v1765, %v1111
      %v1767 = vmax.f32 %v1766, %v1120
      %v1768 = vmax.f32 %v1767, %v1129
      %v1769 = vmax.f32 %v1768, %v1138
      %v1770 = vmax.f32 %v1769, %v1147
      %v1771 = vmax.f32 %v1770, %v1156
      %v1772 = vmax.f32 %v1771, %v1165
      %v1773 = vmax.f32 %v1772, %v1174
      %v1774 = vmax.f32 %v1773, %v1183
      %v1775 = vmax.f32 %v1774, %v1192
      %v1776 = vmax.f32 %v1058, %v1067
      %v1777 = vmax.f32 %v1776, %v1076
      %v1778 = vmax.f32 %v1777, %v1085
      %v1779 = vmax.f32 %v1778, %v1094
      %v1780 = vmax.f32 %v1779, %v1103
      %v1781 = vmax.f32 %v1780, %v1112
      %v1782 = vmax.f32 %v1781, %v1121
      %v1783 = vmax.f32 %v1782, %v1130
      %v1784 = vmax.f32 %v1783, %v1139
      %v1785 = vmax.f32 %v1784, %v1148
      %v1786 = vmax.f32 %v1785, %v1157
      %v1787 = vmax.f32 %v1786, %v1166
      %v1788 = vmax.f32 %v1787, %v1175
      %v1789 = vmax.f32 %v1788, %v1184
      %v1790 = vmax.f32 %v1789, %v1193
      %v1791 = vmax.f32 %v1201, %v1210
      %v1792 = vmax.f32 %v1791, %v1219
      %v1793 = vmax.f32 %v1792, %v1228
      %v1794 = vmax.f32 %v1793, %v1237
      %v1795 = vmax.f32 %v1794, %v1246
      %v1796 = vmax.f32 %v1795, %v1255
      %v1797 = vmax.f32 %v1796, %v1264
      %v1798 = vmax.f32 %v1797, %v1273
      %v1799 = vmax.f32 %v1798, %v1282
      %v1800 = vmax.f32 %v1799, %v1291
      %v1801 = vmax.f32 %v1800, %v1300
      %v1802 = vmax.f32 %v1801, %v1309
      %v1803 = vmax.f32 %v1802, %v1318
      %v1804 = vmax.f32 %v1803, %v1327
      %v1805 = vmax.f32 %v1804, %v1336
      %v1806 = vmax.f32 %v1202, %v1211
      %v1807 = vmax.f32 %v1806, %v1220
      %v1808 = vmax.f32 %v1807, %v1229
      %v1809 = vmax.f32 %v1808, %v1238
      %v1810 = vmax.f32 %v1809, %v1247
      %v1811 = vmax.f32 %v1810, %v1256
      %v1812 = vmax.f32 %v1811, %v1265
      %v1813 = vmax.f32 %v1812, %v1274
      %v1814 = vmax.f32 %v1813, %v1283
      %v1815 = vmax.f32 %v1814, %v1292
      %v1816 = vmax.f32 %v1815, %v1301
      %v1817 = vmax.f32 %v1816, %v1310
      %v1818 = vmax.f32 %v1817, %v1319
      %v1819 = vmax.f32 %v1818, %v1328
      %v1820 = vmax.f32 %v1819, %v1337
      %v1821 = vmax.f32 %v1345, %v1354
      %v1822 = vmax.f32 %v1821, %v1363
      %v1823 = vmax.f32 %v1822, %v1372
      %v1824 = vmax.f32 %v1823, %v1381
      %v1825 = vmax.f32 %v1824, %v1390
      %v1826 = vmax.f32 %v1825, %v1399
      %v1827 = vmax.f32 %v1826, %v1408
      %v1828 = vmax.f32 %v1827, %v1417
      %v1829 = vmax.f32 %v1828, %v1426
      %v1830 = vmax.f32 %v1829, %v1435
      %v1831 = vmax.f32 %v1830, %v1444
      %v1832 = vmax.f32 %v1831, %v1453
      %v1833 = vmax.f32 %v1832, %v1462
      %v1834 = vmax.f32 %v1833, %v1471
      %v1835 = vmax.f32 %v1834, %v1480
      %v1836 = vmax.f32 %v1346, %v1355
      %v1837 = vmax.f32 %v1836, %v1364
      %v1838 = vmax.f32 %v1837, %v1373
      %v1839 = vmax.f32 %v1838, %v1382
      %v1840 = vmax.f32 %v1839, %v1391
      %v1841 = vmax.f32 %v1840, %v1400
      %v1842 = vmax.f32 %v1841, %v1409
      %v1843 = vmax.f32 %v1842, %v1418
      %v1844 = vmax.f32 %v1843, %v1427
      %v1845 = vmax.f32 %v1844, %v1436
      %v1846 = vmax.f32 %v1845, %v1445
      %v1847 = vmax.f32 %v1846, %v1454
      %v1848 = vmax.f32 %v1847, %v1463
      %v1849 = vmax.f32 %v1848, %v1472
      %v1850 = vmax.f32 %v1849, %v1481
      %v1851 = vmax.f32 %v1489, %v1498
      %v1852 = vmax.f32 %v1851, %v1507
      %v1853 = vmax.f32 %v1852, %v1516
      %v1854 = vmax.f32 %v1853, %v1525
      %v1855 = vmax.f32 %v1854, %v1534
      %v1856 = vmax.f32 %v1855, %v1543
      %v1857 = vmax.f32 %v1856, %v1552
      %v1858 = vmax.f32 %v1857, %v1561
      %v1859 = vmax.f32 %v1858, %v1570
      %v1860 = vmax.f32 %v1859, %v1579
      %v1861 = vmax.f32 %v1860, %v1588
      %v1862 = vmax.f32 %v1861, %v1597
      %v1863 = vmax.f32 %v1862, %v1606
      %v1864 = vmax.f32 %v1863, %v1615
      %v1865 = vmax.f32 %v1864, %v1624
      %v1866 = vmax.f32 %v1490, %v1499
      %v1867 = vmax.f32 %v1866, %v1508
      %v1868 = vmax.f32 %v1867, %v1517
      %v1869 = vmax.f32 %v1868, %v1526
      %v1870 = vmax.f32 %v1869, %v1535
      %v1871 = vmax.f32 %v1870, %v1544
      %v1872 = vmax.f32 %v1871, %v1553
      %v1873 = vmax.f32 %v1872, %v1562
      %v1874 = vmax.f32 %v1873, %v1571
      %v1875 = vmax.f32 %v1874, %v1580
      %v1876 = vmax.f32 %v1875, %v1589
      %v1877 = vmax.f32 %v1876, %v1598
      %v1878 = vmax.f32 %v1877, %v1607
      %v1879 = vmax.f32 %v1878, %v1616
      %v1880 = vmax.f32 %v1879, %v1625
      %vm1945 = vcmask 1041409
      %v1946 = vsel %vm1945, %v994, %v993
      %vm1947 = vcmask 1042434
      %v1948 = vsel %vm1947, %v995, %v1946
      %vm1949 = vcmask 1043459
      %v1950 = vsel %vm1949, %v996, %v1948
      %vm1951 = vcmask 1044484
      %v1952 = vsel %vm1951, %v997, %v1950
      %vm1953 = vcmask 1045509
      %v1954 = vsel %vm1953, %v998, %v1952
      %vm1955 = vcmask 1046534
      %v1956 = vsel %vm1955, %v999, %v1954
      %vm1957 = vcmask 1047559
      %v1958 = vsel %vm1957, %v1000, %v1956
      %v1959 = vsel %vm1945, %v1002, %v1001
      %v1960 = vsel %vm1947, %v1003, %v1959
      %v1961 = vsel %vm1949, %v1004, %v1960
      %v1962 = vsel %vm1951, %v1005, %v1961
      %v1963 = vsel %vm1953, %v1006, %v1962
      %v1964 = vsel %vm1955, %v1007, %v1963
      %v1965 = vsel %vm1957, %v1008, %v1964
      %v1966 = vsel %vm1945, %v1010, %v1009
      %v1967 = vsel %vm1947, %v1011, %v1966
      %v1968 = vsel %vm1949, %v1012, %v1967
      %v1969 = vsel %vm1951, %v1013, %v1968
      %v1970 = vsel %vm1953, %v1014, %v1969
      %v1971 = vsel %vm1955, %v1015, %v1970
      %v1972 = vsel %vm1957, %v1016, %v1971
      %v1973 = vsel %vm1945, %v1018, %v1017
      %v1974 = vsel %vm1947, %v1019, %v1973
      %v1975 = vsel %vm1949, %v1020, %v1974
      %v1976 = vsel %vm1951, %v1021, %v1975
      %v1977 = vsel %vm1953, %v1022, %v1976
      %v1978 = vsel %vm1955, %v1023, %v1977
      %v1979 = vsel %vm1957, %v1024, %v1978
      %v1980 = vsel %vm1945, %v1026, %v1025
      %v1981 = vsel %vm1947, %v1027, %v1980
      %v1982 = vsel %vm1949, %v1028, %v1981
      %v1983 = vsel %vm1951, %v1029, %v1982
      %v1984 = vsel %vm1953, %v1030, %v1983
      %v1985 = vsel %vm1955, %v1031, %v1984
      %v1986 = vsel %vm1957, %v1032, %v1985
      %v1987 = vsel %vm1945, %v1034, %v1033
      %v1988 = vsel %vm1947, %v1035, %v1987
      %v1989 = vsel %vm1949, %v1036, %v1988
      %v1990 = vsel %vm1951, %v1037, %v1989
      %v1991 = vsel %vm1953, %v1038, %v1990
      %v1992 = vsel %vm1955, %v1039, %v1991
      %v1993 = vsel %vm1957, %v1040, %v1992
      %v1994 = vsel %vm1945, %v1042, %v1041
      %v1995 = vsel %vm1947, %v1043, %v1994
      %v1996 = vsel %vm1949, %v1044, %v1995
      %v1997 = vsel %vm1951, %v1045, %v1996
      %v1998 = vsel %vm1953, %v1046, %v1997
      %v1999 = vsel %vm1955, %v1047, %v1998
      %v2000 = vsel %vm1957, %v1048, %v1999
      %v2001 = vsel %vm1945, %v1050, %v1049
      %v2002 = vsel %vm1947, %v1051, %v2001
      %v2003 = vsel %vm1949, %v1052, %v2002
      %v2004 = vsel %vm1951, %v1053, %v2003
      %v2005 = vsel %vm1953, %v1054, %v2004
      %v2006 = vsel %vm1955, %v1055, %v2005
      %v2007 = vsel %vm1957, %v1056, %v2006
      %v2072 = vsel %vm1945, %v1074, %v1065
      %v2073 = vsel %vm1947, %v1083, %v2072
      %v2074 = vsel %vm1949, %v1092, %v2073
      %v2075 = vsel %vm1951, %v1101, %v2074
      %v2076 = vsel %vm1953, %v1110, %v2075
      %v2077 = vsel %vm1955, %v1119, %v2076
      %v2078 = vsel %vm1957, %v1128, %v2077
      %v2079 = vsel %vm1945, %v1146, %v1137
      %v2080 = vsel %vm1947, %v1155, %v2079
      %v2081 = vsel %vm1949, %v1164, %v2080
      %v2082 = vsel %vm1951, %v1173, %v2081
      %v2083 = vsel %vm1953, %v1182, %v2082
      %v2084 = vsel %vm1955, %v1191, %v2083
      %v2085 = vsel %vm1957, %v1200, %v2084
      %v2086 = vsel %vm1945, %v1218, %v1209
      %v2087 = vsel %vm1947, %v1227, %v2086
      %v2088 = vsel %vm1949, %v1236, %v2087
      %v2089 = vsel %vm1951, %v1245, %v2088
      %v2090 = vsel %vm1953, %v1254, %v2089
      %v2091 = vsel %vm1955, %v1263, %v2090
      %v2092 = vsel %vm1957, %v1272, %v2091
      %v2093 = vsel %vm1945, %v1290, %v1281
      %v2094 = vsel %vm1947, %v1299, %v2093
      %v2095 = vsel %vm1949, %v1308, %v2094
      %v2096 = vsel %vm1951, %v1317, %v2095
      %v2097 = vsel %vm1953, %v1326, %v2096
      %v2098 = vsel %vm1955, %v1335, %v2097
      %v2099 = vsel %vm1957, %v1344, %v2098
      %v2100 = vsel %vm1945, %v1362, %v1353
      %v2101 = vsel %vm1947, %v1371, %v2100
      %v2102 = vsel %vm1949, %v1380, %v2101
      %v2103 = vsel %vm1951, %v1389, %v2102
      %v2104 = vsel %vm1953, %v1398, %v2103
      %v2105 = vsel %vm1955, %v1407, %v2104
      %v2106 = vsel %vm1957, %v1416, %v2105
      %v2107 = vsel %vm1945, %v1434, %v1425
      %v2108 = vsel %vm1947, %v1443, %v2107
      %v2109 = vsel %vm1949, %v1452, %v2108
      %v2110 = vsel %vm1951, %v1461, %v2109
      %v2111 = vsel %vm1953, %v1470, %v2110
      %v2112 = vsel %vm1955, %v1479, %v2111
      %v2113 = vsel %vm1957, %v1488, %v2112
      %v2114 = vsel %vm1945, %v1506, %v1497
      %v2115 = vsel %vm1947, %v1515, %v2114
      %v2116 = vsel %vm1949, %v1524, %v2115
      %v2117 = vsel %vm1951, %v1533, %v2116
      %v2118 = vsel %vm1953, %v1542, %v2117
      %v2119 = vsel %vm1955, %v1551, %v2118
      %v2120 = vsel %vm1957, %v1560, %v2119
      %v2121 = vsel %vm1945, %v1578, %v1569
      %v2122 = vsel %vm1947, %v1587, %v2121
      %v2123 = vsel %vm1949, %v1596, %v2122
      %v2124 = vsel %vm1951, %v1605, %v2123
      %v2125 = vsel %vm1953, %v1614, %v2124
      %v2126 = vsel %vm1955, %v1623, %v2125
      %v2127 = vsel %vm1957, %v1632, %v2126
      %v2128 = vld [vmem:[%s1] sm:$0xff]
      %v2129 = vld [vmem:[%s1 + $0x8] sm:$0xff]
      %v2130 = vld [vmem:[%s2] sm:$0x1]
      %v2132 = vlaneseq
      %v2133 = vshrl.u32 %v2132, 7
      %v2134 = vsub.s32 0, %v2133
      %v2135 = vrot.slane %v2130, %v2134
      %v2137 = vsel %vm415, %v1958, 0
      %v2139 = vsel %vm415, %v1965, 0
      %v2141 = vsel %vm415, %v1972, 0
      %v2143 = vsel %vm415, %v1979, 0
      %v2145 = vsel %vm415, %v1986, 0
      %v2147 = vsel %vm415, %v1993, 0
      %v2149 = vsel %vm415, %v2000, 0
      %v2151 = vsel %vm415, %v2007, 0
      %v2153 = vsel %vm415, %v2078, 0
      %v2155 = vsel %vm415, %v2085, 0
      %v2157 = vsel %vm415, %v2092, 0
      %v2159 = vsel %vm415, %v2099, 0
      %v2161 = vsel %vm415, %v2106, 0
      %v2163 = vsel %vm415, %v2113, 0
      %v2165 = vsel %vm415, %v2120, 0
      %v2167 = vsel %vm415, %v2127, 0
      %v2170 = vsel %vm415, %v1753, 0
      %v2173 = vsel %vm415, %v1754, 0
      %v2176 = vsel %vm415, %v1755, 0
      %v2179 = vsel %vm415, %v1756, 0
      %v2182 = vsel %vm415, %v1757, 0
      %v2185 = vsel %vm415, %v1758, 0
      %v2188 = vsel %vm415, %v1759, 0
      %v2191 = vsel %vm415, %v1760, 0
      %v2194 = vsel %vm415, %v1775, 0
      %v2197 = vsel %vm415, %v1790, 0
      %v2200 = vsel %vm415, %v1805, 0
      %v2203 = vsel %vm415, %v1820, 0
      %v2206 = vsel %vm415, %v1835, 0
      %v2209 = vsel %vm415, %v1850, 0
      %v2212 = vsel %vm415, %v1865, 0
      %v2215 = vsel %vm415, %v1880, 0
      %2217 = vmatprep.subr.mxu0 0.0
      %2218 = vmatpush1.msra.mxu0 %v2128
      %2219 = vmatprep.subr.mxu0 0.0
      %2220 = vmatpush1.msra.mxu0 %v2129
      %2221 = vmatprep.subr.mxu0 0.0
      %2222 = vmatpush1.msra.mxu0 0.0
      %2223 = vmatprep.subr.mxu0 0.0
      %2224 = vmatpush1.msra.mxu0 0.0
      %2225 = vmatprep.subr.mxu0 0.0
      %2226 = vmatpush1.msra.mxu0 0.0
      %2227 = vmatprep.subr.mxu0 0.0
      %2228 = vmatpush1.msra.mxu0 0.0
      %2229 = vmatprep.subr.mxu0 0.0
      %2230 = vmatpush1.msra.mxu0 0.0
      %2231 = vmatprep.subr.mxu0 0.0
      %2232 = vmatpush1.msra.mxu0 0.0
      %2233 = vmatprep.subr.mxu0 0.0
      %2234 = vmatpush1.msra.mxu0 0.0
      %2235 = vmatprep.subr.mxu0 0.0
      %2236 = vmatpush1.msra.mxu0 0.0
      %2237 = vmatprep.subr.mxu0 0.0
      %2238 = vmatpush1.msra.mxu0 0.0
      %2239 = vmatprep.subr.mxu0 0.0
      %2240 = vmatpush1.msra.mxu0 0.0
      %2241 = vmatprep.subr.mxu0 0.0
      %2242 = vmatpush1.msra.mxu0 0.0
      %2243 = vmatprep.subr.mxu0 0.0
      %2244 = vmatpush1.msra.mxu0 0.0
      %2245 = vmatprep.subr.mxu0 0.0
      %2246 = vmatpush1.msra.mxu0 0.0
      %2247 = vmatprep.subr.mxu0 0.0
      %2248 = vmatpush1.msra.mxu0 0.0
      %2249 = vmatprep.subr.mxu0 0.0
      %2250 = vmatpush1.msra.mxu0 0.0
      %2251 = vmatprep.subr.mxu0 0.0
      %2252 = vmatpush1.msra.mxu0 0.0
      %2253 = vmatprep.subr.mxu0 0.0
      %2254 = vmatpush1.msra.mxu0 0.0
      %2255 = vmatprep.subr.mxu0 0.0
      %2256 = vmatpush1.msra.mxu0 0.0
      %2257 = vmatprep.subr.mxu0 0.0
      %2258 = vmatpush1.msra.mxu0 0.0
      %2259 = vmatprep.subr.mxu0 0.0
      %2260 = vmatpush1.msra.mxu0 0.0
      %2261 = vmatprep.subr.mxu0 0.0
      %2262 = vmatpush1.msra.mxu0 0.0
      %2263 = vmatprep.subr.mxu0 0.0
      %2264 = vmatpush1.msra.mxu0 0.0
      %2265 = vmatprep.subr.mxu0 0.0
      %2266 = vmatpush1.msra.mxu0 0.0
      %2267 = vmatprep.subr.mxu0 0.0
      %2268 = vmatpush1.msra.mxu0 0.0
      %2269 = vmatprep.subr.mxu0 0.0
      %2270 = vmatpush1.msra.mxu0 0.0
      %2271 = vmatprep.subr.mxu0 0.0
      %2272 = vmatpush1.msra.mxu0 0.0
      %2273 = vmatprep.subr.mxu0 0.0
      %2274 = vmatpush1.msra.mxu0 0.0
      %2275 = vmatprep.subr.mxu0 0.0
      %2276 = vmatpush1.msra.mxu0 0.0
      %2277 = vmatprep.subr.mxu0 0.0
      %2278 = vmatpush1.msra.mxu0 0.0
      %2279 = vmatprep.subr.mxu0 0.0
      %2280 = vmatpush1.msra.mxu0 0.0
      %2281 = vmatprep.mubr.f32.mxu0 0.0
      %2282 = vmatmul.mubr.f32.gmra.mrb[0].mxu0 %v2137
      %v2283 = vpop.f32.mrb[0].mxu0
      %v2284 = vadd.f32 %v2135, %v2283
      %v2285 = vpop.f32.mrb[0].mxu0
      %2286 = vmatprep.mubr.f32.mxu0 0.0
      %2287 = vmatmul.mubr.f32.gmra.mrb[0].mxu0 %v2139
      %v2288 = vpop.f32.mrb[0].mxu0
      %v2289 = vadd.f32 %v2135, %v2288
      %v2290 = vpop.f32.mrb[0].mxu0
      %2291 = vmatprep.mubr.f32.mxu0 0.0
      %2292 = vmatmul.mubr.f32.gmra.mrb[0].mxu0 %v2141
      %v2293 = vpop.f32.mrb[0].mxu0
      %v2294 = vadd.f32 %v2135, %v2293
      %v2295 = vpop.f32.mrb[0].mxu0
      %2296 = vmatprep.mubr.f32.mxu0 0.0
      %2297 = vmatmul.mubr.f32.gmra.mrb[0].mxu0 %v2143
      %v2298 = vpop.f32.mrb[0].mxu0
      %v2299 = vadd.f32 %v2135, %v2298
      %v2300 = vpop.f32.mrb[0].mxu0
      %2301 = vmatprep.mubr.f32.mxu0 0.0
      %2302 = vmatmul.mubr.f32.gmra.mrb[0].mxu0 %v2145
      %v2303 = vpop.f32.mrb[0].mxu0
      %v2304 = vadd.f32 %v2135, %v2303
      %v2305 = vpop.f32.mrb[0].mxu0
      %2306 = vmatprep.mubr.f32.mxu0 0.0
      %2307 = vmatmul.mubr.f32.gmra.mrb[0].mxu0 %v2147
      %v2308 = vpop.f32.mrb[0].mxu0
      %v2309 = vadd.f32 %v2135, %v2308
      %v2310 = vpop.f32.mrb[0].mxu0
      %2311 = vmatprep.mubr.f32.mxu0 0.0
      %2312 = vmatmul.mubr.f32.gmra.mrb[0].mxu0 %v2149
      %v2313 = vpop.f32.mrb[0].mxu0
      %v2314 = vadd.f32 %v2135, %v2313
      %v2315 = vpop.f32.mrb[0].mxu0
      %2316 = vmatprep.mubr.f32.mxu0 0.0
      %2317 = vmatmul.mubr.f32.gmra.mrb[0].mxu0 %v2151
      %v2318 = vpop.f32.mrb[0].mxu0
      %v2319 = vadd.f32 %v2135, %v2318
      %v2320 = vpop.f32.mrb[0].mxu0
      %2321 = vmatprep.mubr.f32.mxu0 0.0
      %2322 = vmatmul.mubr.f32.gmra.mrb[0].mxu0 %v2153
      %v2323 = vpop.f32.mrb[0].mxu0
      %v2324 = vadd.f32 %v2135, %v2323
      %v2325 = vpop.f32.mrb[0].mxu0
      %2326 = vmatprep.mubr.f32.mxu0 0.0
      %2327 = vmatmul.mubr.f32.gmra.mrb[0].mxu0 %v2155
      %v2328 = vpop.f32.mrb[0].mxu0
      %v2329 = vadd.f32 %v2135, %v2328
      %v2330 = vpop.f32.mrb[0].mxu0
      %2331 = vmatprep.mubr.f32.mxu0 0.0
      %2332 = vmatmul.mubr.f32.gmra.mrb[0].mxu0 %v2157
      %v2333 = vpop.f32.mrb[0].mxu0
      %v2334 = vadd.f32 %v2135, %v2333
      %v2335 = vpop.f32.mrb[0].mxu0
      %2336 = vmatprep.mubr.f32.mxu0 0.0
      %2337 = vmatmul.mubr.f32.gmra.mrb[0].mxu0 %v2159
      %v2338 = vpop.f32.mrb[0].mxu0
      %v2339 = vadd.f32 %v2135, %v2338
      %v2340 = vpop.f32.mrb[0].mxu0
      %2341 = vmatprep.mubr.f32.mxu0 0.0
      %2342 = vmatmul.mubr.f32.gmra.mrb[0].mxu0 %v2161
      %v2343 = vpop.f32.mrb[0].mxu0
      %v2344 = vadd.f32 %v2135, %v2343
      %v2345 = vpop.f32.mrb[0].mxu0
      %2346 = vmatprep.mubr.f32.mxu0 0.0
      %2347 = vmatmul.mubr.f32.gmra.mrb[0].mxu0 %v2163
      %v2348 = vpop.f32.mrb[0].mxu0
      %v2349 = vadd.f32 %v2135, %v2348
      %v2350 = vpop.f32.mrb[0].mxu0
      %2351 = vmatprep.mubr.f32.mxu0 0.0
      %2352 = vmatmul.mubr.f32.gmra.mrb[0].mxu0 %v2165
      %v2353 = vpop.f32.mrb[0].mxu0
      %v2354 = vadd.f32 %v2135, %v2353
      %v2355 = vpop.f32.mrb[0].mxu0
      %2356 = vmatprep.mubr.f32.mxu0 0.0
      %2357 = vmatmul.mubr.f32.gmra.mrb[0].mxu0 %v2167
      %v2358 = vpop.f32.mrb[0].mxu0
      %v2359 = vadd.f32 %v2135, %v2358
      %v2360 = vpop.f32.mrb[0].mxu0
      %2361 = vmatprep.mubr.f32.mxu0 0.0
      %2362 = vmatmul.mubr.f32.gmra.mrb[0].mxu0 %v2170
      %v2363 = vpop.f32.mrb[0].mxu0
      %v2364 = vadd.f32 %v2135, %v2363
      %v2365 = vpop.f32.mrb[0].mxu0
      %2366 = vmatprep.mubr.f32.mxu0 0.0
      %2367 = vmatmul.mubr.f32.gmra.mrb[0].mxu0 %v2173
      %v2368 = vpop.f32.mrb[0].mxu0
      %v2369 = vadd.f32 %v2135, %v2368
      %v2370 = vpop.f32.mrb[0].mxu0
      %2371 = vmatprep.mubr.f32.mxu0 0.0
      %2372 = vmatmul.mubr.f32.gmra.mrb[0].mxu0 %v2176
      %v2373 = vpop.f32.mrb[0].mxu0
      %v2374 = vadd.f32 %v2135, %v2373
      %v2375 = vpop.f32.mrb[0].mxu0
      %2376 = vmatprep.mubr.f32.mxu0 0.0
      %2377 = vmatmul.mubr.f32.gmra.mrb[0].mxu0 %v2179
      %v2378 = vpop.f32.mrb[0].mxu0
      %v2379 = vadd.f32 %v2135, %v2378
      %v2380 = vpop.f32.mrb[0].mxu0
      %2381 = vmatprep.mubr.f32.mxu0 0.0
      %2382 = vmatmul.mubr.f32.gmra.mrb[0].mxu0 %v2182
      %v2383 = vpop.f32.mrb[0].mxu0
      %v2384 = vadd.f32 %v2135, %v2383
      %v2385 = vpop.f32.mrb[0].mxu0
      %2386 = vmatprep.mubr.f32.mxu0 0.0
      %2387 = vmatmul.mubr.f32.gmra.mrb[0].mxu0 %v2185
      %v2388 = vpop.f32.mrb[0].mxu0
      %v2389 = vadd.f32 %v2135, %v2388
      %v2390 = vpop.f32.mrb[0].mxu0
      %2391 = vmatprep.mubr.f32.mxu0 0.0
      %2392 = vmatmul.mubr.f32.gmra.mrb[0].mxu0 %v2188
      %v2393 = vpop.f32.mrb[0].mxu0
      %v2394 = vadd.f32 %v2135, %v2393
      %v2395 = vpop.f32.mrb[0].mxu0
      %2396 = vmatprep.mubr.f32.mxu0 0.0
      %2397 = vmatmul.mubr.f32.gmra.mrb[0].mxu0 %v2191
      %v2398 = vpop.f32.mrb[0].mxu0
      %v2399 = vadd.f32 %v2135, %v2398
      %v2400 = vpop.f32.mrb[0].mxu0
      %2401 = vmatprep.mubr.f32.mxu0 0.0
      %2402 = vmatmul.mubr.f32.gmra.mrb[0].mxu0 %v2194
      %v2403 = vpop.f32.mrb[0].mxu0
      %v2404 = vadd.f32 %v2135, %v2403
      %v2405 = vpop.f32.mrb[0].mxu0
      %2406 = vmatprep.mubr.f32.mxu0 0.0
      %2407 = vmatmul.mubr.f32.gmra.mrb[0].mxu0 %v2197
      %v2408 = vpop.f32.mrb[0].mxu0
      %v2409 = vadd.f32 %v2135, %v2408
      %v2410 = vpop.f32.mrb[0].mxu0
      %2411 = vmatprep.mubr.f32.mxu0 0.0
      %2412 = vmatmul.mubr.f32.gmra.mrb[0].mxu0 %v2200
      %v2413 = vpop.f32.mrb[0].mxu0
      %v2414 = vadd.f32 %v2135, %v2413
      %v2415 = vpop.f32.mrb[0].mxu0
      %2416 = vmatprep.mubr.f32.mxu0 0.0
      %2417 = vmatmul.mubr.f32.gmra.mrb[0].mxu0 %v2203
      %v2418 = vpop.f32.mrb[0].mxu0
      %v2419 = vadd.f32 %v2135, %v2418
      %v2420 = vpop.f32.mrb[0].mxu0
      %2421 = vmatprep.mubr.f32.mxu0 0.0
      %2422 = vmatmul.mubr.f32.gmra.mrb[0].mxu0 %v2206
      %v2423 = vpop.f32.mrb[0].mxu0
      %v2424 = vadd.f32 %v2135, %v2423
      %v2425 = vpop.f32.mrb[0].mxu0
      %2426 = vmatprep.mubr.f32.mxu0 0.0
      %2427 = vmatmul.mubr.f32.gmra.mrb[0].mxu0 %v2209
      %v2428 = vpop.f32.mrb[0].mxu0
      %v2429 = vadd.f32 %v2135, %v2428
      %v2430 = vpop.f32.mrb[0].mxu0
      %2431 = vmatprep.mubr.f32.mxu0 0.0
      %2432 = vmatmul.mubr.f32.gmra.mrb[0].mxu0 %v2212
      %v2433 = vpop.f32.mrb[0].mxu0
      %v2434 = vadd.f32 %v2135, %v2433
      %v2435 = vpop.f32.mrb[0].mxu0
      %2436 = vmatprep.mubr.f32.mxu0 0.0
      %2437 = vmatmul.mubr.f32.gmra.mrb[0].mxu0 %v2215
      %v2438 = vpop.f32.mrb[0].mxu0
      %v2439 = vadd.f32 %v2135, %v2438
      %v2440 = vpop.f32.mrb[0].mxu0
      %2441 = vdwg.mxu0
      %v2442 = vld [vmem:[%s3] sm:$0x1]
      %v2444 = vlaneseq
      %v2445 = vshrl.u32 %v2444, 7
      %v2446 = vsub.s32 0, %v2445
      %v2447 = vrot.slane %v2442, %v2446
      %v2449 = vmul.f32 %v2284, %v2447
      %v2450 = vmul.f32 %v2289, %v2447
      %v2451 = vmul.f32 %v2294, %v2447
      %v2452 = vmul.f32 %v2299, %v2447
      %v2453 = vmul.f32 %v2304, %v2447
      %v2454 = vmul.f32 %v2309, %v2447
      %v2455 = vmul.f32 %v2314, %v2447
      %v2456 = vmul.f32 %v2319, %v2447
      %v2457 = vmul.f32 %v2324, %v2447
      %v2458 = vmul.f32 %v2329, %v2447
      %v2459 = vmul.f32 %v2334, %v2447
      %v2460 = vmul.f32 %v2339, %v2447
      %v2461 = vmul.f32 %v2344, %v2447
      %v2462 = vmul.f32 %v2349, %v2447
      %v2463 = vmul.f32 %v2354, %v2447
      %v2464 = vmul.f32 %v2359, %v2447
      %v2465 = vmul.f32 %v2364, %v2447
      %v2466 = vmul.f32 %v2369, %v2447
      %v2467 = vmul.f32 %v2374, %v2447
      %v2468 = vmul.f32 %v2379, %v2447
      %v2469 = vmul.f32 %v2384, %v2447
      %v2470 = vmul.f32 %v2389, %v2447
      %v2471 = vmul.f32 %v2394, %v2447
      %v2472 = vmul.f32 %v2399, %v2447
      %v2473 = vmul.f32 %v2404, %v2447
      %v2474 = vmul.f32 %v2409, %v2447
      %v2475 = vmul.f32 %v2414, %v2447
      %v2476 = vmul.f32 %v2419, %v2447
      %v2477 = vmul.f32 %v2424, %v2447
      %v2478 = vmul.f32 %v2429, %v2447
      %v2479 = vmul.f32 %v2434, %v2447
      %v2480 = vmul.f32 %v2439, %v2447
      %v2481 = vld [vmem:[%s4] sm:$0x1]
      %v2483 = vlaneseq
      %v2484 = vshrl.u32 %v2483, 7
      %v2485 = vsub.s32 0, %v2484
      %v2486 = vrot.slane %v2481, %v2485
      %v2488 = vadd.f32 %v2449, %v2486
      %v2489 = vadd.f32 %v2450, %v2486
      %v2490 = vadd.f32 %v2451, %v2486
      %v2491 = vadd.f32 %v2452, %v2486
      %v2492 = vadd.f32 %v2453, %v2486
      %v2493 = vadd.f32 %v2454, %v2486
      %v2494 = vadd.f32 %v2455, %v2486
      %v2495 = vadd.f32 %v2456, %v2486
      %v2496 = vadd.f32 %v2457, %v2486
      %v2497 = vadd.f32 %v2458, %v2486
      %v2498 = vadd.f32 %v2459, %v2486
      %v2499 = vadd.f32 %v2460, %v2486
      %v2500 = vadd.f32 %v2461, %v2486
      %v2501 = vadd.f32 %v2462, %v2486
      %v2502 = vadd.f32 %v2463, %v2486
      %v2503 = vadd.f32 %v2464, %v2486
      %v2504 = vadd.f32 %v2465, %v2486
      %v2505 = vadd.f32 %v2466, %v2486
      %v2506 = vadd.f32 %v2467, %v2486
      %v2507 = vadd.f32 %v2468, %v2486
      %v2508 = vadd.f32 %v2469, %v2486
      %v2509 = vadd.f32 %v2470, %v2486
      %v2510 = vadd.f32 %v2471, %v2486
      %v2511 = vadd.f32 %v2472, %v2486
      %v2512 = vadd.f32 %v2473, %v2486
      %v2513 = vadd.f32 %v2474, %v2486
      %v2514 = vadd.f32 %v2475, %v2486
      %v2515 = vadd.f32 %v2476, %v2486
      %v2516 = vadd.f32 %v2477, %v2486
      %v2517 = vadd.f32 %v2478, %v2486
      %v2518 = vadd.f32 %v2479, %v2486
      %v2519 = vadd.f32 %v2480, %v2486
      %v2520 = vmax.f32 %v2488, 0.0
      %v2521 = vmax.f32 %v2489, 0.0
      %v2522 = vmax.f32 %v2490, 0.0
      %v2523 = vmax.f32 %v2491, 0.0
      %v2524 = vmax.f32 %v2492, 0.0
      %v2525 = vmax.f32 %v2493, 0.0
      %v2526 = vmax.f32 %v2494, 0.0
      %v2527 = vmax.f32 %v2495, 0.0
      %v2528 = vmax.f32 %v2496, 0.0
      %v2529 = vmax.f32 %v2497, 0.0
      %v2530 = vmax.f32 %v2498, 0.0
      %v2531 = vmax.f32 %v2499, 0.0
      %v2532 = vmax.f32 %v2500, 0.0
      %v2533 = vmax.f32 %v2501, 0.0
      %v2534 = vmax.f32 %v2502, 0.0
      %v2535 = vmax.f32 %v2503, 0.0
      %v2536 = vmax.f32 %v2504, 0.0
      %v2537 = vmax.f32 %v2505, 0.0
      %v2538 = vmax.f32 %v2506, 0.0
      %v2539 = vmax.f32 %v2507, 0.0
      %v2540 = vmax.f32 %v2508, 0.0
      %v2541 = vmax.f32 %v2509, 0.0
      %v2542 = vmax.f32 %v2510, 0.0
      %v2543 = vmax.f32 %v2511, 0.0
      %v2544 = vmax.f32 %v2512, 0.0
      %v2545 = vmax.f32 %v2513, 0.0
      %v2546 = vmax.f32 %v2514, 0.0
      %v2547 = vmax.f32 %v2515, 0.0
      %v2548 = vmax.f32 %v2516, 0.0
      %v2549 = vmax.f32 %v2517, 0.0
      %v2550 = vmax.f32 %v2518, 0.0
      %v2551 = vmax.f32 %v2519, 0.0
      %v2552 = vld [vmem:[%s5] sm:$0xf]
      %v2553 = vld [vmem:[%s6] sm:$0x1]
      %v2555 = vlaneseq
      %v2556 = vshrl.u32 %v2555, 7
      %v2557 = vsub.s32 0, %v2556
      %v2558 = vrot.slane %v2553, %v2557
      %vm2560 = vcmask 31744
      %v2562 = vsel %vm2560, %v2520, 0
      %v2565 = vsel %vm2560, %v2521, 0
      %v2568 = vsel %vm2560, %v2522, 0
      %v2571 = vsel %vm2560, %v2523, 0
      %v2574 = vsel %vm2560, %v2524, 0
      %v2577 = vsel %vm2560, %v2525, 0
      %v2580 = vsel %vm2560, %v2526, 0
      %v2583 = vsel %vm2560, %v2527, 0
      %v2586 = vsel %vm2560, %v2528, 0
      %v2589 = vsel %vm2560, %v2529, 0
      %v2592 = vsel %vm2560, %v2530, 0
      %v2595 = vsel %vm2560, %v2531, 0
      %v2598 = vsel %vm2560, %v2532, 0
      %v2601 = vsel %vm2560, %v2533, 0
      %v2604 = vsel %vm2560, %v2534, 0
      %v2607 = vsel %vm2560, %v2535, 0
      %v2610 = vsel %vm2560, %v2536, 0
      %v2613 = vsel %vm2560, %v2537, 0
      %v2616 = vsel %vm2560, %v2538, 0
      %v2619 = vsel %vm2560, %v2539, 0
      %v2622 = vsel %vm2560, %v2540, 0
      %v2625 = vsel %vm2560, %v2541, 0
      %v2628 = vsel %vm2560, %v2542, 0
      %v2631 = vsel %vm2560, %v2543, 0
      %v2634 = vsel %vm2560, %v2544, 0
      %v2637 = vsel %vm2560, %v2545, 0
      %v2640 = vsel %vm2560, %v2546, 0
      %v2643 = vsel %vm2560, %v2547, 0
      %v2646 = vsel %vm2560, %v2548, 0
      %v2649 = vsel %vm2560, %v2549, 0
      %v2652 = vsel %vm2560, %v2550, 0
      %v2655 = vsel %vm2560, %v2551, 0
      %vm2657 = vcmask 1043456
      %v2659 = vsel %vm2657, %v2552, 0
      %2661 = vmatprep.subr.mxu0 0.0
      %2662 = vmatpush1.msra.mxu0 %v2659
      %2663 = vmatprep.subr.mxu0 0.0
      %2664 = vmatpush1.msra.mxu0 0.0
      %2665 = vmatprep.subr.mxu0 0.0
      %2666 = vmatpush1.msra.mxu0 0.0
      %2667 = vmatprep.subr.mxu0 0.0
      %2668 = vmatpush1.msra.mxu0 0.0
      %2669 = vmatprep.subr.mxu0 0.0
      %2670 = vmatpush1.msra.mxu0 0.0
      %2671 = vmatprep.subr.mxu0 0.0
      %2672 = vmatpush1.msra.mxu0 0.0
      %2673 = vmatprep.subr.mxu0 0.0
      %2674 = vmatpush1.msra.mxu0 0.0
      %2675 = vmatprep.subr.mxu0 0.0
      %2676 = vmatpush1.msra.mxu0 0.0
      %2677 = vmatprep.subr.mxu0 0.0
      %2678 = vmatpush1.msra.mxu0 0.0
      %2679 = vmatprep.subr.mxu0 0.0
      %2680 = vmatpush1.msra.mxu0 0.0
      %2681 = vmatprep.subr.mxu0 0.0
      %2682 = vmatpush1.msra.mxu0 0.0
      %2683 = vmatprep.subr.mxu0 0.0
      %2684 = vmatpush1.msra.mxu0 0.0
      %2685 = vmatprep.subr.mxu0 0.0
      %2686 = vmatpush1.msra.mxu0 0.0
      %2687 = vmatprep.subr.mxu0 0.0
      %2688 = vmatpush1.msra.mxu0 0.0
      %2689 = vmatprep.subr.mxu0 0.0
      %2690 = vmatpush1.msra.mxu0 0.0
      %2691 = vmatprep.subr.mxu0 0.0
      %2692 = vmatpush1.msra.mxu0 0.0
      %2693 = vmatprep.subr.mxu0 0.0
      %2694 = vmatpush1.msra.mxu0 0.0
      %2695 = vmatprep.subr.mxu0 0.0
      %2696 = vmatpush1.msra.mxu0 0.0
      %2697 = vmatprep.subr.mxu0 0.0
      %2698 = vmatpush1.msra.mxu0 0.0
      %2699 = vmatprep.subr.mxu0 0.0
      %2700 = vmatpush1.msra.mxu0 0.0
      %2701 = vmatprep.subr.mxu0 0.0
      %2702 = vmatpush1.msra.mxu0 0.0
      %2703 = vmatprep.subr.mxu0 0.0
      %2704 = vmatpush1.msra.mxu0 0.0
      %2705 = vmatprep.subr.mxu0 0.0
      %2706 = vmatpush1.msra.mxu0 0.0
      %2707 = vmatprep.subr.mxu0 0.0
      %2708 = vmatpush1.msra.mxu0 0.0
      %2709 = vmatprep.subr.mxu0 0.0
      %2710 = vmatpush1.msra.mxu0 0.0
      %2711 = vmatprep.subr.mxu0 0.0
      %2712 = vmatpush1.msra.mxu0 0.0
      %2713 = vmatprep.subr.mxu0 0.0
      %2714 = vmatpush1.msra.mxu0 0.0
      %2715 = vmatprep.subr.mxu0 0.0
      %2716 = vmatpush1.msra.mxu0 0.0
      %2717 = vmatprep.subr.mxu0 0.0
      %2718 = vmatpush1.msra.mxu0 0.0
      %2719 = vmatprep.subr.mxu0 0.0
      %2720 = vmatpush1.msra.mxu0 0.0
      %2721 = vmatprep.subr.mxu0 0.0
      %2722 = vmatpush1.msra.mxu0 0.0
      %2723 = vmatprep.subr.mxu0 0.0
      %2724 = vmatpush1.msra.mxu0 0.0
      %2725 = vmatprep.mubr.f32.mxu0 0.0
      %2726 = vmatmul.mubr.f32.gmra.mrb[0].mxu0 %v2562
      %v2727 = vpop.f32.mrb[0].mxu0
      %v2728 = vadd.f32 %v2558, %v2727
      %v2729 = vpop.f32.mrb[0].mxu0
      %2730 = vmatprep.mubr.f32.mxu0 0.0
      %2731 = vmatmul.mubr.f32.gmra.mrb[0].mxu0 %v2565
      %v2732 = vpop.f32.mrb[0].mxu0
      %v2733 = vadd.f32 %v2558, %v2732
      %v2734 = vpop.f32.mrb[0].mxu0
      %2735 = vmatprep.mubr.f32.mxu0 0.0
      %2736 = vmatmul.mubr.f32.gmra.mrb[0].mxu0 %v2568
      %v2737 = vpop.f32.mrb[0].mxu0
      %v2738 = vadd.f32 %v2558, %v2737
      %v2739 = vpop.f32.mrb[0].mxu0
      %2740 = vmatprep.mubr.f32.mxu0 0.0
      %2741 = vmatmul.mubr.f32.gmra.mrb[0].mxu0 %v2571
      %v2742 = vpop.f32.mrb[0].mxu0
      %v2743 = vadd.f32 %v2558, %v2742
      %v2744 = vpop.f32.mrb[0].mxu0
      %2745 = vmatprep.mubr.f32.mxu0 0.0
      %2746 = vmatmul.mubr.f32.gmra.mrb[0].mxu0 %v2574
      %v2747 = vpop.f32.mrb[0].mxu0
      %v2748 = vadd.f32 %v2558, %v2747
      %v2749 = vpop.f32.mrb[0].mxu0
      %2750 = vmatprep.mubr.f32.mxu0 0.0
      %2751 = vmatmul.mubr.f32.gmra.mrb[0].mxu0 %v2577
      %v2752 = vpop.f32.mrb[0].mxu0
      %v2753 = vadd.f32 %v2558, %v2752
      %v2754 = vpop.f32.mrb[0].mxu0
      %2755 = vmatprep.mubr.f32.mxu0 0.0
      %2756 = vmatmul.mubr.f32.gmra.mrb[0].mxu0 %v2580
      %v2757 = vpop.f32.mrb[0].mxu0
      %v2758 = vadd.f32 %v2558, %v2757
      %v2759 = vpop.f32.mrb[0].mxu0
      %2760 = vmatprep.mubr.f32.mxu0 0.0
      %2761 = vmatmul.mubr.f32.gmra.mrb[0].mxu0 %v2583
      %v2762 = vpop.f32.mrb[0].mxu0
      %v2763 = vadd.f32 %v2558, %v2762
      %v2764 = vpop.f32.mrb[0].mxu0
      %2765 = vmatprep.mubr.f32.mxu0 0.0
      %2766 = vmatmul.mubr.f32.gmra.mrb[0].mxu0 %v2586
      %v2767 = vpop.f32.mrb[0].mxu0
      %v2768 = vadd.f32 %v2558, %v2767
      %v2769 = vpop.f32.mrb[0].mxu0
      %2770 = vmatprep.mubr.f32.mxu0 0.0
      %2771 = vmatmul.mubr.f32.gmra.mrb[0].mxu0 %v2589
      %v2772 = vpop.f32.mrb[0].mxu0
      %v2773 = vadd.f32 %v2558, %v2772
      %v2774 = vpop.f32.mrb[0].mxu0
      %2775 = vmatprep.mubr.f32.mxu0 0.0
      %2776 = vmatmul.mubr.f32.gmra.mrb[0].mxu0 %v2592
      %v2777 = vpop.f32.mrb[0].mxu0
      %v2778 = vadd.f32 %v2558, %v2777
      %v2779 = vpop.f32.mrb[0].mxu0
      %2780 = vmatprep.mubr.f32.mxu0 0.0
      %2781 = vmatmul.mubr.f32.gmra.mrb[0].mxu0 %v2595
      %v2782 = vpop.f32.mrb[0].mxu0
      %v2783 = vadd.f32 %v2558, %v2782
      %v2784 = vpop.f32.mrb[0].mxu0
      %2785 = vmatprep.mubr.f32.mxu0 0.0
      %2786 = vmatmul.mubr.f32.gmra.mrb[0].mxu0 %v2598
      %v2787 = vpop.f32.mrb[0].mxu0
      %v2788 = vadd.f32 %v2558, %v2787
      %v2789 = vpop.f32.mrb[0].mxu0
      %2790 = vmatprep.mubr.f32.mxu0 0.0
      %2791 = vmatmul.mubr.f32.gmra.mrb[0].mxu0 %v2601
      %v2792 = vpop.f32.mrb[0].mxu0
      %v2793 = vadd.f32 %v2558, %v2792
      %v2794 = vpop.f32.mrb[0].mxu0
      %2795 = vmatprep.mubr.f32.mxu0 0.0
      %2796 = vmatmul.mubr.f32.gmra.mrb[0].mxu0 %v2604
      %v2797 = vpop.f32.mrb[0].mxu0
      %v2798 = vadd.f32 %v2558, %v2797
      %v2799 = vpop.f32.mrb[0].mxu0
      %2800 = vmatprep.mubr.f32.mxu0 0.0
      %2801 = vmatmul.mubr.f32.gmra.mrb[0].mxu0 %v2607
      %v2802 = vpop.f32.mrb[0].mxu0
      %v2803 = vadd.f32 %v2558, %v2802
      %v2804 = vpop.f32.mrb[0].mxu0
      %2805 = vmatprep.mubr.f32.mxu0 0.0
      %2806 = vmatmul.mubr.f32.gmra.mrb[0].mxu0 %v2610
      %v2807 = vpop.f32.mrb[0].mxu0
      %v2808 = vadd.f32 %v2558, %v2807
      %v2809 = vpop.f32.mrb[0].mxu0
      %2810 = vmatprep.mubr.f32.mxu0 0.0
      %2811 = vmatmul.mubr.f32.gmra.mrb[0].mxu0 %v2613
      %v2812 = vpop.f32.mrb[0].mxu0
      %v2813 = vadd.f32 %v2558, %v2812
      %v2814 = vpop.f32.mrb[0].mxu0
      %2815 = vmatprep.mubr.f32.mxu0 0.0
      %2816 = vmatmul.mubr.f32.gmra.mrb[0].mxu0 %v2616
      %v2817 = vpop.f32.mrb[0].mxu0
      %v2818 = vadd.f32 %v2558, %v2817
      %v2819 = vpop.f32.mrb[0].mxu0
      %2820 = vmatprep.mubr.f32.mxu0 0.0
      %2821 = vmatmul.mubr.f32.gmra.mrb[0].mxu0 %v2619
      %v2822 = vpop.f32.mrb[0].mxu0
      %v2823 = vadd.f32 %v2558, %v2822
      %v2824 = vpop.f32.mrb[0].mxu0
      %2825 = vmatprep.mubr.f32.mxu0 0.0
      %2826 = vmatmul.mubr.f32.gmra.mrb[0].mxu0 %v2622
      %v2827 = vpop.f32.mrb[0].mxu0
      %v2828 = vadd.f32 %v2558, %v2827
      %v2829 = vpop.f32.mrb[0].mxu0
      %2830 = vmatprep.mubr.f32.mxu0 0.0
      %2831 = vmatmul.mubr.f32.gmra.mrb[0].mxu0 %v2625
      %v2832 = vpop.f32.mrb[0].mxu0
      %v2833 = vadd.f32 %v2558, %v2832
      %v2834 = vpop.f32.mrb[0].mxu0
      %2835 = vmatprep.mubr.f32.mxu0 0.0
      %2836 = vmatmul.mubr.f32.gmra.mrb[0].mxu0 %v2628
      %v2837 = vpop.f32.mrb[0].mxu0
      %v2838 = vadd.f32 %v2558, %v2837
      %v2839 = vpop.f32.mrb[0].mxu0
      %2840 = vmatprep.mubr.f32.mxu0 0.0
      %2841 = vmatmul.mubr.f32.gmra.mrb[0].mxu0 %v2631
      %v2842 = vpop.f32.mrb[0].mxu0
      %v2843 = vadd.f32 %v2558, %v2842
      %v2844 = vpop.f32.mrb[0].mxu0
      %2845 = vmatprep.mubr.f32.mxu0 0.0
      %2846 = vmatmul.mubr.f32.gmra.mrb[0].mxu0 %v2634
      %v2847 = vpop.f32.mrb[0].mxu0
      %v2848 = vadd.f32 %v2558, %v2847
      %v2849 = vpop.f32.mrb[0].mxu0
      %2850 = vmatprep.mubr.f32.mxu0 0.0
      %2851 = vmatmul.mubr.f32.gmra.mrb[0].mxu0 %v2637
      %v2852 = vpop.f32.mrb[0].mxu0
      %v2853 = vadd.f32 %v2558, %v2852
      %v2854 = vpop.f32.mrb[0].mxu0
      %2855 = vmatprep.mubr.f32.mxu0 0.0
      %2856 = vmatmul.mubr.f32.gmra.mrb[0].mxu0 %v2640
      %v2857 = vpop.f32.mrb[0].mxu0
      %v2858 = vadd.f32 %v2558, %v2857
      %v2859 = vpop.f32.mrb[0].mxu0
      %2860 = vmatprep.mubr.f32.mxu0 0.0
      %2861 = vmatmul.mubr.f32.gmra.mrb[0].mxu0 %v2643
      %v2862 = vpop.f32.mrb[0].mxu0
      %v2863 = vadd.f32 %v2558, %v2862
      %v2864 = vpop.f32.mrb[0].mxu0
      %2865 = vmatprep.mubr.f32.mxu0 0.0
      %2866 = vmatmul.mubr.f32.gmra.mrb[0].mxu0 %v2646
      %v2867 = vpop.f32.mrb[0].mxu0
      %v2868 = vadd.f32 %v2558, %v2867
      %v2869 = vpop.f32.mrb[0].mxu0
      %2870 = vmatprep.mubr.f32.mxu0 0.0
      %2871 = vmatmul.mubr.f32.gmra.mrb[0].mxu0 %v2649
      %v2872 = vpop.f32.mrb[0].mxu0
      %v2873 = vadd.f32 %v2558, %v2872
      %v2874 = vpop.f32.mrb[0].mxu0
      %2875 = vmatprep.mubr.f32.mxu0 0.0
      %2876 = vmatmul.mubr.f32.gmra.mrb[0].mxu0 %v2652
      %v2877 = vpop.f32.mrb[0].mxu0
      %v2878 = vadd.f32 %v2558, %v2877
      %v2879 = vpop.f32.mrb[0].mxu0
      %2880 = vmatprep.mubr.f32.mxu0 0.0
      %2881 = vmatmul.mubr.f32.gmra.mrb[0].mxu0 %v2655
      %v2882 = vpop.f32.mrb[0].mxu0
      %v2883 = vadd.f32 %v2558, %v2882
      %v2884 = vpop.f32.mrb[0].mxu0
      %2885 = vdwg.mxu0
      %v2886 = vadd.f32 %v2728, %v2768
      %v2887 = vadd.f32 %v2733, %v2773
      %v2888 = vadd.f32 %v2738, %v2778
      %v2889 = vadd.f32 %v2743, %v2783
      %v2890 = vadd.f32 %v2748, %v2788
      %v2891 = vadd.f32 %v2753, %v2793
      %v2892 = vadd.f32 %v2758, %v2798
      %v2893 = vadd.f32 %v2763, %v2803
      %v2894 = vxor.u32 %v2886, 2147483648
      %v2895 = vxor.u32 %v2887, 2147483648
      %v2896 = vxor.u32 %v2888, 2147483648
      %v2897 = vxor.u32 %v2889, 2147483648
      %v2898 = vxor.u32 %v2890, 2147483648
      %v2899 = vxor.u32 %v2891, 2147483648
      %v2900 = vxor.u32 %v2892, 2147483648
      %v2901 = vxor.u32 %v2893, 2147483648
      %v2902 = vmul.f32 %v2894, 1.442695
      %v2903 = vpow.pop %v2902
      %v2904 = vmul.f32 %v2895, 1.442695
      %v2905 = vpow.pop %v2904
      %v2906 = vmul.f32 %v2896, 1.442695
      %v2907 = vpow.pop %v2906
      %v2908 = vmul.f32 %v2897, 1.442695
      %v2909 = vpow.pop %v2908
      %v2910 = vmul.f32 %v2898, 1.442695
      %v2911 = vpow.pop %v2910
      %v2912 = vmul.f32 %v2899, 1.442695
      %v2913 = vpow.pop %v2912
      %v2914 = vmul.f32 %v2900, 1.442695
      %v2915 = vpow.pop %v2914
      %v2916 = vmul.f32 %v2901, 1.442695
      %v2917 = vpow.pop %v2916
      %v2918 = vadd.f32 %v2903, 1.0
      %v2919 = vadd.f32 %v2905, 1.0
      %v2920 = vadd.f32 %v2907, 1.0
      %v2921 = vadd.f32 %v2909, 1.0
      %v2922 = vadd.f32 %v2911, 1.0
      %v2923 = vadd.f32 %v2913, 1.0
      %v2924 = vadd.f32 %v2915, 1.0
      %v2925 = vadd.f32 %v2917, 1.0
      %v2926 = vrcp.pop %v2918
      %v2927 = vmul.f32 1.0, %v2926
      %v2928 = vrcp.pop %v2919
      %v2929 = vmul.f32 1.0, %v2928
      %v2930 = vrcp.pop %v2920
      %v2931 = vmul.f32 1.0, %v2930
      %v2932 = vrcp.pop %v2921
      %v2933 = vmul.f32 1.0, %v2932
      %v2934 = vrcp.pop %v2922
      %v2935 = vmul.f32 1.0, %v2934
      %v2936 = vrcp.pop %v2923
      %v2937 = vmul.f32 1.0, %v2936
      %v2938 = vrcp.pop %v2924
      %v2939 = vmul.f32 1.0, %v2938
      %v2940 = vrcp.pop %v2925
      %v2941 = vmul.f32 1.0, %v2940
      %v2942 = vadd.f32 %v2808, %v2848
      %v2943 = vadd.f32 %v2813, %v2853
      %v2944 = vadd.f32 %v2818, %v2858
      %v2945 = vadd.f32 %v2823, %v2863
      %v2946 = vadd.f32 %v2828, %v2868
      %v2947 = vadd.f32 %v2833, %v2873
      %v2948 = vadd.f32 %v2838, %v2878
      %v2949 = vadd.f32 %v2843, %v2883
      %v2950 = vxor.u32 %v2942, 2147483648
      %v2951 = vxor.u32 %v2943, 2147483648
      %v2952 = vxor.u32 %v2944, 2147483648
      %v2953 = vxor.u32 %v2945, 2147483648
      %v2954 = vxor.u32 %v2946, 2147483648
      %v2955 = vxor.u32 %v2947, 2147483648
      %v2956 = vxor.u32 %v2948, 2147483648
      %v2957 = vxor.u32 %v2949, 2147483648
      %v2958 = vmul.f32 %v2950, 1.442695
      %v2959 = vpow.pop %v2958
      %v2960 = vmul.f32 %v2951, 1.442695
      %v2961 = vpow.pop %v2960
      %v2962 = vmul.f32 %v2952, 1.442695
      %v2963 = vpow.pop %v2962
      %v2964 = vmul.f32 %v2953, 1.442695
      %v2965 = vpow.pop %v2964
      %v2966 = vmul.f32 %v2954, 1.442695
      %v2967 = vpow.pop %v2966
      %v2968 = vmul.f32 %v2955, 1.442695
      %v2969 = vpow.pop %v2968
      %v2970 = vmul.f32 %v2956, 1.442695
      %v2971 = vpow.pop %v2970
      %v2972 = vmul.f32 %v2957, 1.442695
      %v2973 = vpow.pop %v2972
      %v2974 = vadd.f32 %v2959, 1.0
      %v2975 = vadd.f32 %v2961, 1.0
      %v2976 = vadd.f32 %v2963, 1.0
      %v2977 = vadd.f32 %v2965, 1.0
      %v2978 = vadd.f32 %v2967, 1.0
      %v2979 = vadd.f32 %v2969, 1.0
      %v2980 = vadd.f32 %v2971, 1.0
      %v2981 = vadd.f32 %v2973, 1.0
      %v2982 = vrcp.pop %v2974
      %v2983 = vmul.f32 1.0, %v2982
      %v2984 = vrcp.pop %v2975
      %v2985 = vmul.f32 1.0, %v2984
      %v2986 = vrcp.pop %v2976
      %v2987 = vmul.f32 1.0, %v2986
      %v2988 = vrcp.pop %v2977
      %v2989 = vmul.f32 1.0, %v2988
      %v2990 = vrcp.pop %v2978
      %v2991 = vmul.f32 1.0, %v2990
      %v2992 = vrcp.pop %v2979
      %v2993 = vmul.f32 1.0, %v2992
      %v2994 = vrcp.pop %v2980
      %v2995 = vmul.f32 1.0, %v2994
      %v2996 = vrcp.pop %v2981
      %v2997 = vmul.f32 1.0, %v2996
      %v3006 = vcombine.high %v2927, %v2927
      %v3008 = vunpack.c.l.s4 1966171168
      %v3009 = vunpack.c.0.s8 %v3008
      %v3010 = vlaneseq
      %v3011 = vshrl.u32 %v3010, 7
      %v3012 = vsub.s32 %v3009, %v3011
      %v3013 = vrot.slane %v2927, %v3012
      %v3015 = vunpack.c.l.s4 1966171168
      %v3016 = vunpack.c.0.s8 %v3015
      %v3017 = vlaneseq
      %v3018 = vshrl.u32 %v3017, 7
      %v3019 = vsub.s32 %v3016, %v3018
      %v3020 = vrot.slane %v3006, %v3019
      %v3021 = vcombine.high %v3013, %v3013
      %v3022 = vcombine.high %v3020, %v3020
      %v3024 = vunpack.c.l.s4 1966171168
      %v3025 = vunpack.c.0.s8 %v3024
      %v3026 = vlaneseq
      %v3027 = vshrl.u32 %v3026, 7
      %v3028 = vsub.s32 %v3025, %v3027
      %v3029 = vrot.slane %v3013, %v3028
      %v3031 = vunpack.c.l.s4 1966171168
      %v3032 = vunpack.c.0.s8 %v3031
      %v3033 = vlaneseq
      %v3034 = vshrl.u32 %v3033, 7
      %v3035 = vsub.s32 %v3032, %v3034
      %v3036 = vrot.slane %v3020, %v3035
      %v3038 = vunpack.c.l.s4 1966171168
      %v3039 = vunpack.c.0.s8 %v3038
      %v3040 = vlaneseq
      %v3041 = vshrl.u32 %v3040, 7
      %v3042 = vsub.s32 %v3039, %v3041
      %v3043 = vrot.slane %v3021, %v3042
      %v3045 = vunpack.c.l.s4 1966171168
      %v3046 = vunpack.c.0.s8 %v3045
      %v3047 = vlaneseq
      %v3048 = vshrl.u32 %v3047, 7
      %v3049 = vsub.s32 %v3046, %v3048
      %v3050 = vrot.slane %v3022, %v3049
      %v3051 = vcombine.high %v3029, %v3029
      %v3052 = vcombine.high %v3036, %v3036
      %v3053 = vcombine.high %v3043, %v3043
      %v3054 = vcombine.high %v3050, %v3050
      %v3055 = vcombine.high %v2929, %v2929
      %v3057 = vunpack.c.l.s4 1966171168
      %v3058 = vunpack.c.0.s8 %v3057
      %v3059 = vlaneseq
      %v3060 = vshrl.u32 %v3059, 7
      %v3061 = vsub.s32 %v3058, %v3060
      %v3062 = vrot.slane %v2929, %v3061
      %v3064 = vunpack.c.l.s4 1966171168
      %v3065 = vunpack.c.0.s8 %v3064
      %v3066 = vlaneseq
      %v3067 = vshrl.u32 %v3066, 7
      %v3068 = vsub.s32 %v3065, %v3067
      %v3069 = vrot.slane %v3055, %v3068
      %v3070 = vcombine.high %v3062, %v3062
      %v3071 = vcombine.high %v3069, %v3069
      %v3073 = vunpack.c.l.s4 1966171168
      %v3074 = vunpack.c.0.s8 %v3073
      %v3075 = vlaneseq
      %v3076 = vshrl.u32 %v3075, 7
      %v3077 = vsub.s32 %v3074, %v3076
      %v3078 = vrot.slane %v3062, %v3077
      %v3080 = vunpack.c.l.s4 1966171168
      %v3081 = vunpack.c.0.s8 %v3080
      %v3082 = vlaneseq
      %v3083 = vshrl.u32 %v3082, 7
      %v3084 = vsub.s32 %v3081, %v3083
      %v3085 = vrot.slane %v3069, %v3084
      %v3087 = vunpack.c.l.s4 1966171168
      %v3088 = vunpack.c.0.s8 %v3087
      %v3089 = vlaneseq
      %v3090 = vshrl.u32 %v3089, 7
      %v3091 = vsub.s32 %v3088, %v3090
      %v3092 = vrot.slane %v3070, %v3091
      %v3094 = vunpack.c.l.s4 1966171168
      %v3095 = vunpack.c.0.s8 %v3094
      %v3096 = vlaneseq
      %v3097 = vshrl.u32 %v3096, 7
      %v3098 = vsub.s32 %v3095, %v3097
      %v3099 = vrot.slane %v3071, %v3098
      %v3100 = vcombine.high %v3078, %v3078
      %v3101 = vcombine.high %v3085, %v3085
      %v3102 = vcombine.high %v3092, %v3092
      %v3103 = vcombine.high %v3099, %v3099
      %v3104 = vcombine.high %v2931, %v2931
      %v3106 = vunpack.c.l.s4 1966171168
      %v3107 = vunpack.c.0.s8 %v3106
      %v3108 = vlaneseq
      %v3109 = vshrl.u32 %v3108, 7
      %v3110 = vsub.s32 %v3107, %v3109
      %v3111 = vrot.slane %v2931, %v3110
      %v3113 = vunpack.c.l.s4 1966171168
      %v3114 = vunpack.c.0.s8 %v3113
      %v3115 = vlaneseq
      %v3116 = vshrl.u32 %v3115, 7
      %v3117 = vsub.s32 %v3114, %v3116
      %v3118 = vrot.slane %v3104, %v3117
      %v3119 = vcombine.high %v3111, %v3111
      %v3120 = vcombine.high %v3118, %v3118
      %v3122 = vunpack.c.l.s4 1966171168
      %v3123 = vunpack.c.0.s8 %v3122
      %v3124 = vlaneseq
      %v3125 = vshrl.u32 %v3124, 7
      %v3126 = vsub.s32 %v3123, %v3125
      %v3127 = vrot.slane %v3111, %v3126
      %v3129 = vunpack.c.l.s4 1966171168
      %v3130 = vunpack.c.0.s8 %v3129
      %v3131 = vlaneseq
      %v3132 = vshrl.u32 %v3131, 7
      %v3133 = vsub.s32 %v3130, %v3132
      %v3134 = vrot.slane %v3118, %v3133
      %v3136 = vunpack.c.l.s4 1966171168
      %v3137 = vunpack.c.0.s8 %v3136
      %v3138 = vlaneseq
      %v3139 = vshrl.u32 %v3138, 7
      %v3140 = vsub.s32 %v3137, %v3139
      %v3141 = vrot.slane %v3119, %v3140
      %v3143 = vunpack.c.l.s4 1966171168
      %v3144 = vunpack.c.0.s8 %v3143
      %v3145 = vlaneseq
      %v3146 = vshrl.u32 %v3145, 7
      %v3147 = vsub.s32 %v3144, %v3146
      %v3148 = vrot.slane %v3120, %v3147
      %v3149 = vcombine.high %v3127, %v3127
      %v3150 = vcombine.high %v3134, %v3134
      %v3151 = vcombine.high %v3141, %v3141
      %v3152 = vcombine.high %v3148, %v3148
      %v3153 = vcombine.high %v2933, %v2933
      %v3155 = vunpack.c.l.s4 1966171168
      %v3156 = vunpack.c.0.s8 %v3155
      %v3157 = vlaneseq
      %v3158 = vshrl.u32 %v3157, 7
      %v3159 = vsub.s32 %v3156, %v3158
      %v3160 = vrot.slane %v2933, %v3159
      %v3162 = vunpack.c.l.s4 1966171168
      %v3163 = vunpack.c.0.s8 %v3162
      %v3164 = vlaneseq
      %v3165 = vshrl.u32 %v3164, 7
      %v3166 = vsub.s32 %v3163, %v3165
      %v3167 = vrot.slane %v3153, %v3166
      %v3168 = vcombine.high %v3160, %v3160
      %v3169 = vcombine.high %v3167, %v3167
      %v3171 = vunpack.c.l.s4 1966171168
      %v3172 = vunpack.c.0.s8 %v3171
      %v3173 = vlaneseq
      %v3174 = vshrl.u32 %v3173, 7
      %v3175 = vsub.s32 %v3172, %v3174
      %v3176 = vrot.slane %v3160, %v3175
      %v3178 = vunpack.c.l.s4 1966171168
      %v3179 = vunpack.c.0.s8 %v3178
      %v3180 = vlaneseq
      %v3181 = vshrl.u32 %v3180, 7
      %v3182 = vsub.s32 %v3179, %v3181
      %v3183 = vrot.slane %v3167, %v3182
      %v3185 = vunpack.c.l.s4 1966171168
      %v3186 = vunpack.c.0.s8 %v3185
      %v3187 = vlaneseq
      %v3188 = vshrl.u32 %v3187, 7
      %v3189 = vsub.s32 %v3186, %v3188
      %v3190 = vrot.slane %v3168, %v3189
      %v3192 = vunpack.c.l.s4 1966171168
      %v3193 = vunpack.c.0.s8 %v3192
      %v3194 = vlaneseq
      %v3195 = vshrl.u32 %v3194, 7
      %v3196 = vsub.s32 %v3193, %v3195
      %v3197 = vrot.slane %v3169, %v3196
      %v3198 = vcombine.high %v3176, %v3176
      %v3199 = vcombine.high %v3183, %v3183
      %v3200 = vcombine.high %v3190, %v3190
      %v3201 = vcombine.high %v3197, %v3197
      %v3202 = vcombine.high %v2935, %v2935
      %v3204 = vunpack.c.l.s4 1966171168
      %v3205 = vunpack.c.0.s8 %v3204
      %v3206 = vlaneseq
      %v3207 = vshrl.u32 %v3206, 7
      %v3208 = vsub.s32 %v3205, %v3207
      %v3209 = vrot.slane %v2935, %v3208
      %v3211 = vunpack.c.l.s4 1966171168
      %v3212 = vunpack.c.0.s8 %v3211
      %v3213 = vlaneseq
      %v3214 = vshrl.u32 %v3213, 7
      %v3215 = vsub.s32 %v3212, %v3214
      %v3216 = vrot.slane %v3202, %v3215
      %v3217 = vcombine.high %v3209, %v3209
      %v3218 = vcombine.high %v3216, %v3216
      %v3220 = vunpack.c.l.s4 1966171168
      %v3221 = vunpack.c.0.s8 %v3220
      %v3222 = vlaneseq
      %v3223 = vshrl.u32 %v3222, 7
      %v3224 = vsub.s32 %v3221, %v3223
      %v3225 = vrot.slane %v3209, %v3224
      %v3227 = vunpack.c.l.s4 1966171168
      %v3228 = vunpack.c.0.s8 %v3227
      %v3229 = vlaneseq
      %v3230 = vshrl.u32 %v3229, 7
      %v3231 = vsub.s32 %v3228, %v3230
      %v3232 = vrot.slane %v3216, %v3231
      %v3234 = vunpack.c.l.s4 1966171168
      %v3235 = vunpack.c.0.s8 %v3234
      %v3236 = vlaneseq
      %v3237 = vshrl.u32 %v3236, 7
      %v3238 = vsub.s32 %v3235, %v3237
      %v3239 = vrot.slane %v3217, %v3238
      %v3241 = vunpack.c.l.s4 1966171168
      %v3242 = vunpack.c.0.s8 %v3241
      %v3243 = vlaneseq
      %v3244 = vshrl.u32 %v3243, 7
      %v3245 = vsub.s32 %v3242, %v3244
      %v3246 = vrot.slane %v3218, %v3245
      %v3247 = vcombine.high %v3225, %v3225
      %v3248 = vcombine.high %v3232, %v3232
      %v3249 = vcombine.high %v3239, %v3239
      %v3250 = vcombine.high %v3246, %v3246
      %v3251 = vcombine.high %v2937, %v2937
      %v3253 = vunpack.c.l.s4 1966171168
      %v3254 = vunpack.c.0.s8 %v3253
      %v3255 = vlaneseq
      %v3256 = vshrl.u32 %v3255, 7
      %v3257 = vsub.s32 %v3254, %v3256
      %v3258 = vrot.slane %v2937, %v3257
      %v3260 = vunpack.c.l.s4 1966171168
      %v3261 = vunpack.c.0.s8 %v3260
      %v3262 = vlaneseq
      %v3263 = vshrl.u32 %v3262, 7
      %v3264 = vsub.s32 %v3261, %v3263
      %v3265 = vrot.slane %v3251, %v3264
      %v3266 = vcombine.high %v3258, %v3258
      %v3267 = vcombine.high %v3265, %v3265
      %v3269 = vunpack.c.l.s4 1966171168
      %v3270 = vunpack.c.0.s8 %v3269
      %v3271 = vlaneseq
      %v3272 = vshrl.u32 %v3271, 7
      %v3273 = vsub.s32 %v3270, %v3272
      %v3274 = vrot.slane %v3258, %v3273
      %v3276 = vunpack.c.l.s4 1966171168
      %v3277 = vunpack.c.0.s8 %v3276
      %v3278 = vlaneseq
      %v3279 = vshrl.u32 %v3278, 7
      %v3280 = vsub.s32 %v3277, %v3279
      %v3281 = vrot.slane %v3265, %v3280
      %v3283 = vunpack.c.l.s4 1966171168
      %v3284 = vunpack.c.0.s8 %v3283
      %v3285 = vlaneseq
      %v3286 = vshrl.u32 %v3285, 7
      %v3287 = vsub.s32 %v3284, %v3286
      %v3288 = vrot.slane %v3266, %v3287
      %v3290 = vunpack.c.l.s4 1966171168
      %v3291 = vunpack.c.0.s8 %v3290
      %v3292 = vlaneseq
      %v3293 = vshrl.u32 %v3292, 7
      %v3294 = vsub.s32 %v3291, %v3293
      %v3295 = vrot.slane %v3267, %v3294
      %v3296 = vcombine.high %v3274, %v3274
      %v3297 = vcombine.high %v3281, %v3281
      %v3298 = vcombine.high %v3288, %v3288
      %v3299 = vcombine.high %v3295, %v3295
      %v3300 = vcombine.high %v2939, %v2939
      %v3302 = vunpack.c.l.s4 1966171168
      %v3303 = vunpack.c.0.s8 %v3302
      %v3304 = vlaneseq
      %v3305 = vshrl.u32 %v3304, 7
      %v3306 = vsub.s32 %v3303, %v3305
      %v3307 = vrot.slane %v2939, %v3306
      %v3309 = vunpack.c.l.s4 1966171168
      %v3310 = vunpack.c.0.s8 %v3309
      %v3311 = vlaneseq
      %v3312 = vshrl.u32 %v3311, 7
      %v3313 = vsub.s32 %v3310, %v3312
      %v3314 = vrot.slane %v3300, %v3313
      %v3315 = vcombine.high %v3307, %v3307
      %v3316 = vcombine.high %v3314, %v3314
      %v3318 = vunpack.c.l.s4 1966171168
      %v3319 = vunpack.c.0.s8 %v3318
      %v3320 = vlaneseq
      %v3321 = vshrl.u32 %v3320, 7
      %v3322 = vsub.s32 %v3319, %v3321
      %v3323 = vrot.slane %v3307, %v3322
      %v3325 = vunpack.c.l.s4 1966171168
      %v3326 = vunpack.c.0.s8 %v3325
      %v3327 = vlaneseq
      %v3328 = vshrl.u32 %v3327, 7
      %v3329 = vsub.s32 %v3326, %v3328
      %v3330 = vrot.slane %v3314, %v3329
      %v3332 = vunpack.c.l.s4 1966171168
      %v3333 = vunpack.c.0.s8 %v3332
      %v3334 = vlaneseq
      %v3335 = vshrl.u32 %v3334, 7
      %v3336 = vsub.s32 %v3333, %v3335
      %v3337 = vrot.slane %v3315, %v3336
      %v3339 = vunpack.c.l.s4 1966171168
      %v3340 = vunpack.c.0.s8 %v3339
      %v3341 = vlaneseq
      %v3342 = vshrl.u32 %v3341, 7
      %v3343 = vsub.s32 %v3340, %v3342
      %v3344 = vrot.slane %v3316, %v3343
      %v3345 = vcombine.high %v3323, %v3323
      %v3346 = vcombine.high %v3330, %v3330
      %v3347 = vcombine.high %v3337, %v3337
      %v3348 = vcombine.high %v3344, %v3344
      %v3349 = vcombine.high %v2941, %v2941
      %v3351 = vunpack.c.l.s4 1966171168
      %v3352 = vunpack.c.0.s8 %v3351
      %v3353 = vlaneseq
      %v3354 = vshrl.u32 %v3353, 7
      %v3355 = vsub.s32 %v3352, %v3354
      %v3356 = vrot.slane %v2941, %v3355
      %v3358 = vunpack.c.l.s4 1966171168
      %v3359 = vunpack.c.0.s8 %v3358
      %v3360 = vlaneseq
      %v3361 = vshrl.u32 %v3360, 7
      %v3362 = vsub.s32 %v3359, %v3361
      %v3363 = vrot.slane %v3349, %v3362
      %v3364 = vcombine.high %v3356, %v3356
      %v3365 = vcombine.high %v3363, %v3363
      %v3367 = vunpack.c.l.s4 1966171168
      %v3368 = vunpack.c.0.s8 %v3367
      %v3369 = vlaneseq
      %v3370 = vshrl.u32 %v3369, 7
      %v3371 = vsub.s32 %v3368, %v3370
      %v3372 = vrot.slane %v3356, %v3371
      %v3374 = vunpack.c.l.s4 1966171168
      %v3375 = vunpack.c.0.s8 %v3374
      %v3376 = vlaneseq
      %v3377 = vshrl.u32 %v3376, 7
      %v3378 = vsub.s32 %v3375, %v3377
      %v3379 = vrot.slane %v3363, %v3378
      %v3381 = vunpack.c.l.s4 1966171168
      %v3382 = vunpack.c.0.s8 %v3381
      %v3383 = vlaneseq
      %v3384 = vshrl.u32 %v3383, 7
      %v3385 = vsub.s32 %v3382, %v3384
      %v3386 = vrot.slane %v3364, %v3385
      %v3388 = vunpack.c.l.s4 1966171168
      %v3389 = vunpack.c.0.s8 %v3388
      %v3390 = vlaneseq
      %v3391 = vshrl.u32 %v3390, 7
      %v3392 = vsub.s32 %v3389, %v3391
      %v3393 = vrot.slane %v3365, %v3392
      %v3394 = vcombine.high %v3372, %v3372
      %v3395 = vcombine.high %v3379, %v3379
      %v3396 = vcombine.high %v3386, %v3386
      %v3397 = vcombine.high %v3393, %v3393
      %v3398 = vlaneseq
      %v3399 = vshrl.u32 %v3398, 7
      %v3400 = vsub.s32 0, %v3399
      %v3401 = vrot.slane %v3029, %v3400
      %v3402 = vlaneseq
      %v3403 = vshrl.u32 %v3402, 7
      %v3404 = vsub.s32 0, %v3403
      %v3405 = vrot.slane %v3043, %v3404
      %v3406 = vlaneseq
      %v3407 = vshrl.u32 %v3406, 7
      %v3408 = vsub.s32 0, %v3407
      %v3409 = vrot.slane %v3051, %v3408
      %v3410 = vlaneseq
      %v3411 = vshrl.u32 %v3410, 7
      %v3412 = vsub.s32 0, %v3411
      %v3413 = vrot.slane %v3053, %v3412
      %v3414 = vlaneseq
      %v3415 = vshrl.u32 %v3414, 7
      %v3416 = vsub.s32 0, %v3415
      %v3417 = vrot.slane %v3036, %v3416
      %v3418 = vlaneseq
      %v3419 = vshrl.u32 %v3418, 7
      %v3420 = vsub.s32 0, %v3419
      %v3421 = vrot.slane %v3050, %v3420
      %v3422 = vlaneseq
      %v3423 = vshrl.u32 %v3422, 7
      %v3424 = vsub.s32 0, %v3423
      %v3425 = vrot.slane %v3052, %v3424
      %v3426 = vlaneseq
      %v3427 = vshrl.u32 %v3426, 7
      %v3428 = vsub.s32 0, %v3427
      %v3429 = vrot.slane %v3054, %v3428
      %v3430 = vlaneseq
      %v3431 = vshrl.u32 %v3430, 7
      %v3432 = vsub.s32 0, %v3431
      %v3433 = vrot.slane %v3078, %v3432
      %v3434 = vlaneseq
      %v3435 = vshrl.u32 %v3434, 7
      %v3436 = vsub.s32 0, %v3435
      %v3437 = vrot.slane %v3092, %v3436
      %v3438 = vlaneseq
      %v3439 = vshrl.u32 %v3438, 7
      %v3440 = vsub.s32 0, %v3439
      %v3441 = vrot.slane %v3100, %v3440
      %v3442 = vlaneseq
      %v3443 = vshrl.u32 %v3442, 7
      %v3444 = vsub.s32 0, %v3443
      %v3445 = vrot.slane %v3102, %v3444
      %v3446 = vlaneseq
      %v3447 = vshrl.u32 %v3446, 7
      %v3448 = vsub.s32 0, %v3447
      %v3449 = vrot.slane %v3085, %v3448
      %v3450 = vlaneseq
      %v3451 = vshrl.u32 %v3450, 7
      %v3452 = vsub.s32 0, %v3451
      %v3453 = vrot.slane %v3099, %v3452
      %v3454 = vlaneseq
      %v3455 = vshrl.u32 %v3454, 7
      %v3456 = vsub.s32 0, %v3455
      %v3457 = vrot.slane %v3101, %v3456
      %v3458 = vlaneseq
      %v3459 = vshrl.u32 %v3458, 7
      %v3460 = vsub.s32 0, %v3459
      %v3461 = vrot.slane %v3103, %v3460
      %v3462 = vlaneseq
      %v3463 = vshrl.u32 %v3462, 7
      %v3464 = vsub.s32 0, %v3463
      %v3465 = vrot.slane %v3127, %v3464
      %v3466 = vlaneseq
      %v3467 = vshrl.u32 %v3466, 7
      %v3468 = vsub.s32 0, %v3467
      %v3469 = vrot.slane %v3141, %v3468
      %v3470 = vlaneseq
      %v3471 = vshrl.u32 %v3470, 7
      %v3472 = vsub.s32 0, %v3471
      %v3473 = vrot.slane %v3149, %v3472
      %v3474 = vlaneseq
      %v3475 = vshrl.u32 %v3474, 7
      %v3476 = vsub.s32 0, %v3475
      %v3477 = vrot.slane %v3151, %v3476
      %v3478 = vlaneseq
      %v3479 = vshrl.u32 %v3478, 7
      %v3480 = vsub.s32 0, %v3479
      %v3481 = vrot.slane %v3134, %v3480
      %v3482 = vlaneseq
      %v3483 = vshrl.u32 %v3482, 7
      %v3484 = vsub.s32 0, %v3483
      %v3485 = vrot.slane %v3148, %v3484
      %v3486 = vlaneseq
      %v3487 = vshrl.u32 %v3486, 7
      %v3488 = vsub.s32 0, %v3487
      %v3489 = vrot.slane %v3150, %v3488
      %v3490 = vlaneseq
      %v3491 = vshrl.u32 %v3490, 7
      %v3492 = vsub.s32 0, %v3491
      %v3493 = vrot.slane %v3152, %v3492
      %v3494 = vlaneseq
      %v3495 = vshrl.u32 %v3494, 7
      %v3496 = vsub.s32 0, %v3495
      %v3497 = vrot.slane %v3176, %v3496
      %v3498 = vlaneseq
      %v3499 = vshrl.u32 %v3498, 7
      %v3500 = vsub.s32 0, %v3499
      %v3501 = vrot.slane %v3190, %v3500
      %v3502 = vlaneseq
      %v3503 = vshrl.u32 %v3502, 7
      %v3504 = vsub.s32 0, %v3503
      %v3505 = vrot.slane %v3198, %v3504
      %v3506 = vlaneseq
      %v3507 = vshrl.u32 %v3506, 7
      %v3508 = vsub.s32 0, %v3507
      %v3509 = vrot.slane %v3200, %v3508
      %v3510 = vlaneseq
      %v3511 = vshrl.u32 %v3510, 7
      %v3512 = vsub.s32 0, %v3511
      %v3513 = vrot.slane %v3183, %v3512
      %v3514 = vlaneseq
      %v3515 = vshrl.u32 %v3514, 7
      %v3516 = vsub.s32 0, %v3515
      %v3517 = vrot.slane %v3197, %v3516
      %v3518 = vlaneseq
      %v3519 = vshrl.u32 %v3518, 7
      %v3520 = vsub.s32 0, %v3519
      %v3521 = vrot.slane %v3199, %v3520
      %v3522 = vlaneseq
      %v3523 = vshrl.u32 %v3522, 7
      %v3524 = vsub.s32 0, %v3523
      %v3525 = vrot.slane %v3201, %v3524
      %v3526 = vlaneseq
      %v3527 = vshrl.u32 %v3526, 7
      %v3528 = vsub.s32 0, %v3527
      %v3529 = vrot.slane %v3225, %v3528
      %v3530 = vlaneseq
      %v3531 = vshrl.u32 %v3530, 7
      %v3532 = vsub.s32 0, %v3531
      %v3533 = vrot.slane %v3239, %v3532
      %v3534 = vlaneseq
      %v3535 = vshrl.u32 %v3534, 7
      %v3536 = vsub.s32 0, %v3535
      %v3537 = vrot.slane %v3247, %v3536
      %v3538 = vlaneseq
      %v3539 = vshrl.u32 %v3538, 7
      %v3540 = vsub.s32 0, %v3539
      %v3541 = vrot.slane %v3249, %v3540
      %v3542 = vlaneseq
      %v3543 = vshrl.u32 %v3542, 7
      %v3544 = vsub.s32 0, %v3543
      %v3545 = vrot.slane %v3232, %v3544
      %v3546 = vlaneseq
      %v3547 = vshrl.u32 %v3546, 7
      %v3548 = vsub.s32 0, %v3547
      %v3549 = vrot.slane %v3246, %v3548
      %v3550 = vlaneseq
      %v3551 = vshrl.u32 %v3550, 7
      %v3552 = vsub.s32 0, %v3551
      %v3553 = vrot.slane %v3248, %v3552
      %v3554 = vlaneseq
      %v3555 = vshrl.u32 %v3554, 7
      %v3556 = vsub.s32 0, %v3555
      %v3557 = vrot.slane %v3250, %v3556
      %v3558 = vlaneseq
      %v3559 = vshrl.u32 %v3558, 7
      %v3560 = vsub.s32 0, %v3559
      %v3561 = vrot.slane %v3274, %v3560
      %v3562 = vlaneseq
      %v3563 = vshrl.u32 %v3562, 7
      %v3564 = vsub.s32 0, %v3563
      %v3565 = vrot.slane %v3288, %v3564
      %v3566 = vlaneseq
      %v3567 = vshrl.u32 %v3566, 7
      %v3568 = vsub.s32 0, %v3567
      %v3569 = vrot.slane %v3296, %v3568
      %v3570 = vlaneseq
      %v3571 = vshrl.u32 %v3570, 7
      %v3572 = vsub.s32 0, %v3571
      %v3573 = vrot.slane %v3298, %v3572
      %v3574 = vlaneseq
      %v3575 = vshrl.u32 %v3574, 7
      %v3576 = vsub.s32 0, %v3575
      %v3577 = vrot.slane %v3281, %v3576
      %v3578 = vlaneseq
      %v3579 = vshrl.u32 %v3578, 7
      %v3580 = vsub.s32 0, %v3579
      %v3581 = vrot.slane %v3295, %v3580
      %v3582 = vlaneseq
      %v3583 = vshrl.u32 %v3582, 7
      %v3584 = vsub.s32 0, %v3583
      %v3585 = vrot.slane %v3297, %v3584
      %v3586 = vlaneseq
      %v3587 = vshrl.u32 %v3586, 7
      %v3588 = vsub.s32 0, %v3587
      %v3589 = vrot.slane %v3299, %v3588
      %v3590 = vlaneseq
      %v3591 = vshrl.u32 %v3590, 7
      %v3592 = vsub.s32 0, %v3591
      %v3593 = vrot.slane %v3323, %v3592
      %v3594 = vlaneseq
      %v3595 = vshrl.u32 %v3594, 7
      %v3596 = vsub.s32 0, %v3595
      %v3597 = vrot.slane %v3337, %v3596
      %v3598 = vlaneseq
      %v3599 = vshrl.u32 %v3598, 7
      %v3600 = vsub.s32 0, %v3599
      %v3601 = vrot.slane %v3345, %v3600
      %v3602 = vlaneseq
      %v3603 = vshrl.u32 %v3602, 7
      %v3604 = vsub.s32 0, %v3603
      %v3605 = vrot.slane %v3347, %v3604
      %v3606 = vlaneseq
      %v3607 = vshrl.u32 %v3606, 7
      %v3608 = vsub.s32 0, %v3607
      %v3609 = vrot.slane %v3330, %v3608
      %v3610 = vlaneseq
      %v3611 = vshrl.u32 %v3610, 7
      %v3612 = vsub.s32 0, %v3611
      %v3613 = vrot.slane %v3344, %v3612
      %v3614 = vlaneseq
      %v3615 = vshrl.u32 %v3614, 7
      %v3616 = vsub.s32 0, %v3615
      %v3617 = vrot.slane %v3346, %v3616
      %v3618 = vlaneseq
      %v3619 = vshrl.u32 %v3618, 7
      %v3620 = vsub.s32 0, %v3619
      %v3621 = vrot.slane %v3348, %v3620
      %v3622 = vlaneseq
      %v3623 = vshrl.u32 %v3622, 7
      %v3624 = vsub.s32 0, %v3623
      %v3625 = vrot.slane %v3372, %v3624
      %v3626 = vlaneseq
      %v3627 = vshrl.u32 %v3626, 7
      %v3628 = vsub.s32 0, %v3627
      %v3629 = vrot.slane %v3386, %v3628
      %v3630 = vlaneseq
      %v3631 = vshrl.u32 %v3630, 7
      %v3632 = vsub.s32 0, %v3631
      %v3633 = vrot.slane %v3394, %v3632
      %v3634 = vlaneseq
      %v3635 = vshrl.u32 %v3634, 7
      %v3636 = vsub.s32 0, %v3635
      %v3637 = vrot.slane %v3396, %v3636
      %v3638 = vlaneseq
      %v3639 = vshrl.u32 %v3638, 7
      %v3640 = vsub.s32 0, %v3639
      %v3641 = vrot.slane %v3379, %v3640
      %v3642 = vlaneseq
      %v3643 = vshrl.u32 %v3642, 7
      %v3644 = vsub.s32 0, %v3643
      %v3645 = vrot.slane %v3393, %v3644
      %v3646 = vlaneseq
      %v3647 = vshrl.u32 %v3646, 7
      %v3648 = vsub.s32 0, %v3647
      %v3649 = vrot.slane %v3395, %v3648
      %v3650 = vlaneseq
      %v3651 = vshrl.u32 %v3650, 7
      %v3652 = vsub.s32 0, %v3651
      %v3653 = vrot.slane %v3397, %v3652
      %v3718 = vmul.f32 %v287, %v3401
      %v3719 = vmul.f32 %v288, %v3401
      %v3720 = vmul.f32 %v289, %v3405
      %v3721 = vmul.f32 %v290, %v3405
      %v3722 = vmul.f32 %v291, %v3409
      %v3723 = vmul.f32 %v292, %v3409
      %v3724 = vmul.f32 %v293, %v3413
      %v3725 = vmul.f32 %v294, %v3413
      %v3726 = vmul.f32 %v295, %v3417
      %v3727 = vmul.f32 %v296, %v3417
      %v3728 = vmul.f32 %v297, %v3421
      %v3729 = vmul.f32 %v298, %v3421
      %v3730 = vmul.f32 %v299, %v3425
      %v3731 = vmul.f32 %v300, %v3425
      %v3732 = vmul.f32 %v301, %v3429
      %v3733 = vmul.f32 %v302, %v3429
      %v3734 = vmul.f32 %v303, %v3433
      %v3735 = vmul.f32 %v304, %v3433
      %v3736 = vmul.f32 %v305, %v3437
      %v3737 = vmul.f32 %v306, %v3437
      %v3738 = vmul.f32 %v307, %v3441
      %v3739 = vmul.f32 %v308, %v3441
      %v3740 = vmul.f32 %v309, %v3445
      %v3741 = vmul.f32 %v310, %v3445
      %v3742 = vmul.f32 %v311, %v3449
      %v3743 = vmul.f32 %v312, %v3449
      %v3744 = vmul.f32 %v313, %v3453
      %v3745 = vmul.f32 %v314, %v3453
      %v3746 = vmul.f32 %v315, %v3457
      %v3747 = vmul.f32 %v316, %v3457
      %v3748 = vmul.f32 %v317, %v3461
      %v3749 = vmul.f32 %v318, %v3461
      %v3750 = vmul.f32 %v319, %v3465
      %v3751 = vmul.f32 %v320, %v3465
      %v3752 = vmul.f32 %v321, %v3469
      %v3753 = vmul.f32 %v322, %v3469
      %v3754 = vmul.f32 %v323, %v3473
      %v3755 = vmul.f32 %v324, %v3473
      %v3756 = vmul.f32 %v325, %v3477
      %v3757 = vmul.f32 %v326, %v3477
      %v3758 = vmul.f32 %v327, %v3481
      %v3759 = vmul.f32 %v328, %v3481
      %v3760 = vmul.f32 %v329, %v3485
      %v3761 = vmul.f32 %v330, %v3485
      %v3762 = vmul.f32 %v331, %v3489
      %v3763 = vmul.f32 %v332, %v3489
      %v3764 = vmul.f32 %v333, %v3493
      %v3765 = vmul.f32 %v334, %v3493
      %v3766 = vmul.f32 %v335, %v3497
      %v3767 = vmul.f32 %v336, %v3497
      %v3768 = vmul.f32 %v337, %v3501
      %v3769 = vmul.f32 %v338, %v3501
      %v3770 = vmul.f32 %v339, %v3505
      %v3771 = vmul.f32 %v340, %v3505
      %v3772 = vmul.f32 %v341, %v3509
      %v3773 = vmul.f32 %v342, %v3509
      %v3774 = vmul.f32 %v343, %v3513
      %v3775 = vmul.f32 %v344, %v3513
      %v3776 = vmul.f32 %v345, %v3517
      %v3777 = vmul.f32 %v346, %v3517
      %v3778 = vmul.f32 %v347, %v3521
      %v3779 = vmul.f32 %v348, %v3521
      %v3780 = vmul.f32 %v349, %v3525
      %v3781 = vmul.f32 %v350, %v3525
      %v3782 = vmul.f32 %v351, %v3529
      %v3783 = vmul.f32 %v352, %v3529
      %v3784 = vmul.f32 %v353, %v3533
      %v3785 = vmul.f32 %v354, %v3533
      %v3786 = vmul.f32 %v355, %v3537
      %v3787 = vmul.f32 %v356, %v3537
      %v3788 = vmul.f32 %v357, %v3541
      %v3789 = vmul.f32 %v358, %v3541
      %v3790 = vmul.f32 %v359, %v3545
      %v3791 = vmul.f32 %v360, %v3545
      %v3792 = vmul.f32 %v361, %v3549
      %v3793 = vmul.f32 %v362, %v3549
      %v3794 = vmul.f32 %v363, %v3553
      %v3795 = vmul.f32 %v364, %v3553
      %v3796 = vmul.f32 %v365, %v3557
      %v3797 = vmul.f32 %v366, %v3557
      %v3798 = vmul.f32 %v367, %v3561
      %v3799 = vmul.f32 %v368, %v3561
      %v3800 = vmul.f32 %v369, %v3565
      %v3801 = vmul.f32 %v370, %v3565
      %v3802 = vmul.f32 %v371, %v3569
      %v3803 = vmul.f32 %v372, %v3569
      %v3804 = vmul.f32 %v373, %v3573
      %v3805 = vmul.f32 %v374, %v3573
      %v3806 = vmul.f32 %v375, %v3577
      %v3807 = vmul.f32 %v376, %v3577
      %v3808 = vmul.f32 %v377, %v3581
      %v3809 = vmul.f32 %v378, %v3581
      %v3810 = vmul.f32 %v379, %v3585
      %v3811 = vmul.f32 %v380, %v3585
      %v3812 = vmul.f32 %v381, %v3589
      %v3813 = vmul.f32 %v382, %v3589
      %v3814 = vmul.f32 %v383, %v3593
      %v3815 = vmul.f32 %v384, %v3593
      %v3816 = vmul.f32 %v385, %v3597
      %v3817 = vmul.f32 %v386, %v3597
      %v3818 = vmul.f32 %v387, %v3601
      %v3819 = vmul.f32 %v388, %v3601
      %v3820 = vmul.f32 %v389, %v3605
      %v3821 = vmul.f32 %v390, %v3605
      %v3822 = vmul.f32 %v391, %v3609
      %v3823 = vmul.f32 %v392, %v3609
      %v3824 = vmul.f32 %v393, %v3613
      %v3825 = vmul.f32 %v394, %v3613
      %v3826 = vmul.f32 %v395, %v3617
      %v3827 = vmul.f32 %v396, %v3617
      %v3828 = vmul.f32 %v397, %v3621
      %v3829 = vmul.f32 %v398, %v3621
      %v3830 = vmul.f32 %v399, %v3625
      %v3831 = vmul.f32 %v400, %v3625
      %v3832 = vmul.f32 %v401, %v3629
      %v3833 = vmul.f32 %v402, %v3629
      %v3834 = vmul.f32 %v403, %v3633
      %v3835 = vmul.f32 %v404, %v3633
      %v3836 = vmul.f32 %v405, %v3637
      %v3837 = vmul.f32 %v406, %v3637
      %v3838 = vmul.f32 %v407, %v3641
      %v3839 = vmul.f32 %v408, %v3641
      %v3840 = vmul.f32 %v409, %v3645
      %v3841 = vmul.f32 %v410, %v3645
      %v3842 = vmul.f32 %v411, %v3649
      %v3843 = vmul.f32 %v412, %v3649
      %v3844 = vmul.f32 %v413, %v3653
      %v3845 = vmul.f32 %v414, %v3653
      %v3846 = vmul.f32 %v3718, %v2983
      %v3847 = vmul.f32 %v3719, %v2985
      %v3848 = vmul.f32 %v3720, %v2983
      %v3849 = vmul.f32 %v3721, %v2985
      %v3850 = vmul.f32 %v3722, %v2983
      %v3851 = vmul.f32 %v3723, %v2985
      %v3852 = vmul.f32 %v3724, %v2983
      %v3853 = vmul.f32 %v3725, %v2985
      %v3854 = vmul.f32 %v3726, %v2983
      %v3855 = vmul.f32 %v3727, %v2985
      %v3856 = vmul.f32 %v3728, %v2983
      %v3857 = vmul.f32 %v3729, %v2985
      %v3858 = vmul.f32 %v3730, %v2983
      %v3859 = vmul.f32 %v3731, %v2985
      %v3860 = vmul.f32 %v3732, %v2983
      %v3861 = vmul.f32 %v3733, %v2985
      %v3862 = vmul.f32 %v3734, %v2983
      %v3863 = vmul.f32 %v3735, %v2985
      %v3864 = vmul.f32 %v3736, %v2983
      %v3865 = vmul.f32 %v3737, %v2985
      %v3866 = vmul.f32 %v3738, %v2983
      %v3867 = vmul.f32 %v3739, %v2985
      %v3868 = vmul.f32 %v3740, %v2983
      %v3869 = vmul.f32 %v3741, %v2985
      %v3870 = vmul.f32 %v3742, %v2983
      %v3871 = vmul.f32 %v3743, %v2985
      %v3872 = vmul.f32 %v3744, %v2983
      %v3873 = vmul.f32 %v3745, %v2985
      %v3874 = vmul.f32 %v3746, %v2983
      %v3875 = vmul.f32 %v3747, %v2985
      %v3876 = vmul.f32 %v3748, %v2983
      %v3877 = vmul.f32 %v3749, %v2985
      %v3878 = vmul.f32 %v3750, %v2987
      %v3879 = vmul.f32 %v3751, %v2989
      %v3880 = vmul.f32 %v3752, %v2987
      %v3881 = vmul.f32 %v3753, %v2989
      %v3882 = vmul.f32 %v3754, %v2987
      %v3883 = vmul.f32 %v3755, %v2989
      %v3884 = vmul.f32 %v3756, %v2987
      %v3885 = vmul.f32 %v3757, %v2989
      %v3886 = vmul.f32 %v3758, %v2987
      %v3887 = vmul.f32 %v3759, %v2989
      %v3888 = vmul.f32 %v3760, %v2987
      %v3889 = vmul.f32 %v3761, %v2989
      %v3890 = vmul.f32 %v3762, %v2987
      %v3891 = vmul.f32 %v3763, %v2989
      %v3892 = vmul.f32 %v3764, %v2987
      %v3893 = vmul.f32 %v3765, %v2989
      %v3894 = vmul.f32 %v3766, %v2987
      %v3895 = vmul.f32 %v3767, %v2989
      %v3896 = vmul.f32 %v3768, %v2987
      %v3897 = vmul.f32 %v3769, %v2989
      %v3898 = vmul.f32 %v3770, %v2987
      %v3899 = vmul.f32 %v3771, %v2989
      %v3900 = vmul.f32 %v3772, %v2987
      %v3901 = vmul.f32 %v3773, %v2989
      %v3902 = vmul.f32 %v3774, %v2987
      %v3903 = vmul.f32 %v3775, %v2989
      %v3904 = vmul.f32 %v3776, %v2987
      %v3905 = vmul.f32 %v3777, %v2989
      %v3906 = vmul.f32 %v3778, %v2987
      %v3907 = vmul.f32 %v3779, %v2989
      %v3908 = vmul.f32 %v3780, %v2987
      %v3909 = vmul.f32 %v3781, %v2989
      %v3910 = vmul.f32 %v3782, %v2991
      %v3911 = vmul.f32 %v3783, %v2993
      %v3912 = vmul.f32 %v3784, %v2991
      %v3913 = vmul.f32 %v3785, %v2993
      %v3914 = vmul.f32 %v3786, %v2991
      %v3915 = vmul.f32 %v3787, %v2993
      %v3916 = vmul.f32 %v3788, %v2991
      %v3917 = vmul.f32 %v3789, %v2993
      %v3918 = vmul.f32 %v3790, %v2991
      %v3919 = vmul.f32 %v3791, %v2993
      %v3920 = vmul.f32 %v3792, %v2991
      %v3921 = vmul.f32 %v3793, %v2993
      %v3922 = vmul.f32 %v3794, %v2991
      %v3923 = vmul.f32 %v3795, %v2993
      %v3924 = vmul.f32 %v3796, %v2991
      %v3925 = vmul.f32 %v3797, %v2993
      %v3926 = vmul.f32 %v3798, %v2991
      %v3927 = vmul.f32 %v3799, %v2993
      %v3928 = vmul.f32 %v3800, %v2991
      %v3929 = vmul.f32 %v3801, %v2993
      %v3930 = vmul.f32 %v3802, %v2991
      %v3931 = vmul.f32 %v3803, %v2993
      %v3932 = vmul.f32 %v3804, %v2991
      %v3933 = vmul.f32 %v3805, %v2993
      %v3934 = vmul.f32 %v3806, %v2991
      %v3935 = vmul.f32 %v3807, %v2993
      %v3936 = vmul.f32 %v3808, %v2991
      %v3937 = vmul.f32 %v3809, %v2993
      %v3938 = vmul.f32 %v3810, %v2991
      %v3939 = vmul.f32 %v3811, %v2993
      %v3940 = vmul.f32 %v3812, %v2991
      %v3941 = vmul.f32 %v3813, %v2993
      %v3942 = vmul.f32 %v3814, %v2995
      %v3943 = vmul.f32 %v3815, %v2997
      %v3944 = vmul.f32 %v3816, %v2995
      %v3945 = vmul.f32 %v3817, %v2997
      %v3946 = vmul.f32 %v3818, %v2995
      %v3947 = vmul.f32 %v3819, %v2997
      %v3948 = vmul.f32 %v3820, %v2995
      %v3949 = vmul.f32 %v3821, %v2997
      %v3950 = vmul.f32 %v3822, %v2995
      %v3951 = vmul.f32 %v3823, %v2997
      %v3952 = vmul.f32 %v3824, %v2995
      %v3953 = vmul.f32 %v3825, %v2997
      %v3954 = vmul.f32 %v3826, %v2995
      %v3955 = vmul.f32 %v3827, %v2997
      %v3956 = vmul.f32 %v3828, %v2995
      %v3957 = vmul.f32 %v3829, %v2997
      %v3958 = vmul.f32 %v3830, %v2995
      %v3959 = vmul.f32 %v3831, %v2997
      %v3960 = vmul.f32 %v3832, %v2995
      %v3961 = vmul.f32 %v3833, %v2997
      %v3962 = vmul.f32 %v3834, %v2995
      %v3963 = vmul.f32 %v3835, %v2997
      %v3964 = vmul.f32 %v3836, %v2995
      %v3965 = vmul.f32 %v3837, %v2997
      %v3966 = vmul.f32 %v3838, %v2995
      %v3967 = vmul.f32 %v3839, %v2997
      %v3968 = vmul.f32 %v3840, %v2995
      %v3969 = vmul.f32 %v3841, %v2997
      %v3970 = vmul.f32 %v3842, %v2995
      %v3971 = vmul.f32 %v3843, %v2997
      %v3972 = vmul.f32 %v3844, %v2995
      %v3973 = vmul.f32 %v3845, %v2997
      %3974 = vst.msk [vmem:[%s285] sm:$0xff] %vm415, %v3846
      %3975 = vst.msk [vmem:[%s285 + $0x8] sm:$0xff] %vm415, %v3847
      %3976 = vst.msk [vmem:[%s285 + $0x10] sm:$0xff] %vm415, %v3848
      %3977 = vst.msk [vmem:[%s285 + $0x18] sm:$0xff] %vm415, %v3849
      %3978 = vst.msk [vmem:[%s285 + $0x20] sm:$0xff] %vm415, %v3850
      %3979 = vst.msk [vmem:[%s285 + $0x28] sm:$0xff] %vm415, %v3851
      %3980 = vst.msk [vmem:[%s285 + $0x30] sm:$0xff] %vm415, %v3852
      %3981 = vst.msk [vmem:[%s285 + $0x38] sm:$0xff] %vm415, %v3853
      %3982 = vst.msk [vmem:[%s285 + $0x40] sm:$0xff] %vm415, %v3854
      %3983 = vst.msk [vmem:[%s285 + $0x48] sm:$0xff] %vm415, %v3855
      %3984 = vst.msk [vmem:[%s285 + $0x50] sm:$0xff] %vm415, %v3856
      %3985 = vst.msk [vmem:[%s285 + $0x58] sm:$0xff] %vm415, %v3857
      %3986 = vst.msk [vmem:[%s285 + $0x60] sm:$0xff] %vm415, %v3858
      %3987 = vst.msk [vmem:[%s285 + $0x68] sm:$0xff] %vm415, %v3859
      %3988 = vst.msk [vmem:[%s285 + $0x70] sm:$0xff] %vm415, %v3860
      %3989 = vst.msk [vmem:[%s285 + $0x78] sm:$0xff] %vm415, %v3861
      %3990 = vst.msk [vmem:[%s285 + $0x80] sm:$0xff] %vm415, %v3862
      %3991 = vst.msk [vmem:[%s285 + $0x88] sm:$0xff] %vm415, %v3863
      %3992 = vst.msk [vmem:[%s285 + $0x90] sm:$0xff] %vm415, %v3864
      %3993 = vst.msk [vmem:[%s285 + $0x98] sm:$0xff] %vm415, %v3865
      %3994 = vst.msk [vmem:[%s285 + $0xa0] sm:$0xff] %vm415, %v3866
      %3995 = vst.msk [vmem:[%s285 + $0xa8] sm:$0xff] %vm415, %v3867
      %3996 = vst.msk [vmem:[%s285 + $0xb0] sm:$0xff] %vm415, %v3868
      %3997 = vst.msk [vmem:[%s285 + $0xb8] sm:$0xff] %vm415, %v3869
      %3998 = vst.msk [vmem:[%s285 + $0xc0] sm:$0xff] %vm415, %v3870
      %3999 = vst.msk [vmem:[%s285 + $0xc8] sm:$0xff] %vm415, %v3871
      %4000 = vst.msk [vmem:[%s285 + $0xd0] sm:$0xff] %vm415, %v3872
      %4001 = vst.msk [vmem:[%s285 + $0xd8] sm:$0xff] %vm415, %v3873
      %4002 = vst.msk [vmem:[%s285 + $0xe0] sm:$0xff] %vm415, %v3874
      %4003 = vst.msk [vmem:[%s285 + $0xe8] sm:$0xff] %vm415, %v3875
      %4004 = vst.msk [vmem:[%s285 + $0xf0] sm:$0xff] %vm415, %v3876
      %4005 = vst.msk [vmem:[%s285 + $0xf8] sm:$0xff] %vm415, %v3877
      %4006 = vst.msk [vmem:[%s285 + $0x100] sm:$0xff] %vm415, %v3878
      %4007 = vst.msk [vmem:[%s285 + $0x108] sm:$0xff] %vm415, %v3879
      %4008 = vst.msk [vmem:[%s285 + $0x110] sm:$0xff] %vm415, %v3880
      %4009 = vst.msk [vmem:[%s285 + $0x118] sm:$0xff] %vm415, %v3881
      %4010 = vst.msk [vmem:[%s285 + $0x120] sm:$0xff] %vm415, %v3882
      %4011 = vst.msk [vmem:[%s285 + $0x128] sm:$0xff] %vm415, %v3883
      %4012 = vst.msk [vmem:[%s285 + $0x130] sm:$0xff] %vm415, %v3884
      %4013 = vst.msk [vmem:[%s285 + $0x138] sm:$0xff] %vm415, %v3885
      %4014 = vst.msk [vmem:[%s285 + $0x140] sm:$0xff] %vm415, %v3886
      %4015 = vst.msk [vmem:[%s285 + $0x148] sm:$0xff] %vm415, %v3887
      %4016 = vst.msk [vmem:[%s285 + $0x150] sm:$0xff] %vm415, %v3888
      %4017 = vst.msk [vmem:[%s285 + $0x158] sm:$0xff] %vm415, %v3889
      %4018 = vst.msk [vmem:[%s285 + $0x160] sm:$0xff] %vm415, %v3890
      %4019 = vst.msk [vmem:[%s285 + $0x168] sm:$0xff] %vm415, %v3891
      %4020 = vst.msk [vmem:[%s285 + $0x170] sm:$0xff] %vm415, %v3892
      %4021 = vst.msk [vmem:[%s285 + $0x178] sm:$0xff] %vm415, %v3893
      %4022 = vst.msk [vmem:[%s285 + $0x180] sm:$0xff] %vm415, %v3894
      %4023 = vst.msk [vmem:[%s285 + $0x188] sm:$0xff] %vm415, %v3895
      %4024 = vst.msk [vmem:[%s285 + $0x190] sm:$0xff] %vm415, %v3896
      %4025 = vst.msk [vmem:[%s285 + $0x198] sm:$0xff] %vm415, %v3897
      %4026 = vst.msk [vmem:[%s285 + $0x1a0] sm:$0xff] %vm415, %v3898
      %4027 = vst.msk [vmem:[%s285 + $0x1a8] sm:$0xff] %vm415, %v3899
      %4028 = vst.msk [vmem:[%s285 + $0x1b0] sm:$0xff] %vm415, %v3900
      %4029 = vst.msk [vmem:[%s285 + $0x1b8] sm:$0xff] %vm415, %v3901
      %4030 = vst.msk [vmem:[%s285 + $0x1c0] sm:$0xff] %vm415, %v3902
      %4031 = vst.msk [vmem:[%s285 + $0x1c8] sm:$0xff] %vm415, %v3903
      %4032 = vst.msk [vmem:[%s285 + $0x1d0] sm:$0xff] %vm415, %v3904
      %4033 = vst.msk [vmem:[%s285 + $0x1d8] sm:$0xff] %vm415, %v3905
      %4034 = vst.msk [vmem:[%s285 + $0x1e0] sm:$0xff] %vm415, %v3906
      %4035 = vst.msk [vmem:[%s285 + $0x1e8] sm:$0xff] %vm415, %v3907
      %4036 = vst.msk [vmem:[%s285 + $0x1f0] sm:$0xff] %vm415, %v3908
      %4037 = vst.msk [vmem:[%s285 + $0x1f8] sm:$0xff] %vm415, %v3909
      %4038 = vst.msk [vmem:[%s285 + $0x200] sm:$0xff] %vm415, %v3910
      %4039 = vst.msk [vmem:[%s285 + $0x208] sm:$0xff] %vm415, %v3911
      %4040 = vst.msk [vmem:[%s285 + $0x210] sm:$0xff] %vm415, %v3912
      %4041 = vst.msk [vmem:[%s285 + $0x218] sm:$0xff] %vm415, %v3913
      %4042 = vst.msk [vmem:[%s285 + $0x220] sm:$0xff] %vm415, %v3914
      %4043 = vst.msk [vmem:[%s285 + $0x228] sm:$0xff] %vm415, %v3915
      %4044 = vst.msk [vmem:[%s285 + $0x230] sm:$0xff] %vm415, %v3916
      %4045 = vst.msk [vmem:[%s285 + $0x238] sm:$0xff] %vm415, %v3917
      %4046 = vst.msk [vmem:[%s285 + $0x240] sm:$0xff] %vm415, %v3918
      %4047 = vst.msk [vmem:[%s285 + $0x248] sm:$0xff] %vm415, %v3919
      %4048 = vst.msk [vmem:[%s285 + $0x250] sm:$0xff] %vm415, %v3920
      %4049 = vst.msk [vmem:[%s285 + $0x258] sm:$0xff] %vm415, %v3921
      %4050 = vst.msk [vmem:[%s285 + $0x260] sm:$0xff] %vm415, %v3922
      %4051 = vst.msk [vmem:[%s285 + $0x268] sm:$0xff] %vm415, %v3923
      %4052 = vst.msk [vmem:[%s285 + $0x270] sm:$0xff] %vm415, %v3924
      %4053 = vst.msk [vmem:[%s285 + $0x278] sm:$0xff] %vm415, %v3925
      %4054 = vst.msk [vmem:[%s285 + $0x280] sm:$0xff] %vm415, %v3926
      %4055 = vst.msk [vmem:[%s285 + $0x288] sm:$0xff] %vm415, %v3927
      %4056 = vst.msk [vmem:[%s285 + $0x290] sm:$0xff] %vm415, %v3928
      %4057 = vst.msk [vmem:[%s285 + $0x298] sm:$0xff] %vm415, %v3929
      %4058 = vst.msk [vmem:[%s285 + $0x2a0] sm:$0xff] %vm415, %v3930
      %4059 = vst.msk [vmem:[%s285 + $0x2a8] sm:$0xff] %vm415, %v3931
      %4060 = vst.msk [vmem:[%s285 + $0x2b0] sm:$0xff] %vm415, %v3932
      %4061 = vst.msk [vmem:[%s285 + $0x2b8] sm:$0xff] %vm415, %v3933
      %4062 = vst.msk [vmem:[%s285 + $0x2c0] sm:$0xff] %vm415, %v3934
      %4063 = vst.msk [vmem:[%s285 + $0x2c8] sm:$0xff] %vm415, %v3935
      %4064 = vst.msk [vmem:[%s285 + $0x2d0] sm:$0xff] %vm415, %v3936
      %4065 = vst.msk [vmem:[%s285 + $0x2d8] sm:$0xff] %vm415, %v3937
      %4066 = vst.msk [vmem:[%s285 + $0x2e0] sm:$0xff] %vm415, %v3938
      %4067 = vst.msk [vmem:[%s285 + $0x2e8] sm:$0xff] %vm415, %v3939
      %4068 = vst.msk [vmem:[%s285 + $0x2f0] sm:$0xff] %vm415, %v3940
      %4069 = vst.msk [vmem:[%s285 + $0x2f8] sm:$0xff] %vm415, %v3941
      %4070 = vst.msk [vmem:[%s285 + $0x300] sm:$0xff] %vm415, %v3942
      %4071 = vst.msk [vmem:[%s285 + $0x308] sm:$0xff] %vm415, %v3943
      %4072 = vst.msk [vmem:[%s285 + $0x310] sm:$0xff] %vm415, %v3944
      %4073 = vst.msk [vmem:[%s285 + $0x318] sm:$0xff] %vm415, %v3945
      %4074 = vst.msk [vmem:[%s285 + $0x320] sm:$0xff] %vm415, %v3946
      %4075 = vst.msk [vmem:[%s285 + $0x328] sm:$0xff] %vm415, %v3947
      %4076 = vst.msk [vmem:[%s285 + $0x330] sm:$0xff] %vm415, %v3948
      %4077 = vst.msk [vmem:[%s285 + $0x338] sm:$0xff] %vm415, %v3949
      %4078 = vst.msk [vmem:[%s285 + $0x340] sm:$0xff] %vm415, %v3950
      %4079 = vst.msk [vmem:[%s285 + $0x348] sm:$0xff] %vm415, %v3951
      %4080 = vst.msk [vmem:[%s285 + $0x350] sm:$0xff] %vm415, %v3952
      %4081 = vst.msk [vmem:[%s285 + $0x358] sm:$0xff] %vm415, %v3953
      %4082 = vst.msk [vmem:[%s285 + $0x360] sm:$0xff] %vm415, %v3954
      %4083 = vst.msk [vmem:[%s285 + $0x368] sm:$0xff] %vm415, %v3955
      %4084 = vst.msk [vmem:[%s285 + $0x370] sm:$0xff] %vm415, %v3956
      %4085 = vst.msk [vmem:[%s285 + $0x378] sm:$0xff] %vm415, %v3957
      %4086 = vst.msk [vmem:[%s285 + $0x380] sm:$0xff] %vm415, %v3958
      %4087 = vst.msk [vmem:[%s285 + $0x388] sm:$0xff] %vm415, %v3959
      %4088 = vst.msk [vmem:[%s285 + $0x390] sm:$0xff] %vm415, %v3960
      %4089 = vst.msk [vmem:[%s285 + $0x398] sm:$0xff] %vm415, %v3961
      %4090 = vst.msk [vmem:[%s285 + $0x3a0] sm:$0xff] %vm415, %v3962
      %4091 = vst.msk [vmem:[%s285 + $0x3a8] sm:$0xff] %vm415, %v3963
      %4092 = vst.msk [vmem:[%s285 + $0x3b0] sm:$0xff] %vm415, %v3964
      %4093 = vst.msk [vmem:[%s285 + $0x3b8] sm:$0xff] %vm415, %v3965
      %4094 = vst.msk [vmem:[%s285 + $0x3c0] sm:$0xff] %vm415, %v3966
      %4095 = vst.msk [vmem:[%s285 + $0x3c8] sm:$0xff] %vm415, %v3967
      %4096 = vst.msk [vmem:[%s285 + $0x3d0] sm:$0xff] %vm415, %v3968
      %4097 = vst.msk [vmem:[%s285 + $0x3d8] sm:$0xff] %vm415, %v3969
      %4098 = vst.msk [vmem:[%s285 + $0x3e0] sm:$0xff] %vm415, %v3970
      %4099 = vst.msk [vmem:[%s285 + $0x3e8] sm:$0xff] %vm415, %v3971
      %4100 = vst.msk [vmem:[%s285 + $0x3f0] sm:$0xff] %vm415, %v3972
      %4101 = vst.msk [vmem:[%s285 + $0x3f8] sm:$0xff] %vm415, %v3973
      %s4102 = smul.u32 4, %s18
      %p4103 = scmp.lt.s32.totalorder %s4102, 7
      %s4104 = scalar_select %p4103, %s4102, 7
      %s4105 = smul.addr %s4104, 32
      %s4106 = smul.addr %s4105, 8
      %s4107 = scalar_lea.vmem %s7, %s4106
      // Predicated region
      $region49: #{ggca_forward.1} parent=47 // pred_check
        %p4108 = pneg %p188
      $region50: #{ggca_forward.1} parent=47 // pred_check_branch
        %4110 = sbr.rel (%p4108) target = $region52
      $region51: #{ggca_forward.1} parent=47 // pred_region
        %s4111 = smul.u32 4, %s18
      $region52: #{ggca_forward.1} parent=47 // pred_fallthru
        _
    $region48: #{ggca_forward.1} parent=5 // pred_fallthru
      _
    %p4112 = scmp.le.s32.totalorder 2, %s13
    // Predicated region
    $region53: #{ggca_forward.1} parent=5 // pred_check
      %p4113 = pneg %p4112
    $region54: #{ggca_forward.1} parent=5 // pred_check_branch
      %4115 = sbr.rel (%p4113) target = $region56
    $region55: #{ggca_forward.1} parent=5 // pred_region
      %s4116 = ssub.s32 %s13, 2
      // Predicated region
      $region57: #{ggca_forward.1} parent=55 // pred_check
        %p4117 = pneg %p194
      $region58: #{ggca_forward.1} parent=55 // pred_check_branch
        %4119 = sbr.rel (%p4117) target = $region60
      $region59: #{ggca_forward.1} parent=55 // pred_region
        %s4120 = smul.u32 4, %s19
        %p4121 = scmp.lt.s32.totalorder %s4120, 7
        %s4122 = scalar_select %p4121, %s4120, 7
        %s4123 = smul.addr %s4122, 32
        %s4124 = smul.addr %s4123, 8
        %s4125 = scalar_lea.vmem %s7, %s4124
      $region60: #{ggca_forward.1} parent=55 // pred_fallthru
        _
    $region56: #{ggca_forward.1} parent=5 // pred_fallthru
      _
  $region6: #{ggca_forward.1} parent=0 // loop_footer
    %s17 = sadd.s32 1, %s13
  $region7: #{ggca_forward.1} parent=0 // loop_footer_branch
    %12 = sbr.rel target = $region3
  $region8: #{ggca_forward.1} parent=0 // loop_exit
    _

</llo_original>
